<compile_context>
chip_gen: v6e
topology: v6e:2x2x1
jax: 0.10.0
libtpu: 0.0.40
codegen_flags: <defaults>
</compile_context>

<pallas_src>
import math
import jax
import jax.numpy as jnp
from jax import lax
from jax.experimental import pallas as pl
from jax.experimental.pallas import tpu as pltpu

# Finite "minus infinity" for the running max (never let -inf reach the bf16 FC head).
_NEG_SENTINEL = -1e30


def _make_kernel(k, tb, tn, pc, n_actual, ragged_points):
    kk = k * k
    num_chunks = tn // pc

    def stnkd_kernel(x_ref,
                     w1_ref, s1_ref, t1_ref,
                     w2_ref, s2_ref, t2_ref,
                     w3_ref, s3_ref, t3_ref,
                     wf1_ref, s4_ref, t4_ref,
                     wf2_ref, s5_ref, t5_ref,
                     wf3_ref, bf3_ref,
                     o_ref, gmax_ref):
        n = pl.program_id(1)
        n_steps = pl.num_programs(1)

        @pl.when(n == 0)
        def _init():
            gmax_ref[...] = jnp.full(gmax_ref.shape, _NEG_SENTINEL, gmax_ref.dtype)

        # ---- relayout once in VMEM: NCW tile (TB, k, TN) -> channels-last rows ----
        if tb == 1:
            x = x_ref[0].T                                                   # (TN, k)
        else:
            x = jnp.concatenate([x_ref[b].T for b in range(tb)], axis=0)     # (TB*TN, k)
        x = x.astype(jnp.bfloat16)

        # ---- conv1 / conv2 on all merged rows (bf16 MXU operands, f32 accumulate) ----
        h = jnp.dot(x, w1_ref[...], preferred_element_type=jnp.float32)      # (M, 64)
        h = jnp.maximum(h * s1_ref[...] + t1_ref[...], 0.0)
        h = jnp.dot(h.astype(jnp.bfloat16), w2_ref[...],
                    preferred_element_type=jnp.float32)                      # (M, 128)
        h = jnp.maximum(h * s2_ref[...] + t2_ref[...], 0.0)
        h2 = h.astype(jnp.bfloat16)                                          # (M, 128)
        h2_3d = h2.reshape(tb, tn, 128) if num_chunks > 1 else None

        # ---- conv3 + scale/shift/ReLU + global max-pool, chunked over row blocks
        #      so the live (rows, 1024) f32 buffer stays capped (~TB*PC rows) ----
        def _pool_update(h3_btc):  # (tb, pc, 1024) f32
            gmax_ref[...] = jnp.maximum(gmax_ref[...], jnp.max(h3_btc, axis=1))

        for c in range(num_chunks):
            if num_chunks == 1:
                h2c = h2
            else:
                h2c = h2_3d[:, c * pc:(c + 1) * pc, :].reshape(tb * pc, 128)
            h3 = jnp.dot(h2c, w3_ref[...], preferred_element_type=jnp.float32)
            h3 = jnp.maximum(h3 * s3_ref[...] + t3_ref[...], 0.0)            # (tb*pc, 1024)
            h3 = h3.reshape(tb, pc, 1024)

            if ragged_points:
                # Only the final point tile can contain padded points: mask only there.
                @pl.when(n < n_steps - 1)
                def _u(h3=h3):
                    _pool_update(h3)

                @pl.when(n == n_steps - 1)
                def _u_masked(h3=h3, c=c):
                    pt = (n * tn + c * pc
                          + lax.broadcasted_iota(jnp.int32, (tb, pc, 1), 1))
                    _pool_update(jnp.where(pt < n_actual, h3, _NEG_SENTINEL))
            else:
                _pool_update(h3)

        # ---- FC head (M = TB rows) only on the final point tile ----
        # TODO(synk): for large B, hoist the head out to a single M=B pass for better
        # MXU fill; in-kernel is fine at the small batch sizes shipped here.
        @pl.when(n == n_steps - 1)
        def _head():
            g = gmax_ref[...].astype(jnp.bfloat16)                           # (TB, 1024)
            f = jnp.dot(g, wf1_ref[...], preferred_element_type=jnp.float32)
            f = jnp.maximum(f * s4_ref[...] + t4_ref[...], 0.0)
            f = jnp.dot(f.astype(jnp.bfloat16), wf2_ref[...],
                        preferred_element_type=jnp.float32)
            f = jnp.maximum(f * s5_ref[...] + t5_ref[...], 0.0)
            # flattened identity matrix is pre-folded into bf3 in the wrapper
            out = jnp.dot(f.astype(jnp.bfloat16), wf3_ref[...],
                          preferred_element_type=jnp.float32) + bf3_ref[...]
            o_ref[...] = out.reshape(tb, 1, kk)

    return stnkd_kernel


def _vmem_capacity_bytes():
    """Physical VMEM of the attached TPU; conservative (v7x-class) default if unknown."""
    try:
        info = pltpu.get_tpu_info()
        cap = getattr(info, "vmem_capacity_bytes", None)
        if cap:
            return int(cap)
    except Exception:
        pass
    return 64 << 20


def _choose_tiling(B, N):
    """Generation-aware tile sizes: (TB, TN, PC, vmem_limit_bytes)."""
    vmem_cap = _vmem_capacity_bytes()
    if vmem_cap >= (100 << 20):          # v5e / v6e: 128 MiB physical VMEM
        max_rows = 8192
        vmem_limit = min(100 << 20, vmem_cap * 7 // 8)
    else:                                # v7x-class: 64 MiB physical VMEM
        max_rows = 4096
        vmem_limit = min(56 << 20, vmem_cap * 7 // 8)

    # TB: keep >= 2 batch tiles whenever B >= 2 so the 'parallel' batch axis can
    # shard across both TensorCores on megacore parts.
    TB = 1 if B <= 2 else max(1, min(B // 2, 8))

    # TN: full point dim if it fits the row budget, else a multiple of 128.
    tn_cap = max(128, (max_rows // TB) // 128 * 128)
    TN = N if N <= tn_cap else tn_cap

    # PC: points per conv3/pool sub-block (caps the live 1024-wide f32 buffer).
    ROW_CHUNK = 512
    PC = TN
    while TB * PC > ROW_CHUNK and PC % 2 == 0:
        PC //= 2
    return TB, TN, PC, int(vmem_limit)


def stnkd_forward(x_bcn, params, *, k):
    """x_bcn: (B, k, N) float32 — torch Conv1d (NCW) layout. Returns (B, k, k)."""
    B, C, N = x_bcn.shape
    assert C == k
    (w1, s1, t1, w2, s2, t2, w3, s3, t3,
     wf1, s4, t4, wf2, s5, t5, wf3, bf3) = params
    kk = k * k

    # Fold the flattened identity matrix into the fc3 bias (no iota/select in kernel).
    bf3_eff = bf3 + jnp.eye(k, dtype=jnp.float32).reshape(1, kk)

    # bf16 matmul operands; BN scale/shift stay f32.
    w1b, w2b, w3b = (a.astype(jnp.bfloat16) for a in (w1, w2, w3))
    wf1b, wf2b, wf3b = (a.astype(jnp.bfloat16) for a in (wf1, wf2, wf3))

    TB, TN, PC, vmem_limit = _choose_tiling(B, N)
    ragged_points = (N % TN) != 0
    grid = (pl.cdiv(B, TB), pl.cdiv(N, TN))

    kernel = _make_kernel(k, TB, TN, PC, N, ragged_points)

    def _const_spec(shape):
        nd = len(shape)
        return pl.BlockSpec(shape, lambda b, n, _nd=nd: (0,) * _nd)

    out = pl.pallas_call(
        kernel,
        out_shape=jax.ShapeDtypeStruct((B, 1, kk), jnp.float32),
        grid_spec=pltpu.PrefetchScalarGridSpec(
            num_scalar_prefetch=0,
            grid=grid,
            in_specs=[
                # x stays in its original NCW layout/dtype: no wrapper-side
                # transpose/pad/astype pass over HBM.
                pl.BlockSpec((TB, k, TN), lambda b, n: (b, 0, n)),
                _const_spec(w1b.shape), _const_spec(s1.shape), _const_spec(t1.shape),
                _const_spec(w2b.shape), _const_spec(s2.shape), _const_spec(t2.shape),
                _const_spec(w3b.shape), _const_spec(s3.shape), _const_spec(t3.shape),
                _const_spec(wf1b.shape), _const_spec(s4.shape), _const_spec(t4.shape),
                _const_spec(wf2b.shape), _const_spec(s5.shape), _const_spec(t5.shape),
                _const_spec(wf3b.shape), _const_spec(bf3_eff.shape),
            ],
            out_specs=pl.BlockSpec((TB, 1, kk), lambda b, n: (b, 0, 0)),
            scratch_shapes=[pltpu.VMEM((TB, 1024), jnp.float32)],   # running max over points
        ),
        compiler_params=pltpu.CompilerParams(
            dimension_semantics=("parallel", "arbitrary"),
            vmem_limit_bytes=vmem_limit,
        ),
    )(x_bcn, w1b, s1, t1, w2b, s2, t2, w3b, s3, t3,
      wf1b, s4, t4, wf2b, s5, t5, wf3b, bf3_eff)

    return out.reshape(B, k, k)


def make_params(key, k):
    """Deterministic synthetic parameters. Conv/FC weights stored as (in, out);
    BatchNorm (eval mode) folded with the preceding layer's bias into
    per-channel scale s and shift t:  y = (x @ W) * s + t."""
    eps = 1e-5
    dims = [(k, 64), (64, 128), (128, 1024),      # conv1..3 (1x1)
            (1024, 512), (512, 256)]              # fc1, fc2
    keys = jax.random.split(key, 32)
    ki = iter(keys)

    def layer(cin, cout):
        w = jax.random.normal(next(ki), (cin, cout), jnp.float32) * (1.0 / math.sqrt(cin))
        b = jax.random.normal(next(ki), (cout,), jnp.float32) * 0.02
        gamma = 1.0 + 0.1 * jax.random.normal(next(ki), (cout,), jnp.float32)
        beta = 0.05 * jax.random.normal(next(ki), (cout,), jnp.float32)
        run_mean = 0.1 * jax.random.normal(next(ki), (cout,), jnp.float32)
        run_var = jnp.abs(1.0 + 0.1 * jax.random.normal(next(ki), (cout,), jnp.float32))
        s = gamma / jnp.sqrt(run_var + eps)
        t = (b - run_mean) * s + beta
        return w, s.reshape(1, cout), t.reshape(1, cout)

    params = []
    for cin, cout in dims:
        params.extend(layer(cin, cout))

    # fc3: plain linear (no BN)
    wf3 = jax.random.normal(next(ki), (256, k * k), jnp.float32) * (1.0 / math.sqrt(256))
    bf3 = (0.02 * jax.random.normal(next(ki), (k * k,), jnp.float32)).reshape(1, k * k)
    params.extend([wf3, bf3])
    return tuple(params)


def reference_forward(x_bcn, params, *, k):
    """Pure-JAX reference with the same numerics as the kernel
    (bf16 matmul operands, f32 accumulation and elementwise math)."""
    (w1, s1, t1, w2, s2, t2, w3, s3, t3,
     wf1, s4, t4, wf2, s5, t5, wf3, bf3) = params

    def mm(a, w):
        return jnp.dot(a.astype(jnp.bfloat16), w.astype(jnp.bfloat16),
                       preferred_element_type=jnp.float32)

    B, C, N = x_bcn.shape
    x = jnp.transpose(x_bcn, (0, 2, 1)).reshape(B * N, k)   # (B*N, k)
    h = jnp.maximum(mm(x, w1) * s1 + t1, 0.0)
    h = jnp.maximum(mm(h, w2) * s2 + t2, 0.0)
    h = jnp.maximum(mm(h, w3) * s3 + t3, 0.0)
    g = jnp.max(h.reshape(B, N, 1024), axis=1)               # (B, 1024)
    f = jnp.maximum(mm(g, wf1) * s4 + t4, 0.0)
    f = jnp.maximum(mm(f, wf2) * s5 + t5, 0.0)
    out = mm(f, wf3) + bf3
    out = out + jnp.eye(k, dtype=jnp.float32).reshape(1, k * k)
    return out.reshape(B, k, k)


if __name__ == "__main__":
    k = 16          # STNkd(k=16)
    B, N = 2, 32    # small batch, 32 points

    key = jax.random.PRNGKey(0)
    kx, kp = jax.random.split(key)
    x = jax.random.normal(kx, (B, k, N), jnp.float32)   # torch Conv1d layout (B, C=k, N)
    params = make_params(kp, k)

    y = stnkd_forward(x, params, k=k)
    y = jax.block_until_ready(y)

    y_ref = reference_forward(x, params, k=k)
    assert y.shape == (B, k, k)
    assert jnp.allclose(y, y_ref, atol=1e-2, rtol=1e-2), "mismatch vs reference"

    print("KERNEL_OK")
</pallas_src>

<mosaic_0001>
module attributes {stable_mosaic.version = 11 : i64} {
  func.func @stnkd_kernel(%arg0: i32, %arg1: i32, %arg2: memref<1x16x32xf32, #tpu.memory_space<vmem>>, %arg3: memref<16x64xbf16, #tpu.memory_space<vmem>>, %arg4: memref<1x64xf32, #tpu.memory_space<vmem>>, %arg5: memref<1x64xf32, #tpu.memory_space<vmem>>, %arg6: memref<64x128xbf16, #tpu.memory_space<vmem>>, %arg7: memref<1x128xf32, #tpu.memory_space<vmem>>, %arg8: memref<1x128xf32, #tpu.memory_space<vmem>>, %arg9: memref<128x1024xbf16, #tpu.memory_space<vmem>>, %arg10: memref<1x1024xf32, #tpu.memory_space<vmem>>, %arg11: memref<1x1024xf32, #tpu.memory_space<vmem>>, %arg12: memref<1024x512xbf16, #tpu.memory_space<vmem>>, %arg13: memref<1x512xf32, #tpu.memory_space<vmem>>, %arg14: memref<1x512xf32, #tpu.memory_space<vmem>>, %arg15: memref<512x256xbf16, #tpu.memory_space<vmem>>, %arg16: memref<1x256xf32, #tpu.memory_space<vmem>>, %arg17: memref<1x256xf32, #tpu.memory_space<vmem>>, %arg18: memref<256x256xbf16, #tpu.memory_space<vmem>>, %arg19: memref<1x256xf32, #tpu.memory_space<vmem>>, %arg20: memref<1x1x256xf32, #tpu.memory_space<vmem>>, %arg21: memref<1x1024xf32, #tpu.memory_space<vmem>>) attributes {dimension_semantics = [#tpu.dimension_semantics<parallel>, #tpu.dimension_semantics<arbitrary>], iteration_bounds = array<i64: 2, 1>, scalar_prefetch = 0 : i64, scratch_operands = 1 : i64, tpu.core_type = #tpu.core_type<tc>, window_params = [{transform_indices = @transform_0, window_bounds = array<i64: 1, 16, 32>}, {pipeline_mode = #tpu.pipeline_mode<synchronous>, transform_indices = @transform_1, window_bounds = array<i64: 16, 64>}, {pipeline_mode = #tpu.pipeline_mode<synchronous>, transform_indices = @transform_2, window_bounds = array<i64: 1, 64>}, {pipeline_mode = #tpu.pipeline_mode<synchronous>, transform_indices = @transform_3, window_bounds = array<i64: 1, 64>}, {pipeline_mode = #tpu.pipeline_mode<synchronous>, transform_indices = @transform_4, window_bounds = array<i64: 64, 128>}, {pipeline_mode = #tpu.pipeline_mode<synchronous>, transform_indices = @transform_5, window_bounds = array<i64: 1, 128>}, {pipeline_mode = #tpu.pipeline_mode<synchronous>, transform_indices = @transform_6, window_bounds = array<i64: 1, 128>}, {pipeline_mode = #tpu.pipeline_mode<synchronous>, transform_indices = @transform_7, window_bounds = array<i64: 128, 1024>}, {pipeline_mode = #tpu.pipeline_mode<synchronous>, transform_indices = @transform_8, window_bounds = array<i64: 1, 1024>}, {pipeline_mode = #tpu.pipeline_mode<synchronous>, transform_indices = @transform_9, window_bounds = array<i64: 1, 1024>}, {pipeline_mode = #tpu.pipeline_mode<synchronous>, transform_indices = @transform_10, window_bounds = array<i64: 1024, 512>}, {pipeline_mode = #tpu.pipeline_mode<synchronous>, transform_indices = @transform_11, window_bounds = array<i64: 1, 512>}, {pipeline_mode = #tpu.pipeline_mode<synchronous>, transform_indices = @transform_12, window_bounds = array<i64: 1, 512>}, {pipeline_mode = #tpu.pipeline_mode<synchronous>, transform_indices = @transform_13, window_bounds = array<i64: 512, 256>}, {pipeline_mode = #tpu.pipeline_mode<synchronous>, transform_indices = @transform_14, window_bounds = array<i64: 1, 256>}, {pipeline_mode = #tpu.pipeline_mode<synchronous>, transform_indices = @transform_15, window_bounds = array<i64: 1, 256>}, {pipeline_mode = #tpu.pipeline_mode<synchronous>, transform_indices = @transform_16, window_bounds = array<i64: 256, 256>}, {pipeline_mode = #tpu.pipeline_mode<synchronous>, transform_indices = @transform_17, window_bounds = array<i64: 1, 256>}, {transform_indices = @transform_18, window_bounds = array<i64: 1, 1, 256>}]} {
    %c0_i32 = arith.constant 0 : i32
    %0 = arith.cmpi eq, %arg1, %c0_i32 : i32
    %1 = arith.extui %0 : i1 to i32
    %c0_i32_0 = arith.constant 0 : i32
    %2 = arith.cmpi ne, %1, %c0_i32_0 : i32
    scf.if %2 {
      %cst_33 = arith.constant -1.000000e+30 : f32
      %47 = vector.broadcast %cst_33 : f32 to vector<1x1024xf32>
      %c0_34 = arith.constant 0 : index
      %c0_35 = arith.constant 0 : index
      %48 = vector.load %arg21[%c0_34, %c0_35] : memref<1x1024xf32, #tpu.memory_space<vmem>>, vector<1x1024xf32>
      tpu.vector_store %arg21[%c0_34, %c0_35], %47 {strides = array<i32>} : memref<1x1024xf32, #tpu.memory_space<vmem>>, vector<1x1024xf32>,
    } else {
    }
    %c0 = arith.constant 0 : index
    %c0_1 = arith.constant 0 : index
    %c0_2 = arith.constant 0 : index
    %3 = vector.load %arg2[%c0, %c0_1, %c0_2] : memref<1x16x32xf32, #tpu.memory_space<vmem>>, vector<1x16x32xf32>
    %4 = vector.shape_cast %3 : vector<1x16x32xf32> to vector<16x32xf32>
    %5 = tpu.transpose %4, [1, 0] : vector<16x32xf32> -> vector<32x16xf32>
    %6 = arith.truncf %5 : vector<32x16xf32> to vector<32x16xbf16>
    %c0_3 = arith.constant 0 : index
    %c0_4 = arith.constant 0 : index
    %7 = vector.load %arg3[%c0_3, %c0_4] : memref<16x64xbf16, #tpu.memory_space<vmem>>, vector<16x64xbf16>
    %cst = arith.constant dense<0.000000e+00> : vector<32x64xf32>
    %8 = tpu.matmul %6, %7, %cst {dimension_numbers = #tpu.dot_dimension_numbers<[1], [0], [0], [1], [0, 0, 1, 1], [], []>} : vector<32x16xbf16>, vector<16x64xbf16>, vector<32x64xf32> -> vector<32x64xf32>
    %c0_5 = arith.constant 0 : index
    %c0_6 = arith.constant 0 : index
    %9 = vector.load %arg4[%c0_5, %c0_6] : memref<1x64xf32, #tpu.memory_space<vmem>>, vector<1x64xf32>
    %10 = vector.broadcast %9 : vector<1x64xf32> to vector<32x64xf32>
    %11 = arith.mulf %8, %10 : vector<32x64xf32>
    %c0_7 = arith.constant 0 : index
    %c0_8 = arith.constant 0 : index
    %12 = vector.load %arg5[%c0_7, %c0_8] : memref<1x64xf32, #tpu.memory_space<vmem>>, vector<1x64xf32>
    %13 = vector.broadcast %12 : vector<1x64xf32> to vector<32x64xf32>
    %14 = arith.addf %11, %13 : vector<32x64xf32>
    %cst_9 = arith.constant 0.000000e+00 : f32
    %15 = vector.broadcast %cst_9 : f32 to vector<32x64xf32>
    %16 = arith.maximumf %14, %15 : vector<32x64xf32>
    %17 = arith.truncf %16 : vector<32x64xf32> to vector<32x64xbf16>
    %c0_10 = arith.constant 0 : index
    %c0_11 = arith.constant 0 : index
    %18 = vector.load %arg6[%c0_10, %c0_11] : memref<64x128xbf16, #tpu.memory_space<vmem>>, vector<64x128xbf16>
    %cst_12 = arith.constant dense<0.000000e+00> : vector<32x128xf32>
    %19 = tpu.matmul %17, %18, %cst_12 {dimension_numbers = #tpu.dot_dimension_numbers<[1], [0], [0], [1], [0, 0, 1, 1], [], []>} : vector<32x64xbf16>, vector<64x128xbf16>, vector<32x128xf32> -> vector<32x128xf32>
    %c0_13 = arith.constant 0 : index
    %c0_14 = arith.constant 0 : index
    %20 = vector.load %arg7[%c0_13, %c0_14] : memref<1x128xf32, #tpu.memory_space<vmem>>, vector<1x128xf32>
    %21 = vector.broadcast %20 : vector<1x128xf32> to vector<32x128xf32>
    %22 = arith.mulf %19, %21 : vector<32x128xf32>
    %c0_15 = arith.constant 0 : index
    %c0_16 = arith.constant 0 : index
    %23 = vector.load %arg8[%c0_15, %c0_16] : memref<1x128xf32, #tpu.memory_space<vmem>>, vector<1x128xf32>
    %24 = vector.broadcast %23 : vector<1x128xf32> to vector<32x128xf32>
    %25 = arith.addf %22, %24 : vector<32x128xf32>
    %cst_17 = arith.constant 0.000000e+00 : f32
    %26 = vector.broadcast %cst_17 : f32 to vector<32x128xf32>
    %27 = arith.maximumf %25, %26 : vector<32x128xf32>
    %28 = arith.truncf %27 : vector<32x128xf32> to vector<32x128xbf16>
    %c0_18 = arith.constant 0 : index
    %c0_19 = arith.constant 0 : index
    %29 = vector.load %arg9[%c0_18, %c0_19] : memref<128x1024xbf16, #tpu.memory_space<vmem>>, vector<128x1024xbf16>
    %cst_20 = arith.constant dense<0.000000e+00> : vector<32x1024xf32>
    %30 = tpu.matmul %28, %29, %cst_20 {dimension_numbers = #tpu.dot_dimension_numbers<[1], [0], [0], [1], [0, 0, 1, 1], [], []>} : vector<32x128xbf16>, vector<128x1024xbf16>, vector<32x1024xf32> -> vector<32x1024xf32>
    %c0_21 = arith.constant 0 : index
    %c0_22 = arith.constant 0 : index
    %31 = vector.load %arg10[%c0_21, %c0_22] : memref<1x1024xf32, #tpu.memory_space<vmem>>, vector<1x1024xf32>
    %32 = vector.broadcast %31 : vector<1x1024xf32> to vector<32x1024xf32>
    %33 = arith.mulf %30, %32 : vector<32x1024xf32>
    %c0_23 = arith.constant 0 : index
    %c0_24 = arith.constant 0 : index
    %34 = vector.load %arg11[%c0_23, %c0_24] : memref<1x1024xf32, #tpu.memory_space<vmem>>, vector<1x1024xf32>
    %35 = vector.broadcast %34 : vector<1x1024xf32> to vector<32x1024xf32>
    %36 = arith.addf %33, %35 : vector<32x1024xf32>
    %cst_25 = arith.constant 0.000000e+00 : f32
    %37 = vector.broadcast %cst_25 : f32 to vector<32x1024xf32>
    %38 = arith.maximumf %36, %37 : vector<32x1024xf32>
    %39 = vector.shape_cast %38 : vector<32x1024xf32> to vector<1x32x1024xf32>
    %c0_26 = arith.constant 0 : index
    %c0_27 = arith.constant 0 : index
    %40 = vector.load %arg21[%c0_26, %c0_27] : memref<1x1024xf32, #tpu.memory_space<vmem>>, vector<1x1024xf32>
    %cst_28 = arith.constant dense<0xFF800000> : vector<1x1024xf32>
    %41 = vector.multi_reduction <maximumf>, %39, %cst_28 [1] : vector<1x32x1024xf32> to vector<1x1024xf32>
    %42 = arith.maximumf %40, %41 : vector<1x1024xf32>
    %c0_29 = arith.constant 0 : index
    %c0_30 = arith.constant 0 : index
    %43 = vector.load %arg21[%c0_29, %c0_30] : memref<1x1024xf32, #tpu.memory_space<vmem>>, vector<1x1024xf32>
    tpu.vector_store %arg21[%c0_29, %c0_30], %42 {strides = array<i32>} : memref<1x1024xf32, #tpu.memory_space<vmem>>, vector<1x1024xf32>,
    %c0_i32_31 = arith.constant 0 : i32
    %44 = arith.cmpi eq, %arg1, %c0_i32_31 : i32
    %45 = arith.extui %44 : i1 to i32
    %c0_i32_32 = arith.constant 0 : i32
    %46 = arith.cmpi ne, %45, %c0_i32_32 : i32
    scf.if %46 {
      %c0_33 = arith.constant 0 : index
      %c0_34 = arith.constant 0 : index
      %47 = vector.load %arg21[%c0_33, %c0_34] : memref<1x1024xf32, #tpu.memory_space<vmem>>, vector<1x1024xf32>
      %48 = arith.truncf %47 : vector<1x1024xf32> to vector<1x1024xbf16>
      %c0_35 = arith.constant 0 : index
      %c0_36 = arith.constant 0 : index
      %49 = vector.load %arg12[%c0_35, %c0_36] : memref<1024x512xbf16, #tpu.memory_space<vmem>>, vector<1024x512xbf16>
      %cst_37 = arith.constant dense<0.000000e+00> : vector<1x512xf32>
      %50 = tpu.matmul %48, %49, %cst_37 {dimension_numbers = #tpu.dot_dimension_numbers<[1], [0], [0], [1], [0, 0, 1, 1], [], []>} : vector<1x1024xbf16>, vector<1024x512xbf16>, vector<1x512xf32> -> vector<1x512xf32>
      %c0_38 = arith.constant 0 : index
      %c0_39 = arith.constant 0 : index
      %51 = vector.load %arg13[%c0_38, %c0_39] : memref<1x512xf32, #tpu.memory_space<vmem>>, vector<1x512xf32>
      %52 = arith.mulf %50, %51 : vector<1x512xf32>
      %c0_40 = arith.constant 0 : index
      %c0_41 = arith.constant 0 : index
      %53 = vector.load %arg14[%c0_40, %c0_41] : memref<1x512xf32, #tpu.memory_space<vmem>>, vector<1x512xf32>
      %54 = arith.addf %52, %53 : vector<1x512xf32>
      %cst_42 = arith.constant 0.000000e+00 : f32
      %55 = vector.broadcast %cst_42 : f32 to vector<1x512xf32>
      %56 = arith.maximumf %54, %55 : vector<1x512xf32>
      %57 = arith.truncf %56 : vector<1x512xf32> to vector<1x512xbf16>
      %c0_43 = arith.constant 0 : index
      %c0_44 = arith.constant 0 : index
      %58 = vector.load %arg15[%c0_43, %c0_44] : memref<512x256xbf16, #tpu.memory_space<vmem>>, vector<512x256xbf16>
      %cst_45 = arith.constant dense<0.000000e+00> : vector<1x256xf32>
      %59 = tpu.matmul %57, %58, %cst_45 {dimension_numbers = #tpu.dot_dimension_numbers<[1], [0], [0], [1], [0, 0, 1, 1], [], []>} : vector<1x512xbf16>, vector<512x256xbf16>, vector<1x256xf32> -> vector<1x256xf32>
      %c0_46 = arith.constant 0 : index
      %c0_47 = arith.constant 0 : index
      %60 = vector.load %arg16[%c0_46, %c0_47] : memref<1x256xf32, #tpu.memory_space<vmem>>, vector<1x256xf32>
      %61 = arith.mulf %59, %60 : vector<1x256xf32>
      %c0_48 = arith.constant 0 : index
      %c0_49 = arith.constant 0 : index
      %62 = vector.load %arg17[%c0_48, %c0_49] : memref<1x256xf32, #tpu.memory_space<vmem>>, vector<1x256xf32>
      %63 = arith.addf %61, %62 : vector<1x256xf32>
      %cst_50 = arith.constant 0.000000e+00 : f32
      %64 = vector.broadcast %cst_50 : f32 to vector<1x256xf32>
      %65 = arith.maximumf %63, %64 : vector<1x256xf32>
      %66 = arith.truncf %65 : vector<1x256xf32> to vector<1x256xbf16>
      %c0_51 = arith.constant 0 : index
      %c0_52 = arith.constant 0 : index
      %67 = vector.load %arg18[%c0_51, %c0_52] : memref<256x256xbf16, #tpu.memory_space<vmem>>, vector<256x256xbf16>
      %cst_53 = arith.constant dense<0.000000e+00> : vector<1x256xf32>
      %68 = tpu.matmul %66, %67, %cst_53 {dimension_numbers = #tpu.dot_dimension_numbers<[1], [0], [0], [1], [0, 0, 1, 1], [], []>} : vector<1x256xbf16>, vector<256x256xbf16>, vector<1x256xf32> -> vector<1x256xf32>
      %c0_54 = arith.constant 0 : index
      %c0_55 = arith.constant 0 : index
      %69 = vector.load %arg19[%c0_54, %c0_55] : memref<1x256xf32, #tpu.memory_space<vmem>>, vector<1x256xf32>
      %70 = arith.addf %68, %69 : vector<1x256xf32>
      %71 = vector.shape_cast %70 : vector<1x256xf32> to vector<1x1x256xf32>
      %c0_56 = arith.constant 0 : index
      %c0_57 = arith.constant 0 : index
      %c0_58 = arith.constant 0 : index
      %72 = vector.load %arg20[%c0_56, %c0_57, %c0_58] : memref<1x1x256xf32, #tpu.memory_space<vmem>>, vector<1x1x256xf32>
      tpu.vector_store %arg20[%c0_56, %c0_57, %c0_58], %71 {strides = array<i32>} : memref<1x1x256xf32, #tpu.memory_space<vmem>>, vector<1x1x256xf32>,
    } else {
    }
    return
  }
  func.func @transform_0(%arg0: i32, %arg1: i32) -> (i32, i32, i32) {
    %c0_i32 = arith.constant 0 : i32
    %c0_i32_0 = arith.constant 0 : i32
    return %arg0, %c0_i32, %arg1 : i32, i32, i32
  }
  func.func @transform_1(%arg0: i32, %arg1: i32) -> (i32, i32) {
    %c0_i32 = arith.constant 0 : i32
    %c0_i32_0 = arith.constant 0 : i32
    %c0_i32_1 = arith.constant 0 : i32
    return %c0_i32, %c0_i32_0 : i32, i32
  }
  func.func @transform_2(%arg0: i32, %arg1: i32) -> (i32, i32) {
    %c0_i32 = arith.constant 0 : i32
    %c0_i32_0 = arith.constant 0 : i32
    %c0_i32_1 = arith.constant 0 : i32
    return %c0_i32, %c0_i32_0 : i32, i32
  }
  func.func @transform_3(%arg0: i32, %arg1: i32) -> (i32, i32) {
    %c0_i32 = arith.constant 0 : i32
    %c0_i32_0 = arith.constant 0 : i32
    %c0_i32_1 = arith.constant 0 : i32
    return %c0_i32, %c0_i32_0 : i32, i32
  }
  func.func @transform_4(%arg0: i32, %arg1: i32) -> (i32, i32) {
    %c0_i32 = arith.constant 0 : i32
    %c0_i32_0 = arith.constant 0 : i32
    %c0_i32_1 = arith.constant 0 : i32
    return %c0_i32, %c0_i32_0 : i32, i32
  }
  func.func @transform_5(%arg0: i32, %arg1: i32) -> (i32, i32) {
    %c0_i32 = arith.constant 0 : i32
    %c0_i32_0 = arith.constant 0 : i32
    %c0_i32_1 = arith.constant 0 : i32
    return %c0_i32, %c0_i32_0 : i32, i32
  }
  func.func @transform_6(%arg0: i32, %arg1: i32) -> (i32, i32) {
    %c0_i32 = arith.constant 0 : i32
    %c0_i32_0 = arith.constant 0 : i32
    %c0_i32_1 = arith.constant 0 : i32
    return %c0_i32, %c0_i32_0 : i32, i32
  }
  func.func @transform_7(%arg0: i32, %arg1: i32) -> (i32, i32) {
    %c0_i32 = arith.constant 0 : i32
    %c0_i32_0 = arith.constant 0 : i32
    %c0_i32_1 = arith.constant 0 : i32
    return %c0_i32, %c0_i32_0 : i32, i32
  }
  func.func @transform_8(%arg0: i32, %arg1: i32) -> (i32, i32) {
    %c0_i32 = arith.constant 0 : i32
    %c0_i32_0 = arith.constant 0 : i32
    %c0_i32_1 = arith.constant 0 : i32
    return %c0_i32, %c0_i32_0 : i32, i32
  }
  func.func @transform_9(%arg0: i32, %arg1: i32) -> (i32, i32) {
    %c0_i32 = arith.constant 0 : i32
    %c0_i32_0 = arith.constant 0 : i32
    %c0_i32_1 = arith.constant 0 : i32
    return %c0_i32, %c0_i32_0 : i32, i32
  }
  func.func @transform_10(%arg0: i32, %arg1: i32) -> (i32, i32) {
    %c0_i32 = arith.constant 0 : i32
    %c0_i32_0 = arith.constant 0 : i32
    %c0_i32_1 = arith.constant 0 : i32
    return %c0_i32, %c0_i32_0 : i32, i32
  }
  func.func @transform_11(%arg0: i32, %arg1: i32) -> (i32, i32) {
    %c0_i32 = arith.constant 0 : i32
    %c0_i32_0 = arith.constant 0 : i32
    %c0_i32_1 = arith.constant 0 : i32
    return %c0_i32, %c0_i32_0 : i32, i32
  }
  func.func @transform_12(%arg0: i32, %arg1: i32) -> (i32, i32) {
    %c0_i32 = arith.constant 0 : i32
    %c0_i32_0 = arith.constant 0 : i32
    %c0_i32_1 = arith.constant 0 : i32
    return %c0_i32, %c0_i32_0 : i32, i32
  }
  func.func @transform_13(%arg0: i32, %arg1: i32) -> (i32, i32) {
    %c0_i32 = arith.constant 0 : i32
    %c0_i32_0 = arith.constant 0 : i32
    %c0_i32_1 = arith.constant 0 : i32
    return %c0_i32, %c0_i32_0 : i32, i32
  }
  func.func @transform_14(%arg0: i32, %arg1: i32) -> (i32, i32) {
    %c0_i32 = arith.constant 0 : i32
    %c0_i32_0 = arith.constant 0 : i32
    %c0_i32_1 = arith.constant 0 : i32
    return %c0_i32, %c0_i32_0 : i32, i32
  }
  func.func @transform_15(%arg0: i32, %arg1: i32) -> (i32, i32) {
    %c0_i32 = arith.constant 0 : i32
    %c0_i32_0 = arith.constant 0 : i32
    %c0_i32_1 = arith.constant 0 : i32
    return %c0_i32, %c0_i32_0 : i32, i32
  }
  func.func @transform_16(%arg0: i32, %arg1: i32) -> (i32, i32) {
    %c0_i32 = arith.constant 0 : i32
    %c0_i32_0 = arith.constant 0 : i32
    %c0_i32_1 = arith.constant 0 : i32
    return %c0_i32, %c0_i32_0 : i32, i32
  }
  func.func @transform_17(%arg0: i32, %arg1: i32) -> (i32, i32) {
    %c0_i32 = arith.constant 0 : i32
    %c0_i32_0 = arith.constant 0 : i32
    %c0_i32_1 = arith.constant 0 : i32
    return %c0_i32, %c0_i32_0 : i32, i32
  }
  func.func @transform_18(%arg0: i32, %arg1: i32) -> (i32, i32, i32) {
    %c0_i32 = arith.constant 0 : i32
    %c0_i32_0 = arith.constant 0 : i32
    %c0_i32_1 = arith.constant 0 : i32
    return %arg0, %c0_i32, %c0_i32_0 : i32, i32, i32
  }
}

</mosaic_0001>

<llo_original>
// kernel: tpu_custom_call.1
$region0: #{tpu_custom_call.1}
  #allocation0 [shape = 'u32[]', space=smem, size = 0x4, offset = 0x4, fixed_abs, tag = 'smem constant byte address 0x4 - core index']
  #allocation1 [shape = 'u32[144,128]{1,0:T(1,128)}', space=vmem, size = 0x12000, scoped, tag = 'internal scratch']
  #allocation2 [shape = 'f32[1,1024]{1,0:T(1,128)}', space=vmem, size = 0x1000, scoped, tag = 'scratch operand']
  %s0 = inlined_call_operand.hbm [shape: f32[2,16,32], index: 0, kind: input, shape index: {}]
  %s1 = inlined_call_operand.hbm [shape: bf16[16,64], index: 1, kind: input, shape index: {}]
  %s2 = inlined_call_operand.hbm [shape: f32[1,64], index: 2, kind: input, shape index: {}]
  %s3 = inlined_call_operand.hbm [shape: f32[1,64], index: 3, kind: input, shape index: {}]
  %s4 = inlined_call_operand.hbm [shape: bf16[64,128], index: 4, kind: input, shape index: {}]
  %s5 = inlined_call_operand.hbm [shape: f32[1,128], index: 5, kind: input, shape index: {}]
  %s6 = inlined_call_operand.hbm [shape: f32[1,128], index: 6, kind: input, shape index: {}]
  %s7 = inlined_call_operand.hbm [shape: bf16[128,1024], index: 7, kind: input, shape index: {}]
  %s8 = inlined_call_operand.vmem [shape: f32[1,1024], index: 8, kind: input, shape index: {}]
  %s9 = inlined_call_operand.vmem [shape: f32[1,1024], index: 9, kind: input, shape index: {}]
  %s10 = inlined_call_operand.hbm [shape: bf16[1024,512], index: 10, kind: input, shape index: {}]
  %s11 = inlined_call_operand.vmem [shape: f32[1,512], index: 11, kind: input, shape index: {}]
  %s12 = inlined_call_operand.hbm [shape: f32[1,512], index: 12, kind: input, shape index: {}]
  %s13 = inlined_call_operand.hbm [shape: bf16[512,256], index: 13, kind: input, shape index: {}]
  %s14 = inlined_call_operand.vmem [shape: f32[1,256], index: 14, kind: input, shape index: {}]
  %s15 = inlined_call_operand.vmem [shape: f32[1,256], index: 15, kind: input, shape index: {}]
  %s16 = inlined_call_operand.hbm [shape: bf16[256,256], index: 16, kind: input, shape index: {}]
  %s17 = inlined_call_operand.vmem [shape: f32[1,256], index: 17, kind: input, shape index: {}]
  %s18 = inlined_call_operand.hbm [shape: f32[2,1,256], index: 18, kind: output, shape index: {}]
  %s19 = sld [smem:[#allocation0]]
  $region161: #{tpu_custom_call.1} parent=0
    _
  %s21 = ssub.s32 1, %s19
  %s22 = scalar_select 0, %s21, %s19
  $region1: #{tpu_custom_call.1} parent=0
    #allocation3 [shape = 'u8[16384]{0}', space=vmem, size = 0x4000, scoped, tag = 'input window, operand 0']
    #allocation4 [shape = 's32[2]{0}', space=sflag, size = 0x8, scoped, tag = 'scoped memory for tpu_custom_call.1']
    #allocation5 [shape = 's32[2]{0}', space=sflag, size = 0x8, scoped, tag = 'scoped memory for tpu_custom_call.1']
    #allocation6 [shape = 'u8[4096]{0}', space=vmem, size = 0x1000, scoped, tag = 'input window, operand 1, single buffered']
    #allocation7 [shape = 's32[1]{0}', space=sflag, size = 0x4, scoped, tag = 'scoped memory for tpu_custom_call.1']
    #allocation8 [shape = 'u8[512]{0}', space=vmem, size = 0x400, scoped, tag = 'input window, operand 2, single buffered']
    #allocation9 [shape = 'u8[512]{0}', space=vmem, size = 0x400, scoped, tag = 'input window, operand 3, single buffered']
    #allocation10 [shape = 's32[1]{0}', space=sflag, size = 0x4, scoped, tag = 'scoped memory for tpu_custom_call.1']
    #allocation11 [shape = 'u8[16384]{0}', space=vmem, size = 0x4000, scoped, tag = 'input window, operand 4, single buffered']
    #allocation12 [shape = 'u8[512]{0}', space=vmem, size = 0x400, scoped, tag = 'input window, operand 5, single buffered']
    #allocation13 [shape = 's32[1]{0}', space=sflag, size = 0x4, scoped, tag = 'scoped memory for tpu_custom_call.1']
    #allocation14 [shape = 'u8[512]{0}', space=vmem, size = 0x400, scoped, tag = 'input window, operand 6, single buffered']
    #allocation15 [shape = 'u8[262144]{0}', space=vmem, size = 0x40000, scoped, tag = 'input window, operand 7, single buffered']
    #allocation16 [shape = 's32[1]{0}', space=sflag, size = 0x4, scoped, tag = 'scoped memory for tpu_custom_call.1']
    #allocation17 [shape = 'u8[1048576]{0}', space=vmem, size = 0x100000, scoped, tag = 'input window, operand 10, single buffered']
    #allocation18 [shape = 'u8[2048]{0}', space=vmem, size = 0x800, scoped, tag = 'input window, operand 12, single buffered']
    #allocation19 [shape = 's32[1]{0}', space=sflag, size = 0x4, scoped, tag = 'scoped memory for tpu_custom_call.1']
    #allocation20 [shape = 'u8[262144]{0}', space=vmem, size = 0x40000, scoped, tag = 'input window, operand 13, single buffered']
    #allocation21 [shape = 'u8[131072]{0}', space=vmem, size = 0x20000, scoped, tag = 'input window, operand 16, single buffered']
    #allocation22 [shape = 's32[1]{0}', space=sflag, size = 0x4, scoped, tag = 'scoped memory for tpu_custom_call.1']
    #allocation23 [shape = 'u8[2048]{0}', space=vmem, size = 0x800, scoped, tag = 'output window, operand 0']
    %23 = vsyncpa [#allocation4], 0
    %s24 = scalar_lea.sflag [#allocation4], 1
    %25 = vsyncpa %s24, 0
    %26 = vsyncpa [#allocation7], 0
    %27 = vsyncpa [#allocation10], 0
    %28 = vsyncpa [#allocation13], 0
    %29 = vsyncpa [#allocation16], 0
    %30 = vsyncpa [#allocation19], 0
    %31 = vsyncpa [#allocation22], 0
    %32 = vsyncpa [#allocation5], 0
    %s33 = scalar_lea.sflag [#allocation5], 1
    %34 = vsyncpa %s33, 0
    loop: start=0, step=1, limit=4
    $region2: #{tpu_custom_call.1} parent=1 // loop_pre_header
      _
    $region3: #{tpu_custom_call.1} parent=1 // loop_header
      %s36 = sphi 0, %s40
      %p37 = scmp.ge.s32.totalorder %s36, 4
      %s43 = sphi 0, %s55
      %s44 = sphi 0, %s51
      %s45 = sphi 0, %s43
      %s46 = sphi 0, %s44
      %s47 = sphi 0, %s45
      %s48 = sphi 0, %s46
      %s60 = sphi 0, %s62
      %s63 = sphi 0, %s60
      %s64 = sphi 0, %s63
      %s80 = sphi 0, %s64
      %s84 = sphi 0, %s84
      %s86 = sphi 0, %s84
      %s87 = sphi 0, %s86
      %s101 = sphi 0, %s87
      %s105 = sphi 0, %s105
      %s107 = sphi 0, %s105
      %s108 = sphi 0, %s107
      %s122 = sphi 0, %s108
      %s126 = sphi 0, %s126
      %s128 = sphi 0, %s126
      %s129 = sphi 0, %s128
      %s143 = sphi 0, %s129
      %s147 = sphi 0, %s147
      %s149 = sphi 0, %s147
      %s150 = sphi 0, %s149
      %s164 = sphi 0, %s150
      %s168 = sphi 0, %s168
      %s170 = sphi 0, %s168
      %s171 = sphi 0, %s170
      %s185 = sphi 0, %s171
      %s189 = sphi 0, %s189
      %s191 = sphi 0, %s189
      %s192 = sphi 0, %s191
      %s206 = sphi 0, %s192
      %s210 = sphi 0, %s210
      %s212 = sphi 0, %s210
      %s213 = sphi 0, %s212
      %s227 = sphi 0, %s213
      %s231 = sphi 0, %s231
      %s233 = sphi 0, %s231
      %s234 = sphi 0, %s233
      %s248 = sphi 0, %s234
      %s252 = sphi 0, %s252
      %s254 = sphi 0, %s252
      %s255 = sphi 0, %s254
      %s269 = sphi 0, %s255
      %s273 = sphi 0, %s273
      %s275 = sphi 0, %s273
      %s276 = sphi 0, %s275
      %s290 = sphi 0, %s276
      %s294 = sphi 0, %s294
      %s296 = sphi 0, %s294
      %s297 = sphi 0, %s296
      %s311 = sphi 0, %s297
      %s315 = sphi 0, %s315
      %s317 = sphi 0, %s315
      %s318 = sphi 0, %s317
      %s332 = sphi 0, %s318
      %s336 = sphi 0, %s336
      %s338 = sphi 0, %s336
      %s339 = sphi 0, %s338
      %s353 = sphi 0, %s339
      %s357 = sphi 0, %s357
      %s359 = sphi 0, %s357
      %s360 = sphi 0, %s359
      %s374 = sphi 0, %s360
      %s378 = sphi 0, %s378
      %s380 = sphi 0, %s378
      %s381 = sphi 0, %s380
      %s395 = sphi 0, %s381
      %s399 = sphi 0, %s399
      %s401 = sphi 0, %s399
      %s402 = sphi 0, %s401
      %s416 = sphi 0, %s402
      %s420 = sphi 0, %s420
      %s422 = sphi 0, %s420
      %s423 = sphi 0, %s422
      %s437 = sphi 0, %s423
      %s443 = sphi 0, %s445
      %s446 = sphi 0, %s443
      %s447 = sphi 0, %s446
      %s463 = sphi 0, %s447
    $region4: #{tpu_custom_call.1} parent=1 // loop_header_branch
      %39 = sbr.rel (%p37) target = $region8
    $region5: #{tpu_custom_call.1} parent=1 // loop_body
      %s41 = ssub.s32 %s36, 1
      %s42 = ssub.s32 %s36, 2
      %s49 = sadd.s32 1, %s44
      %p50 = scmp.ge.s32.totalorder %s49, 1
      %s51 = scalar_select %p50, 0, %s49
      %s52 = sadd.s32 1, %s43
      %s53 = scalar_select %p50, %s52, %s43
      %p54 = scmp.ge.s32.totalorder %s53, 2
      %s55 = scalar_select %p54, 0, %s53
      %s56 = ssub.s32 %s43, %s55
      %s57 = ssub.s32 %s44, %s51
      %s58 = sor.u32 %s56, %s57
      %p59 = scmp.eq.s32.totalorder %s58, 0
      %s61 = sadd.s32 %s60, 1
      %s62 = scalar_select %p59, %s60, %s61
      %p65 = pneg %p59
      %p66 = scmp.eq.s32.totalorder %s36, 1
      %p67 = por %p65, %p66
      %p68 = scmp.ne.s32.totalorder %s60, %s63
      %p69 = scmp.eq.s32.totalorder %s36, 0
      %p70 = por %p68, %p69
      %p71 = scmp.ne.s32.totalorder %s60, %s63
      %p72 = scmp.eq.s32.totalorder %s41, 1
      %p73 = por %p71, %p72
      %p74 = scmp.ne.s32.totalorder %s63, %s64
      %p75 = scmp.eq.s32.totalorder %s41, 0
      %p76 = por %p74, %p75
      %p77 = scmp.ne.s32.totalorder %s63, %s64
      %p78 = scmp.eq.s32.totalorder %s42, 1
      %p79 = por %p77, %p78
      %p81 = scmp.ne.s32.totalorder %s64, %s80
      %p82 = scmp.eq.s32.totalorder %s42, 0
      %p83 = por %p81, %p82
      %s85 = sadd.s32 %s84, 1
      %p88 = scmp.eq.s32.totalorder %s36, 1
      %p89 = scmp.ne.s32.totalorder %s84, %s86
      %p90 = scmp.eq.s32.totalorder %s36, 0
      %p91 = por %p89, %p90
      %p92 = scmp.ne.s32.totalorder %s84, %s86
      %p93 = scmp.eq.s32.totalorder %s41, 1
      %p94 = por %p92, %p93
      %p95 = scmp.ne.s32.totalorder %s86, %s87
      %p96 = scmp.eq.s32.totalorder %s41, 0
      %p97 = por %p95, %p96
      %p98 = scmp.ne.s32.totalorder %s86, %s87
      %p99 = scmp.eq.s32.totalorder %s42, 1
      %p100 = por %p98, %p99
      %p102 = scmp.ne.s32.totalorder %s87, %s101
      %p103 = scmp.eq.s32.totalorder %s42, 0
      %p104 = por %p102, %p103
      %s106 = sadd.s32 %s105, 1
      %p109 = scmp.eq.s32.totalorder %s36, 1
      %p110 = scmp.ne.s32.totalorder %s105, %s107
      %p111 = scmp.eq.s32.totalorder %s36, 0
      %p112 = por %p110, %p111
      %p113 = scmp.ne.s32.totalorder %s105, %s107
      %p114 = scmp.eq.s32.totalorder %s41, 1
      %p115 = por %p113, %p114
      %p116 = scmp.ne.s32.totalorder %s107, %s108
      %p117 = scmp.eq.s32.totalorder %s41, 0
      %p118 = por %p116, %p117
      %p119 = scmp.ne.s32.totalorder %s107, %s108
      %p120 = scmp.eq.s32.totalorder %s42, 1
      %p121 = por %p119, %p120
      %p123 = scmp.ne.s32.totalorder %s108, %s122
      %p124 = scmp.eq.s32.totalorder %s42, 0
      %p125 = por %p123, %p124
      %s127 = sadd.s32 %s126, 1
      %p130 = scmp.eq.s32.totalorder %s36, 1
      %p131 = scmp.ne.s32.totalorder %s126, %s128
      %p132 = scmp.eq.s32.totalorder %s36, 0
      %p133 = por %p131, %p132
      %p134 = scmp.ne.s32.totalorder %s126, %s128
      %p135 = scmp.eq.s32.totalorder %s41, 1
      %p136 = por %p134, %p135
      %p137 = scmp.ne.s32.totalorder %s128, %s129
      %p138 = scmp.eq.s32.totalorder %s41, 0
      %p139 = por %p137, %p138
      %p140 = scmp.ne.s32.totalorder %s128, %s129
      %p141 = scmp.eq.s32.totalorder %s42, 1
      %p142 = por %p140, %p141
      %p144 = scmp.ne.s32.totalorder %s129, %s143
      %p145 = scmp.eq.s32.totalorder %s42, 0
      %p146 = por %p144, %p145
      %s148 = sadd.s32 %s147, 1
      %p151 = scmp.eq.s32.totalorder %s36, 1
      %p152 = scmp.ne.s32.totalorder %s147, %s149
      %p153 = scmp.eq.s32.totalorder %s36, 0
      %p154 = por %p152, %p153
      %p155 = scmp.ne.s32.totalorder %s147, %s149
      %p156 = scmp.eq.s32.totalorder %s41, 1
      %p157 = por %p155, %p156
      %p158 = scmp.ne.s32.totalorder %s149, %s150
      %p159 = scmp.eq.s32.totalorder %s41, 0
      %p160 = por %p158, %p159
      %p161 = scmp.ne.s32.totalorder %s149, %s150
      %p162 = scmp.eq.s32.totalorder %s42, 1
      %p163 = por %p161, %p162
      %p165 = scmp.ne.s32.totalorder %s150, %s164
      %p166 = scmp.eq.s32.totalorder %s42, 0
      %p167 = por %p165, %p166
      %s169 = sadd.s32 %s168, 1
      %p172 = scmp.eq.s32.totalorder %s36, 1
      %p173 = scmp.ne.s32.totalorder %s168, %s170
      %p174 = scmp.eq.s32.totalorder %s36, 0
      %p175 = por %p173, %p174
      %p176 = scmp.ne.s32.totalorder %s168, %s170
      %p177 = scmp.eq.s32.totalorder %s41, 1
      %p178 = por %p176, %p177
      %p179 = scmp.ne.s32.totalorder %s170, %s171
      %p180 = scmp.eq.s32.totalorder %s41, 0
      %p181 = por %p179, %p180
      %p182 = scmp.ne.s32.totalorder %s170, %s171
      %p183 = scmp.eq.s32.totalorder %s42, 1
      %p184 = por %p182, %p183
      %p186 = scmp.ne.s32.totalorder %s171, %s185
      %p187 = scmp.eq.s32.totalorder %s42, 0
      %p188 = por %p186, %p187
      %s190 = sadd.s32 %s189, 1
      %p193 = scmp.eq.s32.totalorder %s36, 1
      %p194 = scmp.ne.s32.totalorder %s189, %s191
      %p195 = scmp.eq.s32.totalorder %s36, 0
      %p196 = por %p194, %p195
      %p197 = scmp.ne.s32.totalorder %s189, %s191
      %p198 = scmp.eq.s32.totalorder %s41, 1
      %p199 = por %p197, %p198
      %p200 = scmp.ne.s32.totalorder %s191, %s192
      %p201 = scmp.eq.s32.totalorder %s41, 0
      %p202 = por %p200, %p201
      %p203 = scmp.ne.s32.totalorder %s191, %s192
      %p204 = scmp.eq.s32.totalorder %s42, 1
      %p205 = por %p203, %p204
      %p207 = scmp.ne.s32.totalorder %s192, %s206
      %p208 = scmp.eq.s32.totalorder %s42, 0
      %p209 = por %p207, %p208
      %s211 = sadd.s32 %s210, 1
      %p214 = scmp.eq.s32.totalorder %s36, 1
      %p215 = scmp.ne.s32.totalorder %s210, %s212
      %p216 = scmp.eq.s32.totalorder %s36, 0
      %p217 = por %p215, %p216
      %p218 = scmp.ne.s32.totalorder %s210, %s212
      %p219 = scmp.eq.s32.totalorder %s41, 1
      %p220 = por %p218, %p219
      %p221 = scmp.ne.s32.totalorder %s212, %s213
      %p222 = scmp.eq.s32.totalorder %s41, 0
      %p223 = por %p221, %p222
      %p224 = scmp.ne.s32.totalorder %s212, %s213
      %p225 = scmp.eq.s32.totalorder %s42, 1
      %p226 = por %p224, %p225
      %p228 = scmp.ne.s32.totalorder %s213, %s227
      %p229 = scmp.eq.s32.totalorder %s42, 0
      %p230 = por %p228, %p229
      %s232 = sadd.s32 %s231, 1
      %p235 = scmp.eq.s32.totalorder %s36, 1
      %p236 = scmp.ne.s32.totalorder %s231, %s233
      %p237 = scmp.eq.s32.totalorder %s36, 0
      %p238 = por %p236, %p237
      %p239 = scmp.ne.s32.totalorder %s231, %s233
      %p240 = scmp.eq.s32.totalorder %s41, 1
      %p241 = por %p239, %p240
      %p242 = scmp.ne.s32.totalorder %s233, %s234
      %p243 = scmp.eq.s32.totalorder %s41, 0
      %p244 = por %p242, %p243
      %p245 = scmp.ne.s32.totalorder %s233, %s234
      %p246 = scmp.eq.s32.totalorder %s42, 1
      %p247 = por %p245, %p246
      %p249 = scmp.ne.s32.totalorder %s234, %s248
      %p250 = scmp.eq.s32.totalorder %s42, 0
      %p251 = por %p249, %p250
      %s253 = sadd.s32 %s252, 1
      %p256 = scmp.eq.s32.totalorder %s36, 1
      %p257 = scmp.ne.s32.totalorder %s252, %s254
      %p258 = scmp.eq.s32.totalorder %s36, 0
      %p259 = por %p257, %p258
      %p260 = scmp.ne.s32.totalorder %s252, %s254
      %p261 = scmp.eq.s32.totalorder %s41, 1
      %p262 = por %p260, %p261
      %p263 = scmp.ne.s32.totalorder %s254, %s255
      %p264 = scmp.eq.s32.totalorder %s41, 0
      %p265 = por %p263, %p264
      %p266 = scmp.ne.s32.totalorder %s254, %s255
      %p267 = scmp.eq.s32.totalorder %s42, 1
      %p268 = por %p266, %p267
      %p270 = scmp.ne.s32.totalorder %s255, %s269
      %p271 = scmp.eq.s32.totalorder %s42, 0
      %p272 = por %p270, %p271
      %s274 = sadd.s32 %s273, 1
      %p277 = scmp.eq.s32.totalorder %s36, 1
      %p278 = scmp.ne.s32.totalorder %s273, %s275
      %p279 = scmp.eq.s32.totalorder %s36, 0
      %p280 = por %p278, %p279
      %p281 = scmp.ne.s32.totalorder %s273, %s275
      %p282 = scmp.eq.s32.totalorder %s41, 1
      %p283 = por %p281, %p282
      %p284 = scmp.ne.s32.totalorder %s275, %s276
      %p285 = scmp.eq.s32.totalorder %s41, 0
      %p286 = por %p284, %p285
      %p287 = scmp.ne.s32.totalorder %s275, %s276
      %p288 = scmp.eq.s32.totalorder %s42, 1
      %p289 = por %p287, %p288
      %p291 = scmp.ne.s32.totalorder %s276, %s290
      %p292 = scmp.eq.s32.totalorder %s42, 0
      %p293 = por %p291, %p292
      %s295 = sadd.s32 %s294, 1
      %p298 = scmp.eq.s32.totalorder %s36, 1
      %p299 = scmp.ne.s32.totalorder %s294, %s296
      %p300 = scmp.eq.s32.totalorder %s36, 0
      %p301 = por %p299, %p300
      %p302 = scmp.ne.s32.totalorder %s294, %s296
      %p303 = scmp.eq.s32.totalorder %s41, 1
      %p304 = por %p302, %p303
      %p305 = scmp.ne.s32.totalorder %s296, %s297
      %p306 = scmp.eq.s32.totalorder %s41, 0
      %p307 = por %p305, %p306
      %p308 = scmp.ne.s32.totalorder %s296, %s297
      %p309 = scmp.eq.s32.totalorder %s42, 1
      %p310 = por %p308, %p309
      %p312 = scmp.ne.s32.totalorder %s297, %s311
      %p313 = scmp.eq.s32.totalorder %s42, 0
      %p314 = por %p312, %p313
      %s316 = sadd.s32 %s315, 1
      %p319 = scmp.eq.s32.totalorder %s36, 1
      %p320 = scmp.ne.s32.totalorder %s315, %s317
      %p321 = scmp.eq.s32.totalorder %s36, 0
      %p322 = por %p320, %p321
      %p323 = scmp.ne.s32.totalorder %s315, %s317
      %p324 = scmp.eq.s32.totalorder %s41, 1
      %p325 = por %p323, %p324
      %p326 = scmp.ne.s32.totalorder %s317, %s318
      %p327 = scmp.eq.s32.totalorder %s41, 0
      %p328 = por %p326, %p327
      %p329 = scmp.ne.s32.totalorder %s317, %s318
      %p330 = scmp.eq.s32.totalorder %s42, 1
      %p331 = por %p329, %p330
      %p333 = scmp.ne.s32.totalorder %s318, %s332
      %p334 = scmp.eq.s32.totalorder %s42, 0
      %p335 = por %p333, %p334
      %s337 = sadd.s32 %s336, 1
      %p340 = scmp.eq.s32.totalorder %s36, 1
      %p341 = scmp.ne.s32.totalorder %s336, %s338
      %p342 = scmp.eq.s32.totalorder %s36, 0
      %p343 = por %p341, %p342
      %p344 = scmp.ne.s32.totalorder %s336, %s338
      %p345 = scmp.eq.s32.totalorder %s41, 1
      %p346 = por %p344, %p345
      %p347 = scmp.ne.s32.totalorder %s338, %s339
      %p348 = scmp.eq.s32.totalorder %s41, 0
      %p349 = por %p347, %p348
      %p350 = scmp.ne.s32.totalorder %s338, %s339
      %p351 = scmp.eq.s32.totalorder %s42, 1
      %p352 = por %p350, %p351
      %p354 = scmp.ne.s32.totalorder %s339, %s353
      %p355 = scmp.eq.s32.totalorder %s42, 0
      %p356 = por %p354, %p355
      %s358 = sadd.s32 %s357, 1
      %p361 = scmp.eq.s32.totalorder %s36, 1
      %p362 = scmp.ne.s32.totalorder %s357, %s359
      %p363 = scmp.eq.s32.totalorder %s36, 0
      %p364 = por %p362, %p363
      %p365 = scmp.ne.s32.totalorder %s357, %s359
      %p366 = scmp.eq.s32.totalorder %s41, 1
      %p367 = por %p365, %p366
      %p368 = scmp.ne.s32.totalorder %s359, %s360
      %p369 = scmp.eq.s32.totalorder %s41, 0
      %p370 = por %p368, %p369
      %p371 = scmp.ne.s32.totalorder %s359, %s360
      %p372 = scmp.eq.s32.totalorder %s42, 1
      %p373 = por %p371, %p372
      %p375 = scmp.ne.s32.totalorder %s360, %s374
      %p376 = scmp.eq.s32.totalorder %s42, 0
      %p377 = por %p375, %p376
      %s379 = sadd.s32 %s378, 1
      %p382 = scmp.eq.s32.totalorder %s36, 1
      %p383 = scmp.ne.s32.totalorder %s378, %s380
      %p384 = scmp.eq.s32.totalorder %s36, 0
      %p385 = por %p383, %p384
      %p386 = scmp.ne.s32.totalorder %s378, %s380
      %p387 = scmp.eq.s32.totalorder %s41, 1
      %p388 = por %p386, %p387
      %p389 = scmp.ne.s32.totalorder %s380, %s381
      %p390 = scmp.eq.s32.totalorder %s41, 0
      %p391 = por %p389, %p390
      %p392 = scmp.ne.s32.totalorder %s380, %s381
      %p393 = scmp.eq.s32.totalorder %s42, 1
      %p394 = por %p392, %p393
      %p396 = scmp.ne.s32.totalorder %s381, %s395
      %p397 = scmp.eq.s32.totalorder %s42, 0
      %p398 = por %p396, %p397
      %s400 = sadd.s32 %s399, 1
      %p403 = scmp.eq.s32.totalorder %s36, 1
      %p404 = scmp.ne.s32.totalorder %s399, %s401
      %p405 = scmp.eq.s32.totalorder %s36, 0
      %p406 = por %p404, %p405
      %p407 = scmp.ne.s32.totalorder %s399, %s401
      %p408 = scmp.eq.s32.totalorder %s41, 1
      %p409 = por %p407, %p408
      %p410 = scmp.ne.s32.totalorder %s401, %s402
      %p411 = scmp.eq.s32.totalorder %s41, 0
      %p412 = por %p410, %p411
      %p413 = scmp.ne.s32.totalorder %s401, %s402
      %p414 = scmp.eq.s32.totalorder %s42, 1
      %p415 = por %p413, %p414
      %p417 = scmp.ne.s32.totalorder %s402, %s416
      %p418 = scmp.eq.s32.totalorder %s42, 0
      %p419 = por %p417, %p418
      %s421 = sadd.s32 %s420, 1
      %p424 = scmp.eq.s32.totalorder %s36, 1
      %p425 = scmp.ne.s32.totalorder %s420, %s422
      %p426 = scmp.eq.s32.totalorder %s36, 0
      %p427 = por %p425, %p426
      %p428 = scmp.ne.s32.totalorder %s420, %s422
      %p429 = scmp.eq.s32.totalorder %s41, 1
      %p430 = por %p428, %p429
      %p431 = scmp.ne.s32.totalorder %s422, %s423
      %p432 = scmp.eq.s32.totalorder %s41, 0
      %p433 = por %p431, %p432
      %p434 = scmp.ne.s32.totalorder %s422, %s423
      %p435 = scmp.eq.s32.totalorder %s42, 1
      %p436 = por %p434, %p435
      %p438 = scmp.ne.s32.totalorder %s423, %s437
      %p439 = scmp.eq.s32.totalorder %s42, 0
      %p440 = por %p438, %p439
      %s441 = ssub.s32 %s43, %s55
      %p442 = scmp.eq.s32.totalorder %s441, 0
      %s444 = sadd.s32 %s443, 1
      %s445 = scalar_select %p442, %s443, %s444
      %p448 = pneg %p442
      %p449 = scmp.eq.s32.totalorder %s36, 1
      %p450 = por %p448, %p449
      %p451 = scmp.ne.s32.totalorder %s443, %s446
      %p452 = scmp.eq.s32.totalorder %s36, 0
      %p453 = por %p451, %p452
      %p454 = scmp.ne.s32.totalorder %s443, %s446
      %p455 = scmp.eq.s32.totalorder %s41, 1
      %p456 = por %p454, %p455
      %p457 = scmp.ne.s32.totalorder %s446, %s447
      %p458 = scmp.eq.s32.totalorder %s41, 0
      %p459 = por %p457, %p458
      %p460 = scmp.ne.s32.totalorder %s446, %s447
      %p461 = scmp.eq.s32.totalorder %s42, 1
      %p462 = por %p460, %p461
      %p464 = scmp.ne.s32.totalorder %s447, %s463
      %p465 = scmp.eq.s32.totalorder %s42, 0
      %p466 = por %p464, %p465
      %p467 = scmp.le.s32.totalorder 1, %s36
      %p468 = scmp.lt.s32.totalorder %s36, 3
      %p469 = pnand %p467, %p468
      %p470 = pneg %p469
      // Predicated region
      $region9: #{tpu_custom_call.1} parent=5 // pred_check
        _
      $region10: #{tpu_custom_call.1} parent=5 // pred_check_branch
        %472 = sbr.rel (%p469) target = $region12
      $region11: #{tpu_custom_call.1} parent=5 // pred_region
        %s473 = ssub.s32 %s36, 1
        // Predicated region
        $region13: #{tpu_custom_call.1} parent=11 // pred_check
          %p474 = pneg %p97
        $region14: #{tpu_custom_call.1} parent=11 // pred_check_branch
          %476 = sbr.rel (%p474) target = $region16
        $region15: #{tpu_custom_call.1} parent=11 // pred_region
          %s478 = ssub.s32 128, 128
          %479 = vsyncadd [#allocation7], %s478
          %s480 = sshll.u32 [#allocation6], 4
          %s481 = int_to_ptr.vmem [resolvable:$true] %s480
          %486 = dma.hbm_to_vmem [thread:$0]  %s1, 128, %s481, [#allocation7], 64, 64, 4
        $region16: #{tpu_custom_call.1} parent=11 // pred_fallthru
          _
        // Predicated region
        $region17: #{tpu_custom_call.1} parent=11 // pred_check
          %p487 = pneg %p118
        $region18: #{tpu_custom_call.1} parent=11 // pred_check_branch
          %489 = sbr.rel (%p487) target = $region20
        $region19: #{tpu_custom_call.1} parent=11 // pred_region
          %s491 = ssub.s32 16, 16
          %492 = vsyncadd [#allocation7], %s491
          %s494 = sshll.u32 [#allocation8], 4
          %s495 = int_to_ptr.vmem [resolvable:$true] %s494
          %497 = dma.hbm_to_vmem [thread:$0]  %s2, 16, %s495, [#allocation7]
        $region20: #{tpu_custom_call.1} parent=11 // pred_fallthru
          _
        // Predicated region
        $region21: #{tpu_custom_call.1} parent=11 // pred_check
          %p498 = pneg %p139
        $region22: #{tpu_custom_call.1} parent=11 // pred_check_branch
          %500 = sbr.rel (%p498) target = $region24
        $region23: #{tpu_custom_call.1} parent=11 // pred_region
          %s502 = ssub.s32 16, 16
          %503 = vsyncadd [#allocation10], %s502
          %s505 = sshll.u32 [#allocation9], 4
          %s506 = int_to_ptr.vmem [resolvable:$true] %s505
          %508 = dma.hbm_to_vmem [thread:$0]  %s3, 16, %s506, [#allocation10]
        $region24: #{tpu_custom_call.1} parent=11 // pred_fallthru
          _
        // Predicated region
        $region25: #{tpu_custom_call.1} parent=11 // pred_check
          %p509 = pneg %p160
        $region26: #{tpu_custom_call.1} parent=11 // pred_check_branch
          %511 = sbr.rel (%p509) target = $region28
        $region27: #{tpu_custom_call.1} parent=11 // pred_region
          %s513 = ssub.s32 512, 512
          %514 = vsyncadd [#allocation10], %s513
          %s515 = sshll.u32 [#allocation11], 4
          %s516 = int_to_ptr.vmem [resolvable:$true] %s515
          %521 = dma.hbm_to_vmem [thread:$0]  %s4, 512, %s516, [#allocation10], 64, 64, 4
        $region28: #{tpu_custom_call.1} parent=11 // pred_fallthru
          _
        // Predicated region
        $region29: #{tpu_custom_call.1} parent=11 // pred_check
          %p522 = pneg %p181
        $region30: #{tpu_custom_call.1} parent=11 // pred_check_branch
          %524 = sbr.rel (%p522) target = $region32
        $region31: #{tpu_custom_call.1} parent=11 // pred_region
          %s526 = ssub.s32 16, 16
          %527 = vsyncadd [#allocation13], %s526
          %s529 = sshll.u32 [#allocation12], 4
          %s530 = int_to_ptr.vmem [resolvable:$true] %s529
          %532 = dma.hbm_to_vmem [thread:$0]  %s5, 16, %s530, [#allocation13]
        $region32: #{tpu_custom_call.1} parent=11 // pred_fallthru
          _
        // Predicated region
        $region33: #{tpu_custom_call.1} parent=11 // pred_check
          %p533 = pneg %p202
        $region34: #{tpu_custom_call.1} parent=11 // pred_check_branch
          %535 = sbr.rel (%p533) target = $region36
        $region35: #{tpu_custom_call.1} parent=11 // pred_region
          %s537 = ssub.s32 16, 16
          %538 = vsyncadd [#allocation13], %s537
          %s540 = sshll.u32 [#allocation14], 4
          %s541 = int_to_ptr.vmem [resolvable:$true] %s540
          %543 = dma.hbm_to_vmem [thread:$0]  %s6, 16, %s541, [#allocation13]
        $region36: #{tpu_custom_call.1} parent=11 // pred_fallthru
          _
        // Predicated region
        $region37: #{tpu_custom_call.1} parent=11 // pred_check
          %p544 = pneg %p223
        $region38: #{tpu_custom_call.1} parent=11 // pred_check_branch
          %546 = sbr.rel (%p544) target = $region40
        $region39: #{tpu_custom_call.1} parent=11 // pred_region
          %s548 = ssub.s32 8192, 8192
          %549 = vsyncadd [#allocation16], %s548
          %s550 = sshll.u32 [#allocation15], 4
          %s551 = int_to_ptr.vmem [resolvable:$true] %s550
          %556 = dma.hbm_to_vmem [thread:$0]  %s7, 8192, %s551, [#allocation16], 512, 512, 32
        $region40: #{tpu_custom_call.1} parent=11 // pred_fallthru
          _
        // Predicated region
        $region41: #{tpu_custom_call.1} parent=11 // pred_check
          %p557 = pneg %p244
        $region42: #{tpu_custom_call.1} parent=11 // pred_check_branch
          %559 = sbr.rel (%p557) target = $region44
        $region43: #{tpu_custom_call.1} parent=11 // pred_region
          _
        $region44: #{tpu_custom_call.1} parent=11 // pred_fallthru
          _
        // Predicated region
        $region45: #{tpu_custom_call.1} parent=11 // pred_check
          %p560 = pneg %p265
        $region46: #{tpu_custom_call.1} parent=11 // pred_check_branch
          %562 = sbr.rel (%p560) target = $region48
        $region47: #{tpu_custom_call.1} parent=11 // pred_region
          _
        $region48: #{tpu_custom_call.1} parent=11 // pred_fallthru
          _
        // Predicated region
        $region49: #{tpu_custom_call.1} parent=11 // pred_check
          %p563 = pneg %p286
        $region50: #{tpu_custom_call.1} parent=11 // pred_check_branch
          %565 = sbr.rel (%p563) target = $region52
        $region51: #{tpu_custom_call.1} parent=11 // pred_region
          %s567 = ssub.s32 32768, 32768
          %568 = vsyncadd [#allocation16], %s567
          %s569 = sshll.u32 [#allocation17], 4
          %s570 = int_to_ptr.vmem [resolvable:$true] %s569
          %575 = dma.hbm_to_vmem [thread:$0]  %s10, 32768, %s570, [#allocation16], 256, 256, 16
        $region52: #{tpu_custom_call.1} parent=11 // pred_fallthru
          _
        // Predicated region
        $region53: #{tpu_custom_call.1} parent=11 // pred_check
          %p576 = pneg %p307
        $region54: #{tpu_custom_call.1} parent=11 // pred_check_branch
          %578 = sbr.rel (%p576) target = $region56
        $region55: #{tpu_custom_call.1} parent=11 // pred_region
          _
        $region56: #{tpu_custom_call.1} parent=11 // pred_fallthru
          _
        // Predicated region
        $region57: #{tpu_custom_call.1} parent=11 // pred_check
          %p579 = pneg %p328
        $region58: #{tpu_custom_call.1} parent=11 // pred_check_branch
          %581 = sbr.rel (%p579) target = $region60
        $region59: #{tpu_custom_call.1} parent=11 // pred_region
          %s583 = ssub.s32 64, 64
          %584 = vsyncadd [#allocation19], %s583
          %s586 = sshll.u32 [#allocation18], 4
          %s587 = int_to_ptr.vmem [resolvable:$true] %s586
          %589 = dma.hbm_to_vmem [thread:$0]  %s12, 64, %s587, [#allocation19]
        $region60: #{tpu_custom_call.1} parent=11 // pred_fallthru
          _
        // Predicated region
        $region61: #{tpu_custom_call.1} parent=11 // pred_check
          %p590 = pneg %p349
        $region62: #{tpu_custom_call.1} parent=11 // pred_check_branch
          %592 = sbr.rel (%p590) target = $region64
        $region63: #{tpu_custom_call.1} parent=11 // pred_region
          %s594 = ssub.s32 8192, 8192
          %595 = vsyncadd [#allocation19], %s594
          %s596 = sshll.u32 [#allocation20], 4
          %s597 = int_to_ptr.vmem [resolvable:$true] %s596
          %602 = dma.hbm_to_vmem [thread:$0]  %s13, 8192, %s597, [#allocation19], 128, 128, 8
        $region64: #{tpu_custom_call.1} parent=11 // pred_fallthru
          _
        // Predicated region
        $region65: #{tpu_custom_call.1} parent=11 // pred_check
          %p603 = pneg %p370
        $region66: #{tpu_custom_call.1} parent=11 // pred_check_branch
          %605 = sbr.rel (%p603) target = $region68
        $region67: #{tpu_custom_call.1} parent=11 // pred_region
          _
        $region68: #{tpu_custom_call.1} parent=11 // pred_fallthru
          _
        // Predicated region
        $region69: #{tpu_custom_call.1} parent=11 // pred_check
          %p606 = pneg %p391
        $region70: #{tpu_custom_call.1} parent=11 // pred_check_branch
          %608 = sbr.rel (%p606) target = $region72
        $region71: #{tpu_custom_call.1} parent=11 // pred_region
          _
        $region72: #{tpu_custom_call.1} parent=11 // pred_fallthru
          _
        // Predicated region
        $region73: #{tpu_custom_call.1} parent=11 // pred_check
          %p609 = pneg %p412
        $region74: #{tpu_custom_call.1} parent=11 // pred_check_branch
          %611 = sbr.rel (%p609) target = $region76
        $region75: #{tpu_custom_call.1} parent=11 // pred_region
          %s613 = ssub.s32 4096, 4096
          %614 = vsyncadd [#allocation22], %s613
          %s615 = sshll.u32 [#allocation21], 4
          %s616 = int_to_ptr.vmem [resolvable:$true] %s615
          %621 = dma.hbm_to_vmem [thread:$0]  %s16, 4096, %s616, [#allocation22], 128, 128, 8
        $region76: #{tpu_custom_call.1} parent=11 // pred_fallthru
          _
        // Predicated region
        $region77: #{tpu_custom_call.1} parent=11 // pred_check
          %p622 = pneg %p433
        $region78: #{tpu_custom_call.1} parent=11 // pred_check_branch
          %624 = sbr.rel (%p622) target = $region80
        $region79: #{tpu_custom_call.1} parent=11 // pred_region
          _
        $region80: #{tpu_custom_call.1} parent=11 // pred_fallthru
          _
      $region12: #{tpu_custom_call.1} parent=5 // pred_fallthru
        _
      %p625 = scmp.lt.s32.totalorder %s36, 2
      // Predicated region
      $region81: #{tpu_custom_call.1} parent=5 // pred_check
        %p626 = pneg %p625
      $region82: #{tpu_custom_call.1} parent=5 // pred_check_branch
        %628 = sbr.rel (%p626) target = $region84
      $region83: #{tpu_custom_call.1} parent=5 // pred_region
        // Predicated region
        $region85: #{tpu_custom_call.1} parent=83 // pred_check
          %p629 = pneg %p70
        $region86: #{tpu_custom_call.1} parent=83 // pred_check_branch
          %631 = sbr.rel (%p629) target = $region88
        $region87: #{tpu_custom_call.1} parent=83 // pred_region
          %s632 = sand.u32 %s60, 1
          %s633 = scalar_lea.sflag [#allocation4], %s632
          %s634 = sand.u32 %s60, 1
          %s635 = smul.addr %s634, 16
          %s636 = scalar_lea.vmem [#allocation3], %s635
          %s638 = ssub.s32 256, 256
          %639 = vsyncadd %s633, %s638
          %s640 = smul.addr %s43, 2
          %s641 = sadd.s32 %s44, %s640
          %s642 = smul.addr %s641, 128
          %s643 = scalar_lea.hbm %s0, %s642
          %s644 = sshll.u32 %s636, 4
          %s645 = int_to_ptr.vmem [resolvable:$true] %s644
          %650 = dma.hbm_to_vmem [thread:$0]  %s643, 256, %s645, %s633, 128, 128, 8
        $region88: #{tpu_custom_call.1} parent=83 // pred_fallthru
          _
      $region84: #{tpu_custom_call.1} parent=5 // pred_fallthru
        _
      %p651 = scmp.le.s32.totalorder 1, %s36
      %p652 = scmp.lt.s32.totalorder %s36, 3
      %p653 = pnand %p651, %p652
      %p654 = pneg %p653
      // Predicated region
      $region89: #{tpu_custom_call.1} parent=5 // pred_check
        _
      $region90: #{tpu_custom_call.1} parent=5 // pred_check_branch
        %656 = sbr.rel (%p653) target = $region92
      $region91: #{tpu_custom_call.1} parent=5 // pred_region
        %s657 = ssub.s32 %s36, 1
        %s658 = sand.u32 %s63, 1
        %s659 = scalar_lea.sflag [#allocation4], %s658
        %s660 = sand.u32 %s63, 1
        %s661 = smul.addr %s660, 16
        %s662 = scalar_lea.vmem [#allocation3], %s661
        // Predicated region
        $region93: #{tpu_custom_call.1} parent=91 // pred_check
          %p663 = pneg %p76
        $region94: #{tpu_custom_call.1} parent=91 // pred_check_branch
          %665 = sbr.rel (%p663) target = $region96
        $region95: #{tpu_custom_call.1} parent=91 // pred_region
          %666 = dma.done %s659, 256
        $region96: #{tpu_custom_call.1} parent=91 // pred_fallthru
          _
        // Predicated region
        $region97: #{tpu_custom_call.1} parent=91 // pred_check
          %p667 = pneg %p97
        $region98: #{tpu_custom_call.1} parent=91 // pred_check_branch
          %669 = sbr.rel (%p667) target = $region100
        $region99: #{tpu_custom_call.1} parent=91 // pred_region
          %670 = dma.done [#allocation7], 128
        $region100: #{tpu_custom_call.1} parent=91 // pred_fallthru
          _
        // Predicated region
        $region101: #{tpu_custom_call.1} parent=91 // pred_check
          %p671 = pneg %p118
        $region102: #{tpu_custom_call.1} parent=91 // pred_check_branch
          %673 = sbr.rel (%p671) target = $region104
        $region103: #{tpu_custom_call.1} parent=91 // pred_region
          %674 = dma.done [#allocation7], 16
        $region104: #{tpu_custom_call.1} parent=91 // pred_fallthru
          _
        // Predicated region
        $region105: #{tpu_custom_call.1} parent=91 // pred_check
          %p675 = pneg %p139
        $region106: #{tpu_custom_call.1} parent=91 // pred_check_branch
          %677 = sbr.rel (%p675) target = $region108
        $region107: #{tpu_custom_call.1} parent=91 // pred_region
          %678 = dma.done [#allocation10], 16
        $region108: #{tpu_custom_call.1} parent=91 // pred_fallthru
          _
        // Predicated region
        $region109: #{tpu_custom_call.1} parent=91 // pred_check
          %p679 = pneg %p160
        $region110: #{tpu_custom_call.1} parent=91 // pred_check_branch
          %681 = sbr.rel (%p679) target = $region112
        $region111: #{tpu_custom_call.1} parent=91 // pred_region
          %682 = dma.done [#allocation10], 512
        $region112: #{tpu_custom_call.1} parent=91 // pred_fallthru
          _
        // Predicated region
        $region113: #{tpu_custom_call.1} parent=91 // pred_check
          %p683 = pneg %p181
        $region114: #{tpu_custom_call.1} parent=91 // pred_check_branch
          %685 = sbr.rel (%p683) target = $region116
        $region115: #{tpu_custom_call.1} parent=91 // pred_region
          %686 = dma.done [#allocation13], 16
        $region116: #{tpu_custom_call.1} parent=91 // pred_fallthru
          _
        // Predicated region
        $region117: #{tpu_custom_call.1} parent=91 // pred_check
          %p687 = pneg %p202
        $region118: #{tpu_custom_call.1} parent=91 // pred_check_branch
          %689 = sbr.rel (%p687) target = $region120
        $region119: #{tpu_custom_call.1} parent=91 // pred_region
          %690 = dma.done [#allocation13], 16
        $region120: #{tpu_custom_call.1} parent=91 // pred_fallthru
          _
        // Predicated region
        $region121: #{tpu_custom_call.1} parent=91 // pred_check
          %p691 = pneg %p223
        $region122: #{tpu_custom_call.1} parent=91 // pred_check_branch
          %693 = sbr.rel (%p691) target = $region124
        $region123: #{tpu_custom_call.1} parent=91 // pred_region
          %694 = dma.done [#allocation16], 8192
        $region124: #{tpu_custom_call.1} parent=91 // pred_fallthru
          _
        // Predicated region
        $region125: #{tpu_custom_call.1} parent=91 // pred_check
          %p695 = pneg %p286
        $region126: #{tpu_custom_call.1} parent=91 // pred_check_branch
          %697 = sbr.rel (%p695) target = $region128
        $region127: #{tpu_custom_call.1} parent=91 // pred_region
          %698 = dma.done [#allocation16], 32768
        $region128: #{tpu_custom_call.1} parent=91 // pred_fallthru
          _
        // Predicated region
        $region129: #{tpu_custom_call.1} parent=91 // pred_check
          %p699 = pneg %p328
        $region130: #{tpu_custom_call.1} parent=91 // pred_check_branch
          %701 = sbr.rel (%p699) target = $region132
        $region131: #{tpu_custom_call.1} parent=91 // pred_region
          %702 = dma.done [#allocation19], 64
        $region132: #{tpu_custom_call.1} parent=91 // pred_fallthru
          _
        // Predicated region
        $region133: #{tpu_custom_call.1} parent=91 // pred_check
          %p703 = pneg %p349
        $region134: #{tpu_custom_call.1} parent=91 // pred_check_branch
          %705 = sbr.rel (%p703) target = $region136
        $region135: #{tpu_custom_call.1} parent=91 // pred_region
          %706 = dma.done [#allocation19], 8192
        $region136: #{tpu_custom_call.1} parent=91 // pred_fallthru
          _
        // Predicated region
        $region137: #{tpu_custom_call.1} parent=91 // pred_check
          %p707 = pneg %p412
        $region138: #{tpu_custom_call.1} parent=91 // pred_check_branch
          %709 = sbr.rel (%p707) target = $region140
        $region139: #{tpu_custom_call.1} parent=91 // pred_region
          %710 = dma.done [#allocation22], 4096
        $region140: #{tpu_custom_call.1} parent=91 // pred_fallthru
          _
        %s711 = sand.u32 %s63, 1
        %s712 = scalar_lea.sflag [#allocation4], %s711
        %s713 = sand.u32 %s63, 1
        %s714 = smul.addr %s713, 16
        %s715 = scalar_lea.vmem [#allocation3], %s714
        %p716 = pneg %p76
        %p717 = pneg %p73
        %p718 = pneg %p97
        %p719 = pneg %p94
        %p720 = pneg %p118
        %p721 = pneg %p115
        %p722 = pneg %p139
        %p723 = pneg %p136
        %p724 = pneg %p160
        %p725 = pneg %p157
        %p726 = pneg %p181
        %p727 = pneg %p178
        %p728 = pneg %p202
        %p729 = pneg %p199
        %p730 = pneg %p223
        %p731 = pneg %p220
        %p732 = pneg %p244
        %p733 = pneg %p241
        %p734 = pneg %p265
        %p735 = pneg %p262
        %p736 = pneg %p286
        %p737 = pneg %p283
        %p738 = pneg %p307
        %p739 = pneg %p304
        %p740 = pneg %p328
        %p741 = pneg %p325
        %p742 = pneg %p349
        %p743 = pneg %p346
        %p744 = pneg %p370
        %p745 = pneg %p367
        %p746 = pneg %p391
        %p747 = pneg %p388
        %p748 = pneg %p412
        %p749 = pneg %p409
        %p750 = pneg %p433
        %p751 = pneg %p430
        %p752 = pneg %p459
        %p753 = pneg %p456
        %s754 = sand.u32 %s446, 1
        %s755 = scalar_lea.sflag [#allocation5], %s754
        %s756 = sand.u32 %s446, 1
        %s757 = smul.addr %s756, 2
        %s758 = scalar_lea.vmem [#allocation23], %s757
        %p760 = scmp.eq.s32.totalorder %s46, 0
        // Predicated region
        $region141: #{tpu_custom_call.1} parent=91 // pred_check
          %p761 = pneg %p760
        $region142: #{tpu_custom_call.1} parent=91 // pred_check_branch
          %763 = sbr.rel (%p761) target = $region144
        $region143: #{tpu_custom_call.1} parent=91 // pred_region
          %764 = vst [vmem:[#allocation2] sm:$0xff] -1e+30
        $region144: #{tpu_custom_call.1} parent=91 // pred_fallthru
          _
        %v765 = vld [vmem:[%s662] sm:$0xff]
        %v766 = vld [vmem:[%s662 + $0x8] sm:$0xff]
        %767 = vxpose.xlu0.b32.start [1/16] %v765, 128
        %768 = vxpose.xlu0.b32.cont [2/16] %v766, 128
        %769 = vxpose.xlu0.b32.cont [3/16] 0.0, 128
        %770 = vxpose.xlu0.b32.cont [4/16] 0.0, 128
        %771 = vxpose.xlu0.b32.cont [5/16] 0.0, 128
        %772 = vxpose.xlu0.b32.cont [6/16] 0.0, 128
        %773 = vxpose.xlu0.b32.cont [7/16] 0.0, 128
        %774 = vxpose.xlu0.b32.cont [8/16] 0.0, 128
        %775 = vxpose.xlu0.b32.cont [9/16] 0.0, 128
        %776 = vxpose.xlu0.b32.cont [10/16] 0.0, 128
        %777 = vxpose.xlu0.b32.cont [11/16] 0.0, 128
        %778 = vxpose.xlu0.b32.cont [12/16] 0.0, 128
        %779 = vxpose.xlu0.b32.cont [13/16] 0.0, 128
        %780 = vxpose.xlu0.b32.cont [14/16] 0.0, 128
        %781 = vxpose.xlu0.b32.cont [15/16] 0.0, 128
        %782 = vxpose.xlu0.b32.end [16/16] 0.0, 128
        %v783 = vpop.trf.xlu0
        %v784 = vpop.trf.xlu0
        %v785 = vpop.trf.xlu0
        %v786 = vpop.trf.xlu0
        %v787 = vpop.trf.xlu0
        %v788 = vpop.trf.xlu0
        %v789 = vpop.trf.xlu0
        %v790 = vpop.trf.xlu0
        %v791 = vpop.trf.xlu0
        %v792 = vpop.trf.xlu0
        %v793 = vpop.trf.xlu0
        %v794 = vpop.trf.xlu0
        %v795 = vpop.trf.xlu0
        %v796 = vpop.trf.xlu0
        %v797 = vpop.trf.xlu0
        %v798 = vpop.trf.xlu0
        %v799 = vpack.c.bf16 %v784, %v783
        %v800 = vpack.c.bf16 %v786, %v785
        %v801 = vld [vmem:[#allocation6] sm:$0xf]
        %v802 = vld [vmem:[#allocation6 + $0x4] sm:$0xf]
        %v805 = vunpack.c.l.b16 %v801
        %v806 = vunpack.c.l.b16 %v802
        %v807 = vpack.c.b16 %v806, %v805
        %vm809 = vcmask 130048
        %v811 = vsel %vm809, %v799, 0
        %v814 = vsel %vm809, %v800, 0
        %816 = vmatprep.subr.bf16.mxu0 0
        %817 = vmatpush1.bf16.msra.mxu0 0
        %818 = vmatprep.subr.bf16.mxu0 0
        %819 = vmatpush1.bf16.msra.mxu0 0
        %820 = vmatprep.subr.bf16.mxu0 0
        %821 = vmatpush1.bf16.msra.mxu0 0
        %822 = vmatprep.subr.bf16.mxu0 0
        %823 = vmatpush1.bf16.msra.mxu0 0
        %824 = vmatprep.subr.bf16.mxu0 0
        %825 = vmatpush1.bf16.msra.mxu0 0
        %826 = vmatprep.subr.bf16.mxu0 0
        %827 = vmatpush1.bf16.msra.mxu0 0
        %828 = vmatprep.subr.bf16.mxu0 0
        %829 = vmatpush1.bf16.msra.mxu0 0
        %830 = vmatprep.subr.bf16.mxu0 0
        %831 = vmatpush1.bf16.msra.mxu0 %v807
        %832 = vmatprep.subr.bf16.mxu0 0
        %833 = vmatpush2.bf16.msra.mxu0 0
        %834 = vmatprep.subr.bf16.mxu0 0
        %835 = vmatpush2.bf16.msra.mxu0 0
        %836 = vmatprep.subr.bf16.mxu0 0
        %837 = vmatpush2.bf16.msra.mxu0 0
        %838 = vmatprep.subr.bf16.mxu0 0
        %839 = vmatpush2.bf16.msra.mxu0 0
        %840 = vmatprep.subr.bf16.mxu0 0
        %841 = vmatpush2.bf16.msra.mxu0 0
        %842 = vmatprep.subr.bf16.mxu0 0
        %843 = vmatpush2.bf16.msra.mxu0 0
        %844 = vmatprep.subr.bf16.mxu0 0
        %845 = vmatpush2.bf16.msra.mxu0 0
        %846 = vmatprep.subr.bf16.mxu0 0
        %847 = vmatpush2.bf16.msra.mxu0 0
        %848 = vmatprep.mubr.bf16.mxu0 0
        %849 = vmatmul.mubr.bf16.gmra.mxu0 %v811
        %v850 = vpop.f32.mrf.mxu0
        %v851 = vadd.f32 0.0, %v850
        %v852 = vpop.f32.mrf.mxu0
        %v853 = vpop.f32.mrf.mxu0
        %v854 = vadd.f32 0.0, %v853
        %v855 = vpop.f32.mrf.mxu0
        %856 = vmatprep.mubr.bf16.mxu0 0
        %857 = vmatmul.mubr.bf16.gmra.mxu0 %v814
        %v858 = vpop.f32.mrf.mxu0
        %v859 = vadd.f32 0.0, %v858
        %v860 = vpop.f32.mrf.mxu0
        %v861 = vpop.f32.mrf.mxu0
        %v862 = vadd.f32 0.0, %v861
        %v863 = vpop.f32.mrf.mxu0
        %864 = vdwg.mxu0
        %v865 = vld [vmem:[#allocation8] sm:$0x1]
        %v867 = vlaneseq
        %v868 = vshrl.u32 %v867, 7
        %v869 = vsub.s32 0, %v868
        %v870 = vrot.slane %v865, %v869
        %v872 = vmul.f32 %v851, %v870
        %v873 = vmul.f32 %v854, %v870
        %v874 = vmul.f32 %v859, %v870
        %v875 = vmul.f32 %v862, %v870
        %v876 = vld [vmem:[#allocation9] sm:$0x1]
        %v878 = vlaneseq
        %v879 = vshrl.u32 %v878, 7
        %v880 = vsub.s32 0, %v879
        %v881 = vrot.slane %v876, %v880
        %v883 = vadd.f32 %v872, %v881
        %v884 = vadd.f32 %v873, %v881
        %v885 = vadd.f32 %v874, %v881
        %v886 = vadd.f32 %v875, %v881
        %v887 = vmax.f32 %v883, 0.0
        %v888 = vmax.f32 %v884, 0.0
        %v889 = vmax.f32 %v885, 0.0
        %v890 = vmax.f32 %v886, 0.0
        %v891 = vpack.c.bf16 %v888, %v887
        %v892 = vpack.c.bf16 %v890, %v889
        %v893 = vld [vmem:[#allocation11] sm:$0xf]
        %v894 = vld [vmem:[#allocation11 + $0x4] sm:$0xf]
        %v895 = vld [vmem:[#allocation11 + $0x8] sm:$0xf]
        %v896 = vld [vmem:[#allocation11 + $0xc] sm:$0xf]
        %v897 = vld [vmem:[#allocation11 + $0x10] sm:$0xf]
        %v898 = vld [vmem:[#allocation11 + $0x14] sm:$0xf]
        %v899 = vld [vmem:[#allocation11 + $0x18] sm:$0xf]
        %v900 = vld [vmem:[#allocation11 + $0x1c] sm:$0xf]
        %v909 = vunpack.c.l.b16 %v893
        %v910 = vunpack.c.l.b16 %v894
        %v911 = vunpack.c.l.b16 %v895
        %v912 = vunpack.c.l.b16 %v896
        %v913 = vunpack.c.l.b16 %v897
        %v914 = vunpack.c.l.b16 %v898
        %v915 = vunpack.c.l.b16 %v899
        %v916 = vunpack.c.l.b16 %v900
        %v917 = vpack.c.b16 %v910, %v909
        %v918 = vpack.c.b16 %v912, %v911
        %v919 = vpack.c.b16 %v914, %v913
        %v920 = vpack.c.b16 %v916, %v915
        %vm925 = vcmask 523264
        %v927 = vsel %vm925, %v891, 0
        %v930 = vsel %vm925, %v892, 0
        %932 = vmatprep.subr.bf16.mxu0 0
        %933 = vmatpush1.bf16.msra.mxu0 0
        %934 = vmatprep.subr.bf16.mxu0 0
        %935 = vmatpush1.bf16.msra.mxu0 0
        %936 = vmatprep.subr.bf16.mxu0 0
        %937 = vmatpush1.bf16.msra.mxu0 0
        %938 = vmatprep.subr.bf16.mxu0 0
        %939 = vmatpush1.bf16.msra.mxu0 0
        %940 = vmatprep.subr.bf16.mxu0 0
        %941 = vmatpush1.bf16.msra.mxu0 %v920
        %942 = vmatprep.subr.bf16.mxu0 0
        %943 = vmatpush1.bf16.msra.mxu0 %v919
        %944 = vmatprep.subr.bf16.mxu0 0
        %945 = vmatpush1.bf16.msra.mxu0 %v918
        %946 = vmatprep.subr.bf16.mxu0 0
        %947 = vmatpush1.bf16.msra.mxu0 %v917
        %948 = vmatprep.subr.bf16.mxu0 0
        %949 = vmatpush2.bf16.msra.mxu0 0
        %950 = vmatprep.subr.bf16.mxu0 0
        %951 = vmatpush2.bf16.msra.mxu0 0
        %952 = vmatprep.subr.bf16.mxu0 0
        %953 = vmatpush2.bf16.msra.mxu0 0
        %954 = vmatprep.subr.bf16.mxu0 0
        %955 = vmatpush2.bf16.msra.mxu0 0
        %956 = vmatprep.subr.bf16.mxu0 0
        %957 = vmatpush2.bf16.msra.mxu0 0
        %958 = vmatprep.subr.bf16.mxu0 0
        %959 = vmatpush2.bf16.msra.mxu0 0
        %960 = vmatprep.subr.bf16.mxu0 0
        %961 = vmatpush2.bf16.msra.mxu0 0
        %962 = vmatprep.subr.bf16.mxu0 0
        %963 = vmatpush2.bf16.msra.mxu0 0
        %964 = vmatprep.mubr.bf16.mxu0 0
        %965 = vmatmul.mubr.bf16.gmra.mxu0 %v927
        %v966 = vpop.f32.mrf.mxu0
        %v967 = vadd.f32 0.0, %v966
        %v968 = vpop.f32.mrf.mxu0
        %v969 = vpop.f32.mrf.mxu0
        %v970 = vadd.f32 0.0, %v969
        %v971 = vpop.f32.mrf.mxu0
        %972 = vmatprep.mubr.bf16.mxu0 0
        %973 = vmatmul.mubr.bf16.gmra.mxu0 %v930
        %v974 = vpop.f32.mrf.mxu0
        %v975 = vadd.f32 0.0, %v974
        %v976 = vpop.f32.mrf.mxu0
        %v977 = vpop.f32.mrf.mxu0
        %v978 = vadd.f32 0.0, %v977
        %v979 = vpop.f32.mrf.mxu0
        %980 = vdwg.mxu0
        %v981 = vld [vmem:[#allocation12] sm:$0x1]
        %v983 = vlaneseq
        %v984 = vshrl.u32 %v983, 7
        %v985 = vsub.s32 0, %v984
        %v986 = vrot.slane %v981, %v985
        %v988 = vmul.f32 %v967, %v986
        %v989 = vmul.f32 %v970, %v986
        %v990 = vmul.f32 %v975, %v986
        %v991 = vmul.f32 %v978, %v986
        %v992 = vld [vmem:[#allocation14] sm:$0x1]
        %v994 = vlaneseq
        %v995 = vshrl.u32 %v994, 7
        %v996 = vsub.s32 0, %v995
        %v997 = vrot.slane %v992, %v996
        %v999 = vadd.f32 %v988, %v997
        %v1000 = vadd.f32 %v989, %v997
        %v1001 = vadd.f32 %v990, %v997
        %v1002 = vadd.f32 %v991, %v997
        %v1003 = vmax.f32 %v999, 0.0
        %v1004 = vmax.f32 %v1000, 0.0
        %v1005 = vmax.f32 %v1001, 0.0
        %v1006 = vmax.f32 %v1002, 0.0
        %v1007 = vpack.c.bf16 %v1004, %v1003
        %v1008 = vpack.c.bf16 %v1006, %v1005
        %v1009 = vld [vmem:[#allocation15] sm:$0xff]
        %v1010 = vld [vmem:[#allocation15 + $0x8] sm:$0xff]
        %v1011 = vld [vmem:[#allocation15 + $0x10] sm:$0xff]
        %v1012 = vld [vmem:[#allocation15 + $0x18] sm:$0xff]
        %v1013 = vld [vmem:[#allocation15 + $0x20] sm:$0xff]
        %v1014 = vld [vmem:[#allocation15 + $0x28] sm:$0xff]
        %v1015 = vld [vmem:[#allocation15 + $0x30] sm:$0xff]
        %v1016 = vld [vmem:[#allocation15 + $0x38] sm:$0xff]
        %v1017 = vld [vmem:[#allocation15 + $0x40] sm:$0xff]
        %v1018 = vld [vmem:[#allocation15 + $0x48] sm:$0xff]
        %v1019 = vld [vmem:[#allocation15 + $0x50] sm:$0xff]
        %v1020 = vld [vmem:[#allocation15 + $0x58] sm:$0xff]
        %v1021 = vld [vmem:[#allocation15 + $0x60] sm:$0xff]
        %v1022 = vld [vmem:[#allocation15 + $0x68] sm:$0xff]
        %v1023 = vld [vmem:[#allocation15 + $0x70] sm:$0xff]
        %v1024 = vld [vmem:[#allocation15 + $0x78] sm:$0xff]
        %v1025 = vld [vmem:[#allocation15 + $0x80] sm:$0xff]
        %v1026 = vld [vmem:[#allocation15 + $0x88] sm:$0xff]
        %v1027 = vld [vmem:[#allocation15 + $0x90] sm:$0xff]
        %v1028 = vld [vmem:[#allocation15 + $0x98] sm:$0xff]
        %v1029 = vld [vmem:[#allocation15 + $0xa0] sm:$0xff]
        %v1030 = vld [vmem:[#allocation15 + $0xa8] sm:$0xff]
        %v1031 = vld [vmem:[#allocation15 + $0xb0] sm:$0xff]
        %v1032 = vld [vmem:[#allocation15 + $0xb8] sm:$0xff]
        %v1033 = vld [vmem:[#allocation15 + $0xc0] sm:$0xff]
        %v1034 = vld [vmem:[#allocation15 + $0xc8] sm:$0xff]
        %v1035 = vld [vmem:[#allocation15 + $0xd0] sm:$0xff]
        %v1036 = vld [vmem:[#allocation15 + $0xd8] sm:$0xff]
        %v1037 = vld [vmem:[#allocation15 + $0xe0] sm:$0xff]
        %v1038 = vld [vmem:[#allocation15 + $0xe8] sm:$0xff]
        %v1039 = vld [vmem:[#allocation15 + $0xf0] sm:$0xff]
        %v1040 = vld [vmem:[#allocation15 + $0xf8] sm:$0xff]
        %v1041 = vld [vmem:[#allocation15 + $0x100] sm:$0xff]
        %v1042 = vld [vmem:[#allocation15 + $0x108] sm:$0xff]
        %v1043 = vld [vmem:[#allocation15 + $0x110] sm:$0xff]
        %v1044 = vld [vmem:[#allocation15 + $0x118] sm:$0xff]
        %v1045 = vld [vmem:[#allocation15 + $0x120] sm:$0xff]
        %v1046 = vld [vmem:[#allocation15 + $0x128] sm:$0xff]
        %v1047 = vld [vmem:[#allocation15 + $0x130] sm:$0xff]
        %v1048 = vld [vmem:[#allocation15 + $0x138] sm:$0xff]
        %v1049 = vld [vmem:[#allocation15 + $0x140] sm:$0xff]
        %v1050 = vld [vmem:[#allocation15 + $0x148] sm:$0xff]
        %v1051 = vld [vmem:[#allocation15 + $0x150] sm:$0xff]
        %v1052 = vld [vmem:[#allocation15 + $0x158] sm:$0xff]
        %v1053 = vld [vmem:[#allocation15 + $0x160] sm:$0xff]
        %v1054 = vld [vmem:[#allocation15 + $0x168] sm:$0xff]
        %v1055 = vld [vmem:[#allocation15 + $0x170] sm:$0xff]
        %v1056 = vld [vmem:[#allocation15 + $0x178] sm:$0xff]
        %v1057 = vld [vmem:[#allocation15 + $0x180] sm:$0xff]
        %v1058 = vld [vmem:[#allocation15 + $0x188] sm:$0xff]
        %v1059 = vld [vmem:[#allocation15 + $0x190] sm:$0xff]
        %v1060 = vld [vmem:[#allocation15 + $0x198] sm:$0xff]
        %v1061 = vld [vmem:[#allocation15 + $0x1a0] sm:$0xff]
        %v1062 = vld [vmem:[#allocation15 + $0x1a8] sm:$0xff]
        %v1063 = vld [vmem:[#allocation15 + $0x1b0] sm:$0xff]
        %v1064 = vld [vmem:[#allocation15 + $0x1b8] sm:$0xff]
        %v1065 = vld [vmem:[#allocation15 + $0x1c0] sm:$0xff]
        %v1066 = vld [vmem:[#allocation15 + $0x1c8] sm:$0xff]
        %v1067 = vld [vmem:[#allocation15 + $0x1d0] sm:$0xff]
        %v1068 = vld [vmem:[#allocation15 + $0x1d8] sm:$0xff]
        %v1069 = vld [vmem:[#allocation15 + $0x1e0] sm:$0xff]
        %v1070 = vld [vmem:[#allocation15 + $0x1e8] sm:$0xff]
        %v1071 = vld [vmem:[#allocation15 + $0x1f0] sm:$0xff]
        %v1072 = vld [vmem:[#allocation15 + $0x1f8] sm:$0xff]
        %v1137 = vunpack.c.l.b16 %v1009
        %v1138 = vunpack.c.h.b16 %v1009
        %v1139 = vunpack.c.l.b16 %v1010
        %v1140 = vunpack.c.h.b16 %v1010
        %v1141 = vunpack.c.l.b16 %v1011
        %v1142 = vunpack.c.h.b16 %v1011
        %v1143 = vunpack.c.l.b16 %v1012
        %v1144 = vunpack.c.h.b16 %v1012
        %v1145 = vunpack.c.l.b16 %v1013
        %v1146 = vunpack.c.h.b16 %v1013
        %v1147 = vunpack.c.l.b16 %v1014
        %v1148 = vunpack.c.h.b16 %v1014
        %v1149 = vunpack.c.l.b16 %v1015
        %v1150 = vunpack.c.h.b16 %v1015
        %v1151 = vunpack.c.l.b16 %v1016
        %v1152 = vunpack.c.h.b16 %v1016
        %v1153 = vunpack.c.l.b16 %v1017
        %v1154 = vunpack.c.h.b16 %v1017
        %v1155 = vunpack.c.l.b16 %v1018
        %v1156 = vunpack.c.h.b16 %v1018
        %v1157 = vunpack.c.l.b16 %v1019
        %v1158 = vunpack.c.h.b16 %v1019
        %v1159 = vunpack.c.l.b16 %v1020
        %v1160 = vunpack.c.h.b16 %v1020
        %v1161 = vunpack.c.l.b16 %v1021
        %v1162 = vunpack.c.h.b16 %v1021
        %v1163 = vunpack.c.l.b16 %v1022
        %v1164 = vunpack.c.h.b16 %v1022
        %v1165 = vunpack.c.l.b16 %v1023
        %v1166 = vunpack.c.h.b16 %v1023
        %v1167 = vunpack.c.l.b16 %v1024
        %v1168 = vunpack.c.h.b16 %v1024
        %v1169 = vunpack.c.l.b16 %v1025
        %v1170 = vunpack.c.h.b16 %v1025
        %v1171 = vunpack.c.l.b16 %v1026
        %v1172 = vunpack.c.h.b16 %v1026
        %v1173 = vunpack.c.l.b16 %v1027
        %v1174 = vunpack.c.h.b16 %v1027
        %v1175 = vunpack.c.l.b16 %v1028
        %v1176 = vunpack.c.h.b16 %v1028
        %v1177 = vunpack.c.l.b16 %v1029
        %v1178 = vunpack.c.h.b16 %v1029
        %v1179 = vunpack.c.l.b16 %v1030
        %v1180 = vunpack.c.h.b16 %v1030
        %v1181 = vunpack.c.l.b16 %v1031
        %v1182 = vunpack.c.h.b16 %v1031
        %v1183 = vunpack.c.l.b16 %v1032
        %v1184 = vunpack.c.h.b16 %v1032
        %v1185 = vunpack.c.l.b16 %v1033
        %v1186 = vunpack.c.h.b16 %v1033
        %v1187 = vunpack.c.l.b16 %v1034
        %v1188 = vunpack.c.h.b16 %v1034
        %v1189 = vunpack.c.l.b16 %v1035
        %v1190 = vunpack.c.h.b16 %v1035
        %v1191 = vunpack.c.l.b16 %v1036
        %v1192 = vunpack.c.h.b16 %v1036
        %v1193 = vunpack.c.l.b16 %v1037
        %v1194 = vunpack.c.h.b16 %v1037
        %v1195 = vunpack.c.l.b16 %v1038
        %v1196 = vunpack.c.h.b16 %v1038
        %v1197 = vunpack.c.l.b16 %v1039
        %v1198 = vunpack.c.h.b16 %v1039
        %v1199 = vunpack.c.l.b16 %v1040
        %v1200 = vunpack.c.h.b16 %v1040
        %v1201 = vunpack.c.l.b16 %v1041
        %v1202 = vunpack.c.h.b16 %v1041
        %v1203 = vunpack.c.l.b16 %v1042
        %v1204 = vunpack.c.h.b16 %v1042
        %v1205 = vunpack.c.l.b16 %v1043
        %v1206 = vunpack.c.h.b16 %v1043
        %v1207 = vunpack.c.l.b16 %v1044
        %v1208 = vunpack.c.h.b16 %v1044
        %v1209 = vunpack.c.l.b16 %v1045
        %v1210 = vunpack.c.h.b16 %v1045
        %v1211 = vunpack.c.l.b16 %v1046
        %v1212 = vunpack.c.h.b16 %v1046
        %v1213 = vunpack.c.l.b16 %v1047
        %v1214 = vunpack.c.h.b16 %v1047
        %v1215 = vunpack.c.l.b16 %v1048
        %v1216 = vunpack.c.h.b16 %v1048
        %v1217 = vunpack.c.l.b16 %v1049
        %v1218 = vunpack.c.h.b16 %v1049
        %v1219 = vunpack.c.l.b16 %v1050
        %v1220 = vunpack.c.h.b16 %v1050
        %v1221 = vunpack.c.l.b16 %v1051
        %v1222 = vunpack.c.h.b16 %v1051
        %v1223 = vunpack.c.l.b16 %v1052
        %v1224 = vunpack.c.h.b16 %v1052
        %v1225 = vunpack.c.l.b16 %v1053
        %v1226 = vunpack.c.h.b16 %v1053
        %v1227 = vunpack.c.l.b16 %v1054
        %v1228 = vunpack.c.h.b16 %v1054
        %v1229 = vunpack.c.l.b16 %v1055
        %v1230 = vunpack.c.h.b16 %v1055
        %v1231 = vunpack.c.l.b16 %v1056
        %v1232 = vunpack.c.h.b16 %v1056
        %v1233 = vunpack.c.l.b16 %v1057
        %v1234 = vunpack.c.h.b16 %v1057
        %v1235 = vunpack.c.l.b16 %v1058
        %v1236 = vunpack.c.h.b16 %v1058
        %v1237 = vunpack.c.l.b16 %v1059
        %v1238 = vunpack.c.h.b16 %v1059
        %v1239 = vunpack.c.l.b16 %v1060
        %v1240 = vunpack.c.h.b16 %v1060
        %v1241 = vunpack.c.l.b16 %v1061
        %v1242 = vunpack.c.h.b16 %v1061
        %v1243 = vunpack.c.l.b16 %v1062
        %v1244 = vunpack.c.h.b16 %v1062
        %v1245 = vunpack.c.l.b16 %v1063
        %v1246 = vunpack.c.h.b16 %v1063
        %v1247 = vunpack.c.l.b16 %v1064
        %v1248 = vunpack.c.h.b16 %v1064
        %v1249 = vunpack.c.l.b16 %v1065
        %v1250 = vunpack.c.h.b16 %v1065
        %v1251 = vunpack.c.l.b16 %v1066
        %v1252 = vunpack.c.h.b16 %v1066
        %v1253 = vunpack.c.l.b16 %v1067
        %v1254 = vunpack.c.h.b16 %v1067
        %v1255 = vunpack.c.l.b16 %v1068
        %v1256 = vunpack.c.h.b16 %v1068
        %v1257 = vunpack.c.l.b16 %v1069
        %v1258 = vunpack.c.h.b16 %v1069
        %v1259 = vunpack.c.l.b16 %v1070
        %v1260 = vunpack.c.h.b16 %v1070
        %v1261 = vunpack.c.l.b16 %v1071
        %v1262 = vunpack.c.h.b16 %v1071
        %v1263 = vunpack.c.l.b16 %v1072
        %v1264 = vunpack.c.h.b16 %v1072
        %v1265 = vpack.c.b16 %v1145, %v1137
        %v1266 = vpack.c.b16 %v1146, %v1138
        %v1267 = vpack.c.b16 %v1147, %v1139
        %v1268 = vpack.c.b16 %v1148, %v1140
        %v1269 = vpack.c.b16 %v1149, %v1141
        %v1270 = vpack.c.b16 %v1150, %v1142
        %v1271 = vpack.c.b16 %v1151, %v1143
        %v1272 = vpack.c.b16 %v1152, %v1144
        %v1273 = vpack.c.b16 %v1161, %v1153
        %v1274 = vpack.c.b16 %v1162, %v1154
        %v1275 = vpack.c.b16 %v1163, %v1155
        %v1276 = vpack.c.b16 %v1164, %v1156
        %v1277 = vpack.c.b16 %v1165, %v1157
        %v1278 = vpack.c.b16 %v1166, %v1158
        %v1279 = vpack.c.b16 %v1167, %v1159
        %v1280 = vpack.c.b16 %v1168, %v1160
        %v1281 = vpack.c.b16 %v1177, %v1169
        %v1282 = vpack.c.b16 %v1178, %v1170
        %v1283 = vpack.c.b16 %v1179, %v1171
        %v1284 = vpack.c.b16 %v1180, %v1172
        %v1285 = vpack.c.b16 %v1181, %v1173
        %v1286 = vpack.c.b16 %v1182, %v1174
        %v1287 = vpack.c.b16 %v1183, %v1175
        %v1288 = vpack.c.b16 %v1184, %v1176
        %v1289 = vpack.c.b16 %v1193, %v1185
        %v1290 = vpack.c.b16 %v1194, %v1186
        %v1291 = vpack.c.b16 %v1195, %v1187
        %v1292 = vpack.c.b16 %v1196, %v1188
        %v1293 = vpack.c.b16 %v1197, %v1189
        %v1294 = vpack.c.b16 %v1198, %v1190
        %v1295 = vpack.c.b16 %v1199, %v1191
        %v1296 = vpack.c.b16 %v1200, %v1192
        %v1297 = vpack.c.b16 %v1209, %v1201
        %v1298 = vpack.c.b16 %v1210, %v1202
        %v1299 = vpack.c.b16 %v1211, %v1203
        %v1300 = vpack.c.b16 %v1212, %v1204
        %v1301 = vpack.c.b16 %v1213, %v1205
        %v1302 = vpack.c.b16 %v1214, %v1206
        %v1303 = vpack.c.b16 %v1215, %v1207
        %v1304 = vpack.c.b16 %v1216, %v1208
        %v1305 = vpack.c.b16 %v1225, %v1217
        %v1306 = vpack.c.b16 %v1226, %v1218
        %v1307 = vpack.c.b16 %v1227, %v1219
        %v1308 = vpack.c.b16 %v1228, %v1220
        %v1309 = vpack.c.b16 %v1229, %v1221
        %v1310 = vpack.c.b16 %v1230, %v1222
        %v1311 = vpack.c.b16 %v1231, %v1223
        %v1312 = vpack.c.b16 %v1232, %v1224
        %v1313 = vpack.c.b16 %v1241, %v1233
        %v1314 = vpack.c.b16 %v1242, %v1234
        %v1315 = vpack.c.b16 %v1243, %v1235
        %v1316 = vpack.c.b16 %v1244, %v1236
        %v1317 = vpack.c.b16 %v1245, %v1237
        %v1318 = vpack.c.b16 %v1246, %v1238
        %v1319 = vpack.c.b16 %v1247, %v1239
        %v1320 = vpack.c.b16 %v1248, %v1240
        %v1321 = vpack.c.b16 %v1257, %v1249
        %v1322 = vpack.c.b16 %v1258, %v1250
        %v1323 = vpack.c.b16 %v1259, %v1251
        %v1324 = vpack.c.b16 %v1260, %v1252
        %v1325 = vpack.c.b16 %v1261, %v1253
        %v1326 = vpack.c.b16 %v1262, %v1254
        %v1327 = vpack.c.b16 %v1263, %v1255
        %v1328 = vpack.c.b16 %v1264, %v1256
        %1393 = vmatprep.subr.bf16.mxu0 %v1322
        %1394 = vmatpush1.bf16.msra.mxu0 %v1321
        %1395 = vmatprep.subr.bf16.mxu0 %v1314
        %1396 = vmatpush1.bf16.msra.mxu0 %v1313
        %1397 = vmatprep.subr.bf16.mxu0 %v1306
        %1398 = vmatpush1.bf16.msra.mxu0 %v1305
        %1399 = vmatprep.subr.bf16.mxu0 %v1298
        %1400 = vmatpush1.bf16.msra.mxu0 %v1297
        %1401 = vmatprep.subr.bf16.mxu0 %v1290
        %1402 = vmatpush1.bf16.msra.mxu0 %v1289
        %1403 = vmatprep.subr.bf16.mxu0 %v1282
        %1404 = vmatpush1.bf16.msra.mxu0 %v1281
        %1405 = vmatprep.subr.bf16.mxu0 %v1274
        %1406 = vmatpush1.bf16.msra.mxu0 %v1273
        %1407 = vmatprep.subr.bf16.mxu0 %v1266
        %1408 = vmatpush1.bf16.msra.mxu0 %v1265
        %1409 = vmatprep.subr.bf16.mxu0 0
        %1410 = vmatpush2.bf16.msra.mxu0 0
        %1411 = vmatprep.subr.bf16.mxu0 0
        %1412 = vmatpush2.bf16.msra.mxu0 0
        %1413 = vmatprep.subr.bf16.mxu0 0
        %1414 = vmatpush2.bf16.msra.mxu0 0
        %1415 = vmatprep.subr.bf16.mxu0 0
        %1416 = vmatpush2.bf16.msra.mxu0 0
        %1417 = vmatprep.subr.bf16.mxu0 0
        %1418 = vmatpush2.bf16.msra.mxu0 0
        %1419 = vmatprep.subr.bf16.mxu0 0
        %1420 = vmatpush2.bf16.msra.mxu0 0
        %1421 = vmatprep.subr.bf16.mxu0 0
        %1422 = vmatpush2.bf16.msra.mxu0 0
        %1423 = vmatprep.subr.bf16.mxu0 0
        %1424 = vmatpush2.bf16.msra.mxu0 0
        %1425 = vmatprep.mubr.bf16.mxu0 0
        %1426 = vmatmul.mubr.bf16.gmra.mxu0 %v1007
        %v1427 = vpop.f32.mrf.mxu0
        %v1428 = vadd.f32 0.0, %v1427
        %v1429 = vpop.f32.mrf.mxu0
        %v1430 = vadd.f32 0.0, %v1429
        %v1431 = vpop.f32.mrf.mxu0
        %v1432 = vadd.f32 0.0, %v1431
        %v1433 = vpop.f32.mrf.mxu0
        %v1434 = vadd.f32 0.0, %v1433
        %1435 = vmatprep.mubr.bf16.mxu0 0
        %1436 = vmatmul.mubr.bf16.gmra.mxu0 %v1008
        %v1437 = vpop.f32.mrf.mxu0
        %v1438 = vadd.f32 0.0, %v1437
        %v1439 = vpop.f32.mrf.mxu0
        %v1440 = vadd.f32 0.0, %v1439
        %v1441 = vpop.f32.mrf.mxu0
        %v1442 = vadd.f32 0.0, %v1441
        %v1443 = vpop.f32.mrf.mxu0
        %v1444 = vadd.f32 0.0, %v1443
        %1445 = vdwg.mxu0
        %1446 = vmatprep.subr.bf16.mxu0 %v1324
        %1447 = vmatpush1.bf16.msra.mxu0 %v1323
        %1448 = vmatprep.subr.bf16.mxu0 %v1316
        %1449 = vmatpush1.bf16.msra.mxu0 %v1315
        %1450 = vmatprep.subr.bf16.mxu0 %v1308
        %1451 = vmatpush1.bf16.msra.mxu0 %v1307
        %1452 = vmatprep.subr.bf16.mxu0 %v1300
        %1453 = vmatpush1.bf16.msra.mxu0 %v1299
        %1454 = vmatprep.subr.bf16.mxu0 %v1292
        %1455 = vmatpush1.bf16.msra.mxu0 %v1291
        %1456 = vmatprep.subr.bf16.mxu0 %v1284
        %1457 = vmatpush1.bf16.msra.mxu0 %v1283
        %1458 = vmatprep.subr.bf16.mxu0 %v1276
        %1459 = vmatpush1.bf16.msra.mxu0 %v1275
        %1460 = vmatprep.subr.bf16.mxu0 %v1268
        %1461 = vmatpush1.bf16.msra.mxu0 %v1267
        %1462 = vmatprep.subr.bf16.mxu0 0
        %1463 = vmatpush2.bf16.msra.mxu0 0
        %1464 = vmatprep.subr.bf16.mxu0 0
        %1465 = vmatpush2.bf16.msra.mxu0 0
        %1466 = vmatprep.subr.bf16.mxu0 0
        %1467 = vmatpush2.bf16.msra.mxu0 0
        %1468 = vmatprep.subr.bf16.mxu0 0
        %1469 = vmatpush2.bf16.msra.mxu0 0
        %1470 = vmatprep.subr.bf16.mxu0 0
        %1471 = vmatpush2.bf16.msra.mxu0 0
        %1472 = vmatprep.subr.bf16.mxu0 0
        %1473 = vmatpush2.bf16.msra.mxu0 0
        %1474 = vmatprep.subr.bf16.mxu0 0
        %1475 = vmatpush2.bf16.msra.mxu0 0
        %1476 = vmatprep.subr.bf16.mxu0 0
        %1477 = vmatpush2.bf16.msra.mxu0 0
        %1478 = vmatprep.mubr.bf16.mxu0 0
        %1479 = vmatmul.mubr.bf16.gmra.mxu0 %v1007
        %v1480 = vpop.f32.mrf.mxu0
        %v1481 = vadd.f32 0.0, %v1480
        %v1482 = vpop.f32.mrf.mxu0
        %v1483 = vadd.f32 0.0, %v1482
        %v1484 = vpop.f32.mrf.mxu0
        %v1485 = vadd.f32 0.0, %v1484
        %v1486 = vpop.f32.mrf.mxu0
        %v1487 = vadd.f32 0.0, %v1486
        %1488 = vmatprep.mubr.bf16.mxu0 0
        %1489 = vmatmul.mubr.bf16.gmra.mxu0 %v1008
        %v1490 = vpop.f32.mrf.mxu0
        %v1491 = vadd.f32 0.0, %v1490
        %v1492 = vpop.f32.mrf.mxu0
        %v1493 = vadd.f32 0.0, %v1492
        %v1494 = vpop.f32.mrf.mxu0
        %v1495 = vadd.f32 0.0, %v1494
        %v1496 = vpop.f32.mrf.mxu0
        %v1497 = vadd.f32 0.0, %v1496
        %1498 = vdwg.mxu0
        %1499 = vmatprep.subr.bf16.mxu0 %v1326
        %1500 = vmatpush1.bf16.msra.mxu0 %v1325
        %1501 = vmatprep.subr.bf16.mxu0 %v1318
        %1502 = vmatpush1.bf16.msra.mxu0 %v1317
        %1503 = vmatprep.subr.bf16.mxu0 %v1310
        %1504 = vmatpush1.bf16.msra.mxu0 %v1309
        %1505 = vmatprep.subr.bf16.mxu0 %v1302
        %1506 = vmatpush1.bf16.msra.mxu0 %v1301
        %1507 = vmatprep.subr.bf16.mxu0 %v1294
        %1508 = vmatpush1.bf16.msra.mxu0 %v1293
        %1509 = vmatprep.subr.bf16.mxu0 %v1286
        %1510 = vmatpush1.bf16.msra.mxu0 %v1285
        %1511 = vmatprep.subr.bf16.mxu0 %v1278
        %1512 = vmatpush1.bf16.msra.mxu0 %v1277
        %1513 = vmatprep.subr.bf16.mxu0 %v1270
        %1514 = vmatpush1.bf16.msra.mxu0 %v1269
        %1515 = vmatprep.subr.bf16.mxu0 0
        %1516 = vmatpush2.bf16.msra.mxu0 0
        %1517 = vmatprep.subr.bf16.mxu0 0
        %1518 = vmatpush2.bf16.msra.mxu0 0
        %1519 = vmatprep.subr.bf16.mxu0 0
        %1520 = vmatpush2.bf16.msra.mxu0 0
        %1521 = vmatprep.subr.bf16.mxu0 0
        %1522 = vmatpush2.bf16.msra.mxu0 0
        %1523 = vmatprep.subr.bf16.mxu0 0
        %1524 = vmatpush2.bf16.msra.mxu0 0
        %1525 = vmatprep.subr.bf16.mxu0 0
        %1526 = vmatpush2.bf16.msra.mxu0 0
        %1527 = vmatprep.subr.bf16.mxu0 0
        %1528 = vmatpush2.bf16.msra.mxu0 0
        %1529 = vmatprep.subr.bf16.mxu0 0
        %1530 = vmatpush2.bf16.msra.mxu0 0
        %1531 = vmatprep.mubr.bf16.mxu0 0
        %1532 = vmatmul.mubr.bf16.gmra.mxu0 %v1007
        %v1533 = vpop.f32.mrf.mxu0
        %v1534 = vadd.f32 0.0, %v1533
        %v1535 = vpop.f32.mrf.mxu0
        %v1536 = vadd.f32 0.0, %v1535
        %v1537 = vpop.f32.mrf.mxu0
        %v1538 = vadd.f32 0.0, %v1537
        %v1539 = vpop.f32.mrf.mxu0
        %v1540 = vadd.f32 0.0, %v1539
        %1541 = vmatprep.mubr.bf16.mxu0 0
        %1542 = vmatmul.mubr.bf16.gmra.mxu0 %v1008
        %v1543 = vpop.f32.mrf.mxu0
        %v1544 = vadd.f32 0.0, %v1543
        %v1545 = vpop.f32.mrf.mxu0
        %v1546 = vadd.f32 0.0, %v1545
        %v1547 = vpop.f32.mrf.mxu0
        %v1548 = vadd.f32 0.0, %v1547
        %v1549 = vpop.f32.mrf.mxu0
        %v1550 = vadd.f32 0.0, %v1549
        %1551 = vdwg.mxu0
        %1552 = vmatprep.subr.bf16.mxu0 %v1328
        %1553 = vmatpush1.bf16.msra.mxu0 %v1327
        %1554 = vmatprep.subr.bf16.mxu0 %v1320
        %1555 = vmatpush1.bf16.msra.mxu0 %v1319
        %1556 = vmatprep.subr.bf16.mxu0 %v1312
        %1557 = vmatpush1.bf16.msra.mxu0 %v1311
        %1558 = vmatprep.subr.bf16.mxu0 %v1304
        %1559 = vmatpush1.bf16.msra.mxu0 %v1303
        %1560 = vmatprep.subr.bf16.mxu0 %v1296
        %1561 = vmatpush1.bf16.msra.mxu0 %v1295
        %1562 = vmatprep.subr.bf16.mxu0 %v1288
        %1563 = vmatpush1.bf16.msra.mxu0 %v1287
        %1564 = vmatprep.subr.bf16.mxu0 %v1280
        %1565 = vmatpush1.bf16.msra.mxu0 %v1279
        %1566 = vmatprep.subr.bf16.mxu0 %v1272
        %1567 = vmatpush1.bf16.msra.mxu0 %v1271
        %1568 = vmatprep.subr.bf16.mxu0 0
        %1569 = vmatpush2.bf16.msra.mxu0 0
        %1570 = vmatprep.subr.bf16.mxu0 0
        %1571 = vmatpush2.bf16.msra.mxu0 0
        %1572 = vmatprep.subr.bf16.mxu0 0
        %1573 = vmatpush2.bf16.msra.mxu0 0
        %1574 = vmatprep.subr.bf16.mxu0 0
        %1575 = vmatpush2.bf16.msra.mxu0 0
        %1576 = vmatprep.subr.bf16.mxu0 0
        %1577 = vmatpush2.bf16.msra.mxu0 0
        %1578 = vmatprep.subr.bf16.mxu0 0
        %1579 = vmatpush2.bf16.msra.mxu0 0
        %1580 = vmatprep.subr.bf16.mxu0 0
        %1581 = vmatpush2.bf16.msra.mxu0 0
        %1582 = vmatprep.subr.bf16.mxu0 0
        %1583 = vmatpush2.bf16.msra.mxu0 0
        %1584 = vmatprep.mubr.bf16.mxu0 0
        %1585 = vmatmul.mubr.bf16.gmra.mxu0 %v1007
        %v1586 = vpop.f32.mrf.mxu0
        %v1587 = vadd.f32 0.0, %v1586
        %v1588 = vpop.f32.mrf.mxu0
        %v1589 = vadd.f32 0.0, %v1588
        %v1590 = vpop.f32.mrf.mxu0
        %v1591 = vadd.f32 0.0, %v1590
        %v1592 = vpop.f32.mrf.mxu0
        %v1593 = vadd.f32 0.0, %v1592
        %1594 = vmatprep.mubr.bf16.mxu0 0
        %1595 = vmatmul.mubr.bf16.gmra.mxu0 %v1008
        %v1596 = vpop.f32.mrf.mxu0
        %v1597 = vadd.f32 0.0, %v1596
        %v1598 = vpop.f32.mrf.mxu0
        %v1599 = vadd.f32 0.0, %v1598
        %v1600 = vpop.f32.mrf.mxu0
        %v1601 = vadd.f32 0.0, %v1600
        %v1602 = vpop.f32.mrf.mxu0
        %v1603 = vadd.f32 0.0, %v1602
        %1604 = vdwg.mxu0
        %v1605 = vld [vmem:[%s8] sm:$0xff]
        %v1607 = vlaneseq
        %v1608 = vshrl.u32 %v1607, 7
        %v1609 = vsub.s32 0, %v1608
        %v1610 = vrot.slane %v1605, %v1609
        %v1611 = vlaneseq
        %v1612 = vshrl.u32 %v1611, 7
        %v1613 = vsub.s32 1, %v1612
        %v1614 = vrot.slane %v1605, %v1613
        %v1615 = vlaneseq
        %v1616 = vshrl.u32 %v1615, 7
        %v1617 = vsub.s32 2, %v1616
        %v1618 = vrot.slane %v1605, %v1617
        %v1619 = vlaneseq
        %v1620 = vshrl.u32 %v1619, 7
        %v1621 = vsub.s32 3, %v1620
        %v1622 = vrot.slane %v1605, %v1621
        %v1623 = vlaneseq
        %v1624 = vshrl.u32 %v1623, 7
        %v1625 = vsub.s32 4, %v1624
        %v1626 = vrot.slane %v1605, %v1625
        %v1627 = vlaneseq
        %v1628 = vshrl.u32 %v1627, 7
        %v1629 = vsub.s32 5, %v1628
        %v1630 = vrot.slane %v1605, %v1629
        %v1631 = vlaneseq
        %v1632 = vshrl.u32 %v1631, 7
        %v1633 = vsub.s32 6, %v1632
        %v1634 = vrot.slane %v1605, %v1633
        %v1635 = vlaneseq
        %v1636 = vshrl.u32 %v1635, 7
        %v1637 = vsub.s32 7, %v1636
        %v1638 = vrot.slane %v1605, %v1637
        %v1647 = vmul.f32 %v1428, %v1610
        %v1648 = vmul.f32 %v1430, %v1614
        %v1649 = vmul.f32 %v1481, %v1618
        %v1650 = vmul.f32 %v1483, %v1622
        %v1651 = vmul.f32 %v1534, %v1626
        %v1652 = vmul.f32 %v1536, %v1630
        %v1653 = vmul.f32 %v1587, %v1634
        %v1654 = vmul.f32 %v1589, %v1638
        %v1655 = vmul.f32 %v1432, %v1610
        %v1656 = vmul.f32 %v1434, %v1614
        %v1657 = vmul.f32 %v1485, %v1618
        %v1658 = vmul.f32 %v1487, %v1622
        %v1659 = vmul.f32 %v1538, %v1626
        %v1660 = vmul.f32 %v1540, %v1630
        %v1661 = vmul.f32 %v1591, %v1634
        %v1662 = vmul.f32 %v1593, %v1638
        %v1663 = vmul.f32 %v1438, %v1610
        %v1664 = vmul.f32 %v1440, %v1614
        %v1665 = vmul.f32 %v1491, %v1618
        %v1666 = vmul.f32 %v1493, %v1622
        %v1667 = vmul.f32 %v1544, %v1626
        %v1668 = vmul.f32 %v1546, %v1630
        %v1669 = vmul.f32 %v1597, %v1634
        %v1670 = vmul.f32 %v1599, %v1638
        %v1671 = vmul.f32 %v1442, %v1610
        %v1672 = vmul.f32 %v1444, %v1614
        %v1673 = vmul.f32 %v1495, %v1618
        %v1674 = vmul.f32 %v1497, %v1622
        %v1675 = vmul.f32 %v1548, %v1626
        %v1676 = vmul.f32 %v1550, %v1630
        %v1677 = vmul.f32 %v1601, %v1634
        %v1678 = vmul.f32 %v1603, %v1638
        %v1679 = vld [vmem:[%s9] sm:$0xff]
        %v1681 = vlaneseq
        %v1682 = vshrl.u32 %v1681, 7
        %v1683 = vsub.s32 0, %v1682
        %v1684 = vrot.slane %v1679, %v1683
        %v1685 = vlaneseq
        %v1686 = vshrl.u32 %v1685, 7
        %v1687 = vsub.s32 1, %v1686
        %v1688 = vrot.slane %v1679, %v1687
        %v1689 = vlaneseq
        %v1690 = vshrl.u32 %v1689, 7
        %v1691 = vsub.s32 2, %v1690
        %v1692 = vrot.slane %v1679, %v1691
        %v1693 = vlaneseq
        %v1694 = vshrl.u32 %v1693, 7
        %v1695 = vsub.s32 3, %v1694
        %v1696 = vrot.slane %v1679, %v1695
        %v1697 = vlaneseq
        %v1698 = vshrl.u32 %v1697, 7
        %v1699 = vsub.s32 4, %v1698
        %v1700 = vrot.slane %v1679, %v1699
        %v1701 = vlaneseq
        %v1702 = vshrl.u32 %v1701, 7
        %v1703 = vsub.s32 5, %v1702
        %v1704 = vrot.slane %v1679, %v1703
        %v1705 = vlaneseq
        %v1706 = vshrl.u32 %v1705, 7
        %v1707 = vsub.s32 6, %v1706
        %v1708 = vrot.slane %v1679, %v1707
        %v1709 = vlaneseq
        %v1710 = vshrl.u32 %v1709, 7
        %v1711 = vsub.s32 7, %v1710
        %v1712 = vrot.slane %v1679, %v1711
        %v1721 = vadd.f32 %v1647, %v1684
        %v1722 = vadd.f32 %v1648, %v1688
        %v1723 = vadd.f32 %v1649, %v1692
        %v1724 = vadd.f32 %v1650, %v1696
        %v1725 = vadd.f32 %v1651, %v1700
        %v1726 = vadd.f32 %v1652, %v1704
        %v1727 = vadd.f32 %v1653, %v1708
        %v1728 = vadd.f32 %v1654, %v1712
        %v1729 = vadd.f32 %v1655, %v1684
        %v1730 = vadd.f32 %v1656, %v1688
        %v1731 = vadd.f32 %v1657, %v1692
        %v1732 = vadd.f32 %v1658, %v1696
        %v1733 = vadd.f32 %v1659, %v1700
        %v1734 = vadd.f32 %v1660, %v1704
        %v1735 = vadd.f32 %v1661, %v1708
        %v1736 = vadd.f32 %v1662, %v1712
        %v1737 = vadd.f32 %v1663, %v1684
        %v1738 = vadd.f32 %v1664, %v1688
        %v1739 = vadd.f32 %v1665, %v1692
        %v1740 = vadd.f32 %v1666, %v1696
        %v1741 = vadd.f32 %v1667, %v1700
        %v1742 = vadd.f32 %v1668, %v1704
        %v1743 = vadd.f32 %v1669, %v1708
        %v1744 = vadd.f32 %v1670, %v1712
        %v1745 = vadd.f32 %v1671, %v1684
        %v1746 = vadd.f32 %v1672, %v1688
        %v1747 = vadd.f32 %v1673, %v1692
        %v1748 = vadd.f32 %v1674, %v1696
        %v1749 = vadd.f32 %v1675, %v1700
        %v1750 = vadd.f32 %v1676, %v1704
        %v1751 = vadd.f32 %v1677, %v1708
        %v1752 = vadd.f32 %v1678, %v1712
        %v1753 = vmax.f32 %v1721, 0.0
        %v1754 = vmax.f32 %v1722, 0.0
        %v1755 = vmax.f32 %v1723, 0.0
        %v1756 = vmax.f32 %v1724, 0.0
        %v1757 = vmax.f32 %v1725, 0.0
        %v1758 = vmax.f32 %v1726, 0.0
        %v1759 = vmax.f32 %v1727, 0.0
        %v1760 = vmax.f32 %v1728, 0.0
        %v1761 = vmax.f32 %v1729, 0.0
        %v1762 = vmax.f32 %v1730, 0.0
        %v1763 = vmax.f32 %v1731, 0.0
        %v1764 = vmax.f32 %v1732, 0.0
        %v1765 = vmax.f32 %v1733, 0.0
        %v1766 = vmax.f32 %v1734, 0.0
        %v1767 = vmax.f32 %v1735, 0.0
        %v1768 = vmax.f32 %v1736, 0.0
        %v1769 = vmax.f32 %v1737, 0.0
        %v1770 = vmax.f32 %v1738, 0.0
        %v1771 = vmax.f32 %v1739, 0.0
        %v1772 = vmax.f32 %v1740, 0.0
        %v1773 = vmax.f32 %v1741, 0.0
        %v1774 = vmax.f32 %v1742, 0.0
        %v1775 = vmax.f32 %v1743, 0.0
        %v1776 = vmax.f32 %v1744, 0.0
        %v1777 = vmax.f32 %v1745, 0.0
        %v1778 = vmax.f32 %v1746, 0.0
        %v1779 = vmax.f32 %v1747, 0.0
        %v1780 = vmax.f32 %v1748, 0.0
        %v1781 = vmax.f32 %v1749, 0.0
        %v1782 = vmax.f32 %v1750, 0.0
        %v1783 = vmax.f32 %v1751, 0.0
        %v1784 = vmax.f32 %v1752, 0.0
        %v1785 = vld [vmem:[#allocation2] sm:$0xff]
        %v1786 = vmax.f32 %v1753, %v1761
        %v1787 = vmax.f32 %v1786, %v1769
        %v1788 = vmax.f32 %v1787, %v1777
        %v1789 = vrot.slane %v1788, 4
        %v1790 = vmax.f32 %v1788, %v1789
        %v1791 = vrot.slane %v1790, 2
        %v1792 = vmax.f32 %v1790, %v1791
        %v1793 = vrot.slane %v1792, 1
        %v1794 = vmax.f32 %v1792, %v1793
        %v1795 = vmax.f32 %v1754, %v1762
        %v1796 = vmax.f32 %v1795, %v1770
        %v1797 = vmax.f32 %v1796, %v1778
        %v1798 = vrot.slane %v1797, 4
        %v1799 = vmax.f32 %v1797, %v1798
        %v1800 = vrot.slane %v1799, 2
        %v1801 = vmax.f32 %v1799, %v1800
        %v1802 = vrot.slane %v1801, 1
        %v1803 = vmax.f32 %v1801, %v1802
        %v1804 = vmax.f32 %v1755, %v1763
        %v1805 = vmax.f32 %v1804, %v1771
        %v1806 = vmax.f32 %v1805, %v1779
        %v1807 = vrot.slane %v1806, 4
        %v1808 = vmax.f32 %v1806, %v1807
        %v1809 = vrot.slane %v1808, 2
        %v1810 = vmax.f32 %v1808, %v1809
        %v1811 = vrot.slane %v1810, 1
        %v1812 = vmax.f32 %v1810, %v1811
        %v1813 = vmax.f32 %v1756, %v1764
        %v1814 = vmax.f32 %v1813, %v1772
        %v1815 = vmax.f32 %v1814, %v1780
        %v1816 = vrot.slane %v1815, 4
        %v1817 = vmax.f32 %v1815, %v1816
        %v1818 = vrot.slane %v1817, 2
        %v1819 = vmax.f32 %v1817, %v1818
        %v1820 = vrot.slane %v1819, 1
        %v1821 = vmax.f32 %v1819, %v1820
        %v1822 = vmax.f32 %v1757, %v1765
        %v1823 = vmax.f32 %v1822, %v1773
        %v1824 = vmax.f32 %v1823, %v1781
        %v1825 = vrot.slane %v1824, 4
        %v1826 = vmax.f32 %v1824, %v1825
        %v1827 = vrot.slane %v1826, 2
        %v1828 = vmax.f32 %v1826, %v1827
        %v1829 = vrot.slane %v1828, 1
        %v1830 = vmax.f32 %v1828, %v1829
        %v1831 = vmax.f32 %v1758, %v1766
        %v1832 = vmax.f32 %v1831, %v1774
        %v1833 = vmax.f32 %v1832, %v1782
        %v1834 = vrot.slane %v1833, 4
        %v1835 = vmax.f32 %v1833, %v1834
        %v1836 = vrot.slane %v1835, 2
        %v1837 = vmax.f32 %v1835, %v1836
        %v1838 = vrot.slane %v1837, 1
        %v1839 = vmax.f32 %v1837, %v1838
        %v1840 = vmax.f32 %v1759, %v1767
        %v1841 = vmax.f32 %v1840, %v1775
        %v1842 = vmax.f32 %v1841, %v1783
        %v1843 = vrot.slane %v1842, 4
        %v1844 = vmax.f32 %v1842, %v1843
        %v1845 = vrot.slane %v1844, 2
        %v1846 = vmax.f32 %v1844, %v1845
        %v1847 = vrot.slane %v1846, 1
        %v1848 = vmax.f32 %v1846, %v1847
        %v1849 = vmax.f32 %v1760, %v1768
        %v1850 = vmax.f32 %v1849, %v1776
        %v1851 = vmax.f32 %v1850, %v1784
        %v1852 = vrot.slane %v1851, 4
        %v1853 = vmax.f32 %v1851, %v1852
        %v1854 = vrot.slane %v1853, 2
        %v1855 = vmax.f32 %v1853, %v1854
        %v1856 = vrot.slane %v1855, 1
        %v1857 = vmax.f32 %v1855, %v1856
        %v1866 = vcombine.low %v1794, %v1803
        %v1867 = vcombine.low %v1812, %v1821
        %v1868 = vcombine.low %v1830, %v1839
        %v1869 = vcombine.low %v1848, %v1857
        %v1871 = vunpack.c.l.s4 1966171168
        %v1872 = vunpack.c.0.s8 %v1871
        %v1873 = vlaneseq
        %v1874 = vshrl.u32 %v1873, 7
        %v1875 = vsub.s32 %v1872, %v1874
        %v1876 = vrot.slane %v1866, %v1875
        %v1878 = vunpack.c.l.s4 1966171168
        %v1879 = vunpack.c.0.s8 %v1878
        %v1880 = vlaneseq
        %v1881 = vshrl.u32 %v1880, 7
        %v1882 = vsub.s32 %v1879, %v1881
        %v1883 = vrot.slane %v1867, %v1882
        %v1885 = vunpack.c.l.s4 1966171168
        %v1886 = vunpack.c.0.s8 %v1885
        %v1887 = vlaneseq
        %v1888 = vshrl.u32 %v1887, 7
        %v1889 = vsub.s32 %v1886, %v1888
        %v1890 = vrot.slane %v1868, %v1889
        %v1892 = vunpack.c.l.s4 1966171168
        %v1893 = vunpack.c.0.s8 %v1892
        %v1894 = vlaneseq
        %v1895 = vshrl.u32 %v1894, 7
        %v1896 = vsub.s32 %v1893, %v1895
        %v1897 = vrot.slane %v1869, %v1896
        %v1898 = vcombine.low %v1876, %v1883
        %v1899 = vcombine.low %v1890, %v1897
        %v1901 = vunpack.c.l.s4 1966171168
        %v1902 = vunpack.c.0.s8 %v1901
        %v1903 = vlaneseq
        %v1904 = vshrl.u32 %v1903, 7
        %v1905 = vsub.s32 %v1902, %v1904
        %v1906 = vrot.slane %v1898, %v1905
        %v1908 = vunpack.c.l.s4 1966171168
        %v1909 = vunpack.c.0.s8 %v1908
        %v1910 = vlaneseq
        %v1911 = vshrl.u32 %v1910, 7
        %v1912 = vsub.s32 %v1909, %v1911
        %v1913 = vrot.slane %v1899, %v1912
        %v1914 = vcombine.low %v1906, %v1913
        %v1916 = vmax.f32 %v1785, %v1914
        %1917 = vst [vmem:[#allocation2] sm:$0xff] %v1916
        // Predicated region
        $region145: #{tpu_custom_call.1} parent=91 // pred_check
          %p1918 = pneg %p760
        $region146: #{tpu_custom_call.1} parent=91 // pred_check_branch
          %1920 = sbr.rel (%p1918) target = $region148
        $region147: #{tpu_custom_call.1} parent=91 // pred_region
          %v1921 = vld [vmem:[#allocation2] sm:$0xff]
          %v1923 = vlaneseq
          %v1924 = vshrl.u32 %v1923, 7
          %v1925 = vsub.s32 0, %v1924
          %v1926 = vrot.slane %v1921, %v1925
          %v1927 = vlaneseq
          %v1928 = vshrl.u32 %v1927, 7
          %v1929 = vsub.s32 1, %v1928
          %v1930 = vrot.slane %v1921, %v1929
          %v1931 = vlaneseq
          %v1932 = vshrl.u32 %v1931, 7
          %v1933 = vsub.s32 2, %v1932
          %v1934 = vrot.slane %v1921, %v1933
          %v1935 = vlaneseq
          %v1936 = vshrl.u32 %v1935, 7
          %v1937 = vsub.s32 3, %v1936
          %v1938 = vrot.slane %v1921, %v1937
          %v1939 = vlaneseq
          %v1940 = vshrl.u32 %v1939, 7
          %v1941 = vsub.s32 4, %v1940
          %v1942 = vrot.slane %v1921, %v1941
          %v1943 = vlaneseq
          %v1944 = vshrl.u32 %v1943, 7
          %v1945 = vsub.s32 5, %v1944
          %v1946 = vrot.slane %v1921, %v1945
          %v1947 = vlaneseq
          %v1948 = vshrl.u32 %v1947, 7
          %v1949 = vsub.s32 6, %v1948
          %v1950 = vrot.slane %v1921, %v1949
          %v1951 = vlaneseq
          %v1952 = vshrl.u32 %v1951, 7
          %v1953 = vsub.s32 7, %v1952
          %v1954 = vrot.slane %v1921, %v1953
          %v1963 = vpack.c.bf16 %v1926, %v1926
          %v1964 = vpack.c.bf16 %v1930, %v1930
          %v1965 = vpack.c.bf16 %v1934, %v1934
          %v1966 = vpack.c.bf16 %v1938, %v1938
          %v1967 = vpack.c.bf16 %v1942, %v1942
          %v1968 = vpack.c.bf16 %v1946, %v1946
          %v1969 = vpack.c.bf16 %v1950, %v1950
          %v1970 = vpack.c.bf16 %v1954, %v1954
          %v1971 = vld [vmem:[#allocation17] sm:$0xff]
          %v1972 = vld [vmem:[#allocation17 + $0x8] sm:$0xff]
          %v1973 = vld [vmem:[#allocation17 + $0x10] sm:$0xff]
          %v1974 = vld [vmem:[#allocation17 + $0x18] sm:$0xff]
          %v1975 = vld [vmem:[#allocation17 + $0x20] sm:$0xff]
          %v1976 = vld [vmem:[#allocation17 + $0x28] sm:$0xff]
          %v1977 = vld [vmem:[#allocation17 + $0x30] sm:$0xff]
          %v1978 = vld [vmem:[#allocation17 + $0x38] sm:$0xff]
          %v1979 = vld [vmem:[#allocation17 + $0x40] sm:$0xff]
          %v1980 = vld [vmem:[#allocation17 + $0x48] sm:$0xff]
          %v1981 = vld [vmem:[#allocation17 + $0x50] sm:$0xff]
          %v1982 = vld [vmem:[#allocation17 + $0x58] sm:$0xff]
          %v1983 = vld [vmem:[#allocation17 + $0x60] sm:$0xff]
          %v1984 = vld [vmem:[#allocation17 + $0x68] sm:$0xff]
          %v1985 = vld [vmem:[#allocation17 + $0x70] sm:$0xff]
          %v1986 = vld [vmem:[#allocation17 + $0x78] sm:$0xff]
          %v1987 = vld [vmem:[#allocation17 + $0x80] sm:$0xff]
          %v1988 = vld [vmem:[#allocation17 + $0x88] sm:$0xff]
          %v1989 = vld [vmem:[#allocation17 + $0x90] sm:$0xff]
          %v1990 = vld [vmem:[#allocation17 + $0x98] sm:$0xff]
          %v1991 = vld [vmem:[#allocation17 + $0xa0] sm:$0xff]
          %v1992 = vld [vmem:[#allocation17 + $0xa8] sm:$0xff]
          %v1993 = vld [vmem:[#allocation17 + $0xb0] sm:$0xff]
          %v1994 = vld [vmem:[#allocation17 + $0xb8] sm:$0xff]
          %v1995 = vld [vmem:[#allocation17 + $0xc0] sm:$0xff]
          %v1996 = vld [vmem:[#allocation17 + $0xc8] sm:$0xff]
          %v1997 = vld [vmem:[#allocation17 + $0xd0] sm:$0xff]
          %v1998 = vld [vmem:[#allocation17 + $0xd8] sm:$0xff]
          %v1999 = vld [vmem:[#allocation17 + $0xe0] sm:$0xff]
          %v2000 = vld [vmem:[#allocation17 + $0xe8] sm:$0xff]
          %v2001 = vld [vmem:[#allocation17 + $0xf0] sm:$0xff]
          %v2002 = vld [vmem:[#allocation17 + $0xf8] sm:$0xff]
          %v2003 = vld [vmem:[#allocation17 + $0x100] sm:$0xff]
          %v2004 = vld [vmem:[#allocation17 + $0x108] sm:$0xff]
          %v2005 = vld [vmem:[#allocation17 + $0x110] sm:$0xff]
          %v2006 = vld [vmem:[#allocation17 + $0x118] sm:$0xff]
          %v2007 = vld [vmem:[#allocation17 + $0x120] sm:$0xff]
          %v2008 = vld [vmem:[#allocation17 + $0x128] sm:$0xff]
          %v2009 = vld [vmem:[#allocation17 + $0x130] sm:$0xff]
          %v2010 = vld [vmem:[#allocation17 + $0x138] sm:$0xff]
          %v2011 = vld [vmem:[#allocation17 + $0x140] sm:$0xff]
          %v2012 = vld [vmem:[#allocation17 + $0x148] sm:$0xff]
          %v2013 = vld [vmem:[#allocation17 + $0x150] sm:$0xff]
          %v2014 = vld [vmem:[#allocation17 + $0x158] sm:$0xff]
          %v2015 = vld [vmem:[#allocation17 + $0x160] sm:$0xff]
          %v2016 = vld [vmem:[#allocation17 + $0x168] sm:$0xff]
          %v2017 = vld [vmem:[#allocation17 + $0x170] sm:$0xff]
          %v2018 = vld [vmem:[#allocation17 + $0x178] sm:$0xff]
          %v2019 = vld [vmem:[#allocation17 + $0x180] sm:$0xff]
          %v2020 = vld [vmem:[#allocation17 + $0x188] sm:$0xff]
          %v2021 = vld [vmem:[#allocation17 + $0x190] sm:$0xff]
          %v2022 = vld [vmem:[#allocation17 + $0x198] sm:$0xff]
          %v2023 = vld [vmem:[#allocation17 + $0x1a0] sm:$0xff]
          %v2024 = vld [vmem:[#allocation17 + $0x1a8] sm:$0xff]
          %v2025 = vld [vmem:[#allocation17 + $0x1b0] sm:$0xff]
          %v2026 = vld [vmem:[#allocation17 + $0x1b8] sm:$0xff]
          %v2027 = vld [vmem:[#allocation17 + $0x1c0] sm:$0xff]
          %v2028 = vld [vmem:[#allocation17 + $0x1c8] sm:$0xff]
          %v2029 = vld [vmem:[#allocation17 + $0x1d0] sm:$0xff]
          %v2030 = vld [vmem:[#allocation17 + $0x1d8] sm:$0xff]
          %v2031 = vld [vmem:[#allocation17 + $0x1e0] sm:$0xff]
          %v2032 = vld [vmem:[#allocation17 + $0x1e8] sm:$0xff]
          %v2033 = vld [vmem:[#allocation17 + $0x1f0] sm:$0xff]
          %v2034 = vld [vmem:[#allocation17 + $0x1f8] sm:$0xff]
          %v2035 = vld [vmem:[#allocation17 + $0x200] sm:$0xff]
          %v2036 = vld [vmem:[#allocation17 + $0x208] sm:$0xff]
          %v2037 = vld [vmem:[#allocation17 + $0x210] sm:$0xff]
          %v2038 = vld [vmem:[#allocation17 + $0x218] sm:$0xff]
          %v2039 = vld [vmem:[#allocation17 + $0x220] sm:$0xff]
          %v2040 = vld [vmem:[#allocation17 + $0x228] sm:$0xff]
          %v2041 = vld [vmem:[#allocation17 + $0x230] sm:$0xff]
          %v2042 = vld [vmem:[#allocation17 + $0x238] sm:$0xff]
          %v2043 = vld [vmem:[#allocation17 + $0x240] sm:$0xff]
          %v2044 = vld [vmem:[#allocation17 + $0x248] sm:$0xff]
          %v2045 = vld [vmem:[#allocation17 + $0x250] sm:$0xff]
          %v2046 = vld [vmem:[#allocation17 + $0x258] sm:$0xff]
          %v2047 = vld [vmem:[#allocation17 + $0x260] sm:$0xff]
          %v2048 = vld [vmem:[#allocation17 + $0x268] sm:$0xff]
          %v2049 = vld [vmem:[#allocation17 + $0x270] sm:$0xff]
          %v2050 = vld [vmem:[#allocation17 + $0x278] sm:$0xff]
          %v2051 = vld [vmem:[#allocation17 + $0x280] sm:$0xff]
          %v2052 = vld [vmem:[#allocation17 + $0x288] sm:$0xff]
          %v2053 = vld [vmem:[#allocation17 + $0x290] sm:$0xff]
          %v2054 = vld [vmem:[#allocation17 + $0x298] sm:$0xff]
          %v2055 = vld [vmem:[#allocation17 + $0x2a0] sm:$0xff]
          %v2056 = vld [vmem:[#allocation17 + $0x2a8] sm:$0xff]
          %v2057 = vld [vmem:[#allocation17 + $0x2b0] sm:$0xff]
          %v2058 = vld [vmem:[#allocation17 + $0x2b8] sm:$0xff]
          %v2059 = vld [vmem:[#allocation17 + $0x2c0] sm:$0xff]
          %v2060 = vld [vmem:[#allocation17 + $0x2c8] sm:$0xff]
          %v2061 = vld [vmem:[#allocation17 + $0x2d0] sm:$0xff]
          %v2062 = vld [vmem:[#allocation17 + $0x2d8] sm:$0xff]
          %v2063 = vld [vmem:[#allocation17 + $0x2e0] sm:$0xff]
          %v2064 = vld [vmem:[#allocation17 + $0x2e8] sm:$0xff]
          %v2065 = vld [vmem:[#allocation17 + $0x2f0] sm:$0xff]
          %v2066 = vld [vmem:[#allocation17 + $0x2f8] sm:$0xff]
          %v2067 = vld [vmem:[#allocation17 + $0x300] sm:$0xff]
          %v2068 = vld [vmem:[#allocation17 + $0x308] sm:$0xff]
          %v2069 = vld [vmem:[#allocation17 + $0x310] sm:$0xff]
          %v2070 = vld [vmem:[#allocation17 + $0x318] sm:$0xff]
          %v2071 = vld [vmem:[#allocation17 + $0x320] sm:$0xff]
          %v2072 = vld [vmem:[#allocation17 + $0x328] sm:$0xff]
          %v2073 = vld [vmem:[#allocation17 + $0x330] sm:$0xff]
          %v2074 = vld [vmem:[#allocation17 + $0x338] sm:$0xff]
          %v2075 = vld [vmem:[#allocation17 + $0x340] sm:$0xff]
          %v2076 = vld [vmem:[#allocation17 + $0x348] sm:$0xff]
          %v2077 = vld [vmem:[#allocation17 + $0x350] sm:$0xff]
          %v2078 = vld [vmem:[#allocation17 + $0x358] sm:$0xff]
          %v2079 = vld [vmem:[#allocation17 + $0x360] sm:$0xff]
          %v2080 = vld [vmem:[#allocation17 + $0x368] sm:$0xff]
          %v2081 = vld [vmem:[#allocation17 + $0x370] sm:$0xff]
          %v2082 = vld [vmem:[#allocation17 + $0x378] sm:$0xff]
          %v2083 = vld [vmem:[#allocation17 + $0x380] sm:$0xff]
          %v2084 = vld [vmem:[#allocation17 + $0x388] sm:$0xff]
          %v2085 = vld [vmem:[#allocation17 + $0x390] sm:$0xff]
          %v2086 = vld [vmem:[#allocation17 + $0x398] sm:$0xff]
          %v2087 = vld [vmem:[#allocation17 + $0x3a0] sm:$0xff]
          %v2088 = vld [vmem:[#allocation17 + $0x3a8] sm:$0xff]
          %v2089 = vld [vmem:[#allocation17 + $0x3b0] sm:$0xff]
          %v2090 = vld [vmem:[#allocation17 + $0x3b8] sm:$0xff]
          %v2091 = vld [vmem:[#allocation17 + $0x3c0] sm:$0xff]
          %v2092 = vld [vmem:[#allocation17 + $0x3c8] sm:$0xff]
          %v2093 = vld [vmem:[#allocation17 + $0x3d0] sm:$0xff]
          %v2094 = vld [vmem:[#allocation17 + $0x3d8] sm:$0xff]
          %v2095 = vld [vmem:[#allocation17 + $0x3e0] sm:$0xff]
          %v2096 = vld [vmem:[#allocation17 + $0x3e8] sm:$0xff]
          %v2097 = vld [vmem:[#allocation17 + $0x3f0] sm:$0xff]
          %v2098 = vld [vmem:[#allocation17 + $0x3f8] sm:$0xff]
          %v2099 = vld [vmem:[#allocation17 + $0x400] sm:$0xff]
          %v2100 = vld [vmem:[#allocation17 + $0x408] sm:$0xff]
          %v2101 = vld [vmem:[#allocation17 + $0x410] sm:$0xff]
          %v2102 = vld [vmem:[#allocation17 + $0x418] sm:$0xff]
          %v2103 = vld [vmem:[#allocation17 + $0x420] sm:$0xff]
          %v2104 = vld [vmem:[#allocation17 + $0x428] sm:$0xff]
          %v2105 = vld [vmem:[#allocation17 + $0x430] sm:$0xff]
          %v2106 = vld [vmem:[#allocation17 + $0x438] sm:$0xff]
          %v2107 = vld [vmem:[#allocation17 + $0x440] sm:$0xff]
          %v2108 = vld [vmem:[#allocation17 + $0x448] sm:$0xff]
          %v2109 = vld [vmem:[#allocation17 + $0x450] sm:$0xff]
          %v2110 = vld [vmem:[#allocation17 + $0x458] sm:$0xff]
          %v2111 = vld [vmem:[#allocation17 + $0x460] sm:$0xff]
          %v2112 = vld [vmem:[#allocation17 + $0x468] sm:$0xff]
          %v2113 = vld [vmem:[#allocation17 + $0x470] sm:$0xff]
          %v2114 = vld [vmem:[#allocation17 + $0x478] sm:$0xff]
          %v2115 = vld [vmem:[#allocation17 + $0x480] sm:$0xff]
          %v2116 = vld [vmem:[#allocation17 + $0x488] sm:$0xff]
          %v2117 = vld [vmem:[#allocation17 + $0x490] sm:$0xff]
          %v2118 = vld [vmem:[#allocation17 + $0x498] sm:$0xff]
          %v2119 = vld [vmem:[#allocation17 + $0x4a0] sm:$0xff]
          %v2120 = vld [vmem:[#allocation17 + $0x4a8] sm:$0xff]
          %v2121 = vld [vmem:[#allocation17 + $0x4b0] sm:$0xff]
          %v2122 = vld [vmem:[#allocation17 + $0x4b8] sm:$0xff]
          %v2123 = vld [vmem:[#allocation17 + $0x4c0] sm:$0xff]
          %v2124 = vld [vmem:[#allocation17 + $0x4c8] sm:$0xff]
          %v2125 = vld [vmem:[#allocation17 + $0x4d0] sm:$0xff]
          %v2126 = vld [vmem:[#allocation17 + $0x4d8] sm:$0xff]
          %v2127 = vld [vmem:[#allocation17 + $0x4e0] sm:$0xff]
          %v2128 = vld [vmem:[#allocation17 + $0x4e8] sm:$0xff]
          %v2129 = vld [vmem:[#allocation17 + $0x4f0] sm:$0xff]
          %v2130 = vld [vmem:[#allocation17 + $0x4f8] sm:$0xff]
          %v2131 = vld [vmem:[#allocation17 + $0x500] sm:$0xff]
          %v2132 = vld [vmem:[#allocation17 + $0x508] sm:$0xff]
          %v2133 = vld [vmem:[#allocation17 + $0x510] sm:$0xff]
          %v2134 = vld [vmem:[#allocation17 + $0x518] sm:$0xff]
          %v2135 = vld [vmem:[#allocation17 + $0x520] sm:$0xff]
          %v2136 = vld [vmem:[#allocation17 + $0x528] sm:$0xff]
          %v2137 = vld [vmem:[#allocation17 + $0x530] sm:$0xff]
          %v2138 = vld [vmem:[#allocation17 + $0x538] sm:$0xff]
          %v2139 = vld [vmem:[#allocation17 + $0x540] sm:$0xff]
          %v2140 = vld [vmem:[#allocation17 + $0x548] sm:$0xff]
          %v2141 = vld [vmem:[#allocation17 + $0x550] sm:$0xff]
          %v2142 = vld [vmem:[#allocation17 + $0x558] sm:$0xff]
          %v2143 = vld [vmem:[#allocation17 + $0x560] sm:$0xff]
          %v2144 = vld [vmem:[#allocation17 + $0x568] sm:$0xff]
          %v2145 = vld [vmem:[#allocation17 + $0x570] sm:$0xff]
          %v2146 = vld [vmem:[#allocation17 + $0x578] sm:$0xff]
          %v2147 = vld [vmem:[#allocation17 + $0x580] sm:$0xff]
          %v2148 = vld [vmem:[#allocation17 + $0x588] sm:$0xff]
          %v2149 = vld [vmem:[#allocation17 + $0x590] sm:$0xff]
          %v2150 = vld [vmem:[#allocation17 + $0x598] sm:$0xff]
          %v2151 = vld [vmem:[#allocation17 + $0x5a0] sm:$0xff]
          %v2152 = vld [vmem:[#allocation17 + $0x5a8] sm:$0xff]
          %v2153 = vld [vmem:[#allocation17 + $0x5b0] sm:$0xff]
          %v2154 = vld [vmem:[#allocation17 + $0x5b8] sm:$0xff]
          %v2155 = vld [vmem:[#allocation17 + $0x5c0] sm:$0xff]
          %v2156 = vld [vmem:[#allocation17 + $0x5c8] sm:$0xff]
          %v2157 = vld [vmem:[#allocation17 + $0x5d0] sm:$0xff]
          %v2158 = vld [vmem:[#allocation17 + $0x5d8] sm:$0xff]
          %v2159 = vld [vmem:[#allocation17 + $0x5e0] sm:$0xff]
          %v2160 = vld [vmem:[#allocation17 + $0x5e8] sm:$0xff]
          %v2161 = vld [vmem:[#allocation17 + $0x5f0] sm:$0xff]
          %v2162 = vld [vmem:[#allocation17 + $0x5f8] sm:$0xff]
          %v2163 = vld [vmem:[#allocation17 + $0x600] sm:$0xff]
          %v2164 = vld [vmem:[#allocation17 + $0x608] sm:$0xff]
          %v2165 = vld [vmem:[#allocation17 + $0x610] sm:$0xff]
          %v2166 = vld [vmem:[#allocation17 + $0x618] sm:$0xff]
          %v2167 = vld [vmem:[#allocation17 + $0x620] sm:$0xff]
          %v2168 = vld [vmem:[#allocation17 + $0x628] sm:$0xff]
          %v2169 = vld [vmem:[#allocation17 + $0x630] sm:$0xff]
          %v2170 = vld [vmem:[#allocation17 + $0x638] sm:$0xff]
          %v2171 = vld [vmem:[#allocation17 + $0x640] sm:$0xff]
          %v2172 = vld [vmem:[#allocation17 + $0x648] sm:$0xff]
          %v2173 = vld [vmem:[#allocation17 + $0x650] sm:$0xff]
          %v2174 = vld [vmem:[#allocation17 + $0x658] sm:$0xff]
          %v2175 = vld [vmem:[#allocation17 + $0x660] sm:$0xff]
          %v2176 = vld [vmem:[#allocation17 + $0x668] sm:$0xff]
          %v2177 = vld [vmem:[#allocation17 + $0x670] sm:$0xff]
          %v2178 = vld [vmem:[#allocation17 + $0x678] sm:$0xff]
          %v2179 = vld [vmem:[#allocation17 + $0x680] sm:$0xff]
          %v2180 = vld [vmem:[#allocation17 + $0x688] sm:$0xff]
          %v2181 = vld [vmem:[#allocation17 + $0x690] sm:$0xff]
          %v2182 = vld [vmem:[#allocation17 + $0x698] sm:$0xff]
          %v2183 = vld [vmem:[#allocation17 + $0x6a0] sm:$0xff]
          %v2184 = vld [vmem:[#allocation17 + $0x6a8] sm:$0xff]
          %v2185 = vld [vmem:[#allocation17 + $0x6b0] sm:$0xff]
          %v2186 = vld [vmem:[#allocation17 + $0x6b8] sm:$0xff]
          %v2187 = vld [vmem:[#allocation17 + $0x6c0] sm:$0xff]
          %v2188 = vld [vmem:[#allocation17 + $0x6c8] sm:$0xff]
          %v2189 = vld [vmem:[#allocation17 + $0x6d0] sm:$0xff]
          %v2190 = vld [vmem:[#allocation17 + $0x6d8] sm:$0xff]
          %v2191 = vld [vmem:[#allocation17 + $0x6e0] sm:$0xff]
          %v2192 = vld [vmem:[#allocation17 + $0x6e8] sm:$0xff]
          %v2193 = vld [vmem:[#allocation17 + $0x6f0] sm:$0xff]
          %v2194 = vld [vmem:[#allocation17 + $0x6f8] sm:$0xff]
          %v2195 = vld [vmem:[#allocation17 + $0x700] sm:$0xff]
          %v2196 = vld [vmem:[#allocation17 + $0x708] sm:$0xff]
          %v2197 = vld [vmem:[#allocation17 + $0x710] sm:$0xff]
          %v2198 = vld [vmem:[#allocation17 + $0x718] sm:$0xff]
          %v2199 = vld [vmem:[#allocation17 + $0x720] sm:$0xff]
          %v2200 = vld [vmem:[#allocation17 + $0x728] sm:$0xff]
          %v2201 = vld [vmem:[#allocation17 + $0x730] sm:$0xff]
          %v2202 = vld [vmem:[#allocation17 + $0x738] sm:$0xff]
          %v2203 = vld [vmem:[#allocation17 + $0x740] sm:$0xff]
          %v2204 = vld [vmem:[#allocation17 + $0x748] sm:$0xff]
          %v2205 = vld [vmem:[#allocation17 + $0x750] sm:$0xff]
          %v2206 = vld [vmem:[#allocation17 + $0x758] sm:$0xff]
          %v2207 = vld [vmem:[#allocation17 + $0x760] sm:$0xff]
          %v2208 = vld [vmem:[#allocation17 + $0x768] sm:$0xff]
          %v2209 = vld [vmem:[#allocation17 + $0x770] sm:$0xff]
          %v2210 = vld [vmem:[#allocation17 + $0x778] sm:$0xff]
          %v2211 = vld [vmem:[#allocation17 + $0x780] sm:$0xff]
          %v2212 = vld [vmem:[#allocation17 + $0x788] sm:$0xff]
          %v2213 = vld [vmem:[#allocation17 + $0x790] sm:$0xff]
          %v2214 = vld [vmem:[#allocation17 + $0x798] sm:$0xff]
          %v2215 = vld [vmem:[#allocation17 + $0x7a0] sm:$0xff]
          %v2216 = vld [vmem:[#allocation17 + $0x7a8] sm:$0xff]
          %v2217 = vld [vmem:[#allocation17 + $0x7b0] sm:$0xff]
          %v2218 = vld [vmem:[#allocation17 + $0x7b8] sm:$0xff]
          %v2219 = vld [vmem:[#allocation17 + $0x7c0] sm:$0xff]
          %v2220 = vld [vmem:[#allocation17 + $0x7c8] sm:$0xff]
          %v2221 = vld [vmem:[#allocation17 + $0x7d0] sm:$0xff]
          %v2222 = vld [vmem:[#allocation17 + $0x7d8] sm:$0xff]
          %v2223 = vld [vmem:[#allocation17 + $0x7e0] sm:$0xff]
          %v2224 = vld [vmem:[#allocation17 + $0x7e8] sm:$0xff]
          %v2225 = vld [vmem:[#allocation17 + $0x7f0] sm:$0xff]
          %v2226 = vld [vmem:[#allocation17 + $0x7f8] sm:$0xff]
          %v2483 = vunpack.c.l.b16 %v1971
          %v2484 = vunpack.c.h.b16 %v1971
          %v2485 = vunpack.c.l.b16 %v1972
          %v2486 = vunpack.c.h.b16 %v1972
          %v2487 = vunpack.c.l.b16 %v1973
          %v2488 = vunpack.c.h.b16 %v1973
          %v2489 = vunpack.c.l.b16 %v1974
          %v2490 = vunpack.c.h.b16 %v1974
          %v2491 = vunpack.c.l.b16 %v1975
          %v2492 = vunpack.c.h.b16 %v1975
          %v2493 = vunpack.c.l.b16 %v1976
          %v2494 = vunpack.c.h.b16 %v1976
          %v2495 = vunpack.c.l.b16 %v1977
          %v2496 = vunpack.c.h.b16 %v1977
          %v2497 = vunpack.c.l.b16 %v1978
          %v2498 = vunpack.c.h.b16 %v1978
          %v2499 = vunpack.c.l.b16 %v1979
          %v2500 = vunpack.c.h.b16 %v1979
          %v2501 = vunpack.c.l.b16 %v1980
          %v2502 = vunpack.c.h.b16 %v1980
          %v2503 = vunpack.c.l.b16 %v1981
          %v2504 = vunpack.c.h.b16 %v1981
          %v2505 = vunpack.c.l.b16 %v1982
          %v2506 = vunpack.c.h.b16 %v1982
          %v2507 = vunpack.c.l.b16 %v1983
          %v2508 = vunpack.c.h.b16 %v1983
          %v2509 = vunpack.c.l.b16 %v1984
          %v2510 = vunpack.c.h.b16 %v1984
          %v2511 = vunpack.c.l.b16 %v1985
          %v2512 = vunpack.c.h.b16 %v1985
          %v2513 = vunpack.c.l.b16 %v1986
          %v2514 = vunpack.c.h.b16 %v1986
          %v2515 = vunpack.c.l.b16 %v1987
          %v2516 = vunpack.c.h.b16 %v1987
          %v2517 = vunpack.c.l.b16 %v1988
          %v2518 = vunpack.c.h.b16 %v1988
          %v2519 = vunpack.c.l.b16 %v1989
          %v2520 = vunpack.c.h.b16 %v1989
          %v2521 = vunpack.c.l.b16 %v1990
          %v2522 = vunpack.c.h.b16 %v1990
          %v2523 = vunpack.c.l.b16 %v1991
          %v2524 = vunpack.c.h.b16 %v1991
          %v2525 = vunpack.c.l.b16 %v1992
          %v2526 = vunpack.c.h.b16 %v1992
          %v2527 = vunpack.c.l.b16 %v1993
          %v2528 = vunpack.c.h.b16 %v1993
          %v2529 = vunpack.c.l.b16 %v1994
          %v2530 = vunpack.c.h.b16 %v1994
          %v2531 = vunpack.c.l.b16 %v1995
          %v2532 = vunpack.c.h.b16 %v1995
          %v2533 = vunpack.c.l.b16 %v1996
          %v2534 = vunpack.c.h.b16 %v1996
          %v2535 = vunpack.c.l.b16 %v1997
          %v2536 = vunpack.c.h.b16 %v1997
          %v2537 = vunpack.c.l.b16 %v1998
          %v2538 = vunpack.c.h.b16 %v1998
          %v2539 = vunpack.c.l.b16 %v1999
          %v2540 = vunpack.c.h.b16 %v1999
          %v2541 = vunpack.c.l.b16 %v2000
          %v2542 = vunpack.c.h.b16 %v2000
          %v2543 = vunpack.c.l.b16 %v2001
          %v2544 = vunpack.c.h.b16 %v2001
          %v2545 = vunpack.c.l.b16 %v2002
          %v2546 = vunpack.c.h.b16 %v2002
          %v2547 = vunpack.c.l.b16 %v2003
          %v2548 = vunpack.c.h.b16 %v2003
          %v2549 = vunpack.c.l.b16 %v2004
          %v2550 = vunpack.c.h.b16 %v2004
          %v2551 = vunpack.c.l.b16 %v2005
          %v2552 = vunpack.c.h.b16 %v2005
          %v2553 = vunpack.c.l.b16 %v2006
          %v2554 = vunpack.c.h.b16 %v2006
          %v2555 = vunpack.c.l.b16 %v2007
          %v2556 = vunpack.c.h.b16 %v2007
          %v2557 = vunpack.c.l.b16 %v2008
          %v2558 = vunpack.c.h.b16 %v2008
          %v2559 = vunpack.c.l.b16 %v2009
          %v2560 = vunpack.c.h.b16 %v2009
          %v2561 = vunpack.c.l.b16 %v2010
          %v2562 = vunpack.c.h.b16 %v2010
          %v2563 = vunpack.c.l.b16 %v2011
          %v2564 = vunpack.c.h.b16 %v2011
          %v2565 = vunpack.c.l.b16 %v2012
          %v2566 = vunpack.c.h.b16 %v2012
          %v2567 = vunpack.c.l.b16 %v2013
          %v2568 = vunpack.c.h.b16 %v2013
          %v2569 = vunpack.c.l.b16 %v2014
          %v2570 = vunpack.c.h.b16 %v2014
          %v2571 = vunpack.c.l.b16 %v2015
          %v2572 = vunpack.c.h.b16 %v2015
          %v2573 = vunpack.c.l.b16 %v2016
          %v2574 = vunpack.c.h.b16 %v2016
          %v2575 = vunpack.c.l.b16 %v2017
          %v2576 = vunpack.c.h.b16 %v2017
          %v2577 = vunpack.c.l.b16 %v2018
          %v2578 = vunpack.c.h.b16 %v2018
          %v2579 = vunpack.c.l.b16 %v2019
          %v2580 = vunpack.c.h.b16 %v2019
          %v2581 = vunpack.c.l.b16 %v2020
          %v2582 = vunpack.c.h.b16 %v2020
          %v2583 = vunpack.c.l.b16 %v2021
          %v2584 = vunpack.c.h.b16 %v2021
          %v2585 = vunpack.c.l.b16 %v2022
          %v2586 = vunpack.c.h.b16 %v2022
          %v2587 = vunpack.c.l.b16 %v2023
          %v2588 = vunpack.c.h.b16 %v2023
          %v2589 = vunpack.c.l.b16 %v2024
          %v2590 = vunpack.c.h.b16 %v2024
          %v2591 = vunpack.c.l.b16 %v2025
          %v2592 = vunpack.c.h.b16 %v2025
          %v2593 = vunpack.c.l.b16 %v2026
          %v2594 = vunpack.c.h.b16 %v2026
          %v2595 = vunpack.c.l.b16 %v2027
          %v2596 = vunpack.c.h.b16 %v2027
          %v2597 = vunpack.c.l.b16 %v2028
          %v2598 = vunpack.c.h.b16 %v2028
          %v2599 = vunpack.c.l.b16 %v2029
          %v2600 = vunpack.c.h.b16 %v2029
          %v2601 = vunpack.c.l.b16 %v2030
          %v2602 = vunpack.c.h.b16 %v2030
          %v2603 = vunpack.c.l.b16 %v2031
          %v2604 = vunpack.c.h.b16 %v2031
          %v2605 = vunpack.c.l.b16 %v2032
          %v2606 = vunpack.c.h.b16 %v2032
          %v2607 = vunpack.c.l.b16 %v2033
          %v2608 = vunpack.c.h.b16 %v2033
          %v2609 = vunpack.c.l.b16 %v2034
          %v2610 = vunpack.c.h.b16 %v2034
          %v2611 = vunpack.c.l.b16 %v2035
          %v2612 = vunpack.c.h.b16 %v2035
          %v2613 = vunpack.c.l.b16 %v2036
          %v2614 = vunpack.c.h.b16 %v2036
          %v2615 = vunpack.c.l.b16 %v2037
          %v2616 = vunpack.c.h.b16 %v2037
          %v2617 = vunpack.c.l.b16 %v2038
          %v2618 = vunpack.c.h.b16 %v2038
          %v2619 = vunpack.c.l.b16 %v2039
          %v2620 = vunpack.c.h.b16 %v2039
          %v2621 = vunpack.c.l.b16 %v2040
          %v2622 = vunpack.c.h.b16 %v2040
          %v2623 = vunpack.c.l.b16 %v2041
          %v2624 = vunpack.c.h.b16 %v2041
          %v2625 = vunpack.c.l.b16 %v2042
          %v2626 = vunpack.c.h.b16 %v2042
          %v2627 = vunpack.c.l.b16 %v2043
          %v2628 = vunpack.c.h.b16 %v2043
          %v2629 = vunpack.c.l.b16 %v2044
          %v2630 = vunpack.c.h.b16 %v2044
          %v2631 = vunpack.c.l.b16 %v2045
          %v2632 = vunpack.c.h.b16 %v2045
          %v2633 = vunpack.c.l.b16 %v2046
          %v2634 = vunpack.c.h.b16 %v2046
          %v2635 = vunpack.c.l.b16 %v2047
          %v2636 = vunpack.c.h.b16 %v2047
          %v2637 = vunpack.c.l.b16 %v2048
          %v2638 = vunpack.c.h.b16 %v2048
          %v2639 = vunpack.c.l.b16 %v2049
          %v2640 = vunpack.c.h.b16 %v2049
          %v2641 = vunpack.c.l.b16 %v2050
          %v2642 = vunpack.c.h.b16 %v2050
          %v2643 = vunpack.c.l.b16 %v2051
          %v2644 = vunpack.c.h.b16 %v2051
          %v2645 = vunpack.c.l.b16 %v2052
          %v2646 = vunpack.c.h.b16 %v2052
          %v2647 = vunpack.c.l.b16 %v2053
          %v2648 = vunpack.c.h.b16 %v2053
          %v2649 = vunpack.c.l.b16 %v2054
          %v2650 = vunpack.c.h.b16 %v2054
          %v2651 = vunpack.c.l.b16 %v2055
          %v2652 = vunpack.c.h.b16 %v2055
          %v2653 = vunpack.c.l.b16 %v2056
          %v2654 = vunpack.c.h.b16 %v2056
          %v2655 = vunpack.c.l.b16 %v2057
          %v2656 = vunpack.c.h.b16 %v2057
          %v2657 = vunpack.c.l.b16 %v2058
          %v2658 = vunpack.c.h.b16 %v2058
          %v2659 = vunpack.c.l.b16 %v2059
          %v2660 = vunpack.c.h.b16 %v2059
          %v2661 = vunpack.c.l.b16 %v2060
          %v2662 = vunpack.c.h.b16 %v2060
          %v2663 = vunpack.c.l.b16 %v2061
          %v2664 = vunpack.c.h.b16 %v2061
          %v2665 = vunpack.c.l.b16 %v2062
          %v2666 = vunpack.c.h.b16 %v2062
          %v2667 = vunpack.c.l.b16 %v2063
          %v2668 = vunpack.c.h.b16 %v2063
          %v2669 = vunpack.c.l.b16 %v2064
          %v2670 = vunpack.c.h.b16 %v2064
          %v2671 = vunpack.c.l.b16 %v2065
          %v2672 = vunpack.c.h.b16 %v2065
          %v2673 = vunpack.c.l.b16 %v2066
          %v2674 = vunpack.c.h.b16 %v2066
          %v2675 = vunpack.c.l.b16 %v2067
          %v2676 = vunpack.c.h.b16 %v2067
          %v2677 = vunpack.c.l.b16 %v2068
          %v2678 = vunpack.c.h.b16 %v2068
          %v2679 = vunpack.c.l.b16 %v2069
          %v2680 = vunpack.c.h.b16 %v2069
          %v2681 = vunpack.c.l.b16 %v2070
          %v2682 = vunpack.c.h.b16 %v2070
          %v2683 = vunpack.c.l.b16 %v2071
          %v2684 = vunpack.c.h.b16 %v2071
          %v2685 = vunpack.c.l.b16 %v2072
          %v2686 = vunpack.c.h.b16 %v2072
          %v2687 = vunpack.c.l.b16 %v2073
          %v2688 = vunpack.c.h.b16 %v2073
          %v2689 = vunpack.c.l.b16 %v2074
          %v2690 = vunpack.c.h.b16 %v2074
          %v2691 = vunpack.c.l.b16 %v2075
          %v2692 = vunpack.c.h.b16 %v2075
          %v2693 = vunpack.c.l.b16 %v2076
          %v2694 = vunpack.c.h.b16 %v2076
          %v2695 = vunpack.c.l.b16 %v2077
          %v2696 = vunpack.c.h.b16 %v2077
          %v2697 = vunpack.c.l.b16 %v2078
          %v2698 = vunpack.c.h.b16 %v2078
          %v2699 = vunpack.c.l.b16 %v2079
          %v2700 = vunpack.c.h.b16 %v2079
          %v2701 = vunpack.c.l.b16 %v2080
          %v2702 = vunpack.c.h.b16 %v2080
          %v2703 = vunpack.c.l.b16 %v2081
          %v2704 = vunpack.c.h.b16 %v2081
          %v2705 = vunpack.c.l.b16 %v2082
          %v2706 = vunpack.c.h.b16 %v2082
          %v2707 = vunpack.c.l.b16 %v2083
          %v2708 = vunpack.c.h.b16 %v2083
          %v2709 = vunpack.c.l.b16 %v2084
          %v2710 = vunpack.c.h.b16 %v2084
          %v2711 = vunpack.c.l.b16 %v2085
          %v2712 = vunpack.c.h.b16 %v2085
          %v2713 = vunpack.c.l.b16 %v2086
          %v2714 = vunpack.c.h.b16 %v2086
          %v2715 = vunpack.c.l.b16 %v2087
          %v2716 = vunpack.c.h.b16 %v2087
          %v2717 = vunpack.c.l.b16 %v2088
          %v2718 = vunpack.c.h.b16 %v2088
          %v2719 = vunpack.c.l.b16 %v2089
          %v2720 = vunpack.c.h.b16 %v2089
          %v2721 = vunpack.c.l.b16 %v2090
          %v2722 = vunpack.c.h.b16 %v2090
          %v2723 = vunpack.c.l.b16 %v2091
          %v2724 = vunpack.c.h.b16 %v2091
          %v2725 = vunpack.c.l.b16 %v2092
          %v2726 = vunpack.c.h.b16 %v2092
          %v2727 = vunpack.c.l.b16 %v2093
          %v2728 = vunpack.c.h.b16 %v2093
          %v2729 = vunpack.c.l.b16 %v2094
          %v2730 = vunpack.c.h.b16 %v2094
          %v2731 = vunpack.c.l.b16 %v2095
          %v2732 = vunpack.c.h.b16 %v2095
          %v2733 = vunpack.c.l.b16 %v2096
          %v2734 = vunpack.c.h.b16 %v2096
          %v2735 = vunpack.c.l.b16 %v2097
          %v2736 = vunpack.c.h.b16 %v2097
          %v2737 = vunpack.c.l.b16 %v2098
          %v2738 = vunpack.c.h.b16 %v2098
          %v2739 = vunpack.c.l.b16 %v2099
          %v2740 = vunpack.c.h.b16 %v2099
          %v2741 = vunpack.c.l.b16 %v2100
          %v2742 = vunpack.c.h.b16 %v2100
          %v2743 = vunpack.c.l.b16 %v2101
          %v2744 = vunpack.c.h.b16 %v2101
          %v2745 = vunpack.c.l.b16 %v2102
          %v2746 = vunpack.c.h.b16 %v2102
          %v2747 = vunpack.c.l.b16 %v2103
          %v2748 = vunpack.c.h.b16 %v2103
          %v2749 = vunpack.c.l.b16 %v2104
          %v2750 = vunpack.c.h.b16 %v2104
          %v2751 = vunpack.c.l.b16 %v2105
          %v2752 = vunpack.c.h.b16 %v2105
          %v2753 = vunpack.c.l.b16 %v2106
          %v2754 = vunpack.c.h.b16 %v2106
          %v2755 = vunpack.c.l.b16 %v2107
          %v2756 = vunpack.c.h.b16 %v2107
          %v2757 = vunpack.c.l.b16 %v2108
          %v2758 = vunpack.c.h.b16 %v2108
          %v2759 = vunpack.c.l.b16 %v2109
          %v2760 = vunpack.c.h.b16 %v2109
          %v2761 = vunpack.c.l.b16 %v2110
          %v2762 = vunpack.c.h.b16 %v2110
          %v2763 = vunpack.c.l.b16 %v2111
          %v2764 = vunpack.c.h.b16 %v2111
          %v2765 = vunpack.c.l.b16 %v2112
          %v2766 = vunpack.c.h.b16 %v2112
          %v2767 = vunpack.c.l.b16 %v2113
          %v2768 = vunpack.c.h.b16 %v2113
          %v2769 = vunpack.c.l.b16 %v2114
          %v2770 = vunpack.c.h.b16 %v2114
          %v2771 = vunpack.c.l.b16 %v2115
          %v2772 = vunpack.c.h.b16 %v2115
          %v2773 = vunpack.c.l.b16 %v2116
          %v2774 = vunpack.c.h.b16 %v2116
          %v2775 = vunpack.c.l.b16 %v2117
          %v2776 = vunpack.c.h.b16 %v2117
          %v2777 = vunpack.c.l.b16 %v2118
          %v2778 = vunpack.c.h.b16 %v2118
          %v2779 = vunpack.c.l.b16 %v2119
          %v2780 = vunpack.c.h.b16 %v2119
          %v2781 = vunpack.c.l.b16 %v2120
          %v2782 = vunpack.c.h.b16 %v2120
          %v2783 = vunpack.c.l.b16 %v2121
          %v2784 = vunpack.c.h.b16 %v2121
          %v2785 = vunpack.c.l.b16 %v2122
          %v2786 = vunpack.c.h.b16 %v2122
          %v2787 = vunpack.c.l.b16 %v2123
          %v2788 = vunpack.c.h.b16 %v2123
          %v2789 = vunpack.c.l.b16 %v2124
          %v2790 = vunpack.c.h.b16 %v2124
          %v2791 = vunpack.c.l.b16 %v2125
          %v2792 = vunpack.c.h.b16 %v2125
          %v2793 = vunpack.c.l.b16 %v2126
          %v2794 = vunpack.c.h.b16 %v2126
          %v2795 = vunpack.c.l.b16 %v2127
          %v2796 = vunpack.c.h.b16 %v2127
          %v2797 = vunpack.c.l.b16 %v2128
          %v2798 = vunpack.c.h.b16 %v2128
          %v2799 = vunpack.c.l.b16 %v2129
          %v2800 = vunpack.c.h.b16 %v2129
          %v2801 = vunpack.c.l.b16 %v2130
          %v2802 = vunpack.c.h.b16 %v2130
          %v2803 = vunpack.c.l.b16 %v2131
          %v2804 = vunpack.c.h.b16 %v2131
          %v2805 = vunpack.c.l.b16 %v2132
          %v2806 = vunpack.c.h.b16 %v2132
          %v2807 = vunpack.c.l.b16 %v2133
          %v2808 = vunpack.c.h.b16 %v2133
          %v2809 = vunpack.c.l.b16 %v2134
          %v2810 = vunpack.c.h.b16 %v2134
          %v2811 = vunpack.c.l.b16 %v2135
          %v2812 = vunpack.c.h.b16 %v2135
          %v2813 = vunpack.c.l.b16 %v2136
          %v2814 = vunpack.c.h.b16 %v2136
          %v2815 = vunpack.c.l.b16 %v2137
          %v2816 = vunpack.c.h.b16 %v2137
          %v2817 = vunpack.c.l.b16 %v2138
          %v2818 = vunpack.c.h.b16 %v2138
          %v2819 = vunpack.c.l.b16 %v2139
          %v2820 = vunpack.c.h.b16 %v2139
          %v2821 = vunpack.c.l.b16 %v2140
          %v2822 = vunpack.c.h.b16 %v2140
          %v2823 = vunpack.c.l.b16 %v2141
          %v2824 = vunpack.c.h.b16 %v2141
          %v2825 = vunpack.c.l.b16 %v2142
          %v2826 = vunpack.c.h.b16 %v2142
          %v2827 = vunpack.c.l.b16 %v2143
          %v2828 = vunpack.c.h.b16 %v2143
          %v2829 = vunpack.c.l.b16 %v2144
          %v2830 = vunpack.c.h.b16 %v2144
          %v2831 = vunpack.c.l.b16 %v2145
          %v2832 = vunpack.c.h.b16 %v2145
          %v2833 = vunpack.c.l.b16 %v2146
          %v2834 = vunpack.c.h.b16 %v2146
          %v2835 = vunpack.c.l.b16 %v2147
          %v2836 = vunpack.c.h.b16 %v2147
          %v2837 = vunpack.c.l.b16 %v2148
          %v2838 = vunpack.c.h.b16 %v2148
          %v2839 = vunpack.c.l.b16 %v2149
          %v2840 = vunpack.c.h.b16 %v2149
          %v2841 = vunpack.c.l.b16 %v2150
          %v2842 = vunpack.c.h.b16 %v2150
          %v2843 = vunpack.c.l.b16 %v2151
          %v2844 = vunpack.c.h.b16 %v2151
          %v2845 = vunpack.c.l.b16 %v2152
          %v2846 = vunpack.c.h.b16 %v2152
          %v2847 = vunpack.c.l.b16 %v2153
          %v2848 = vunpack.c.h.b16 %v2153
          %v2849 = vunpack.c.l.b16 %v2154
          %v2850 = vunpack.c.h.b16 %v2154
          %v2851 = vunpack.c.l.b16 %v2155
          %v2852 = vunpack.c.h.b16 %v2155
          %v2853 = vunpack.c.l.b16 %v2156
          %v2854 = vunpack.c.h.b16 %v2156
          %v2855 = vunpack.c.l.b16 %v2157
          %v2856 = vunpack.c.h.b16 %v2157
          %v2857 = vunpack.c.l.b16 %v2158
          %v2858 = vunpack.c.h.b16 %v2158
          %v2859 = vunpack.c.l.b16 %v2159
          %v2860 = vunpack.c.h.b16 %v2159
          %v2861 = vunpack.c.l.b16 %v2160
          %v2862 = vunpack.c.h.b16 %v2160
          %v2863 = vunpack.c.l.b16 %v2161
          %v2864 = vunpack.c.h.b16 %v2161
          %v2865 = vunpack.c.l.b16 %v2162
          %v2866 = vunpack.c.h.b16 %v2162
          %v2867 = vunpack.c.l.b16 %v2163
          %v2868 = vunpack.c.h.b16 %v2163
          %v2869 = vunpack.c.l.b16 %v2164
          %v2870 = vunpack.c.h.b16 %v2164
          %v2871 = vunpack.c.l.b16 %v2165
          %v2872 = vunpack.c.h.b16 %v2165
          %v2873 = vunpack.c.l.b16 %v2166
          %v2874 = vunpack.c.h.b16 %v2166
          %v2875 = vunpack.c.l.b16 %v2167
          %v2876 = vunpack.c.h.b16 %v2167
          %v2877 = vunpack.c.l.b16 %v2168
          %v2878 = vunpack.c.h.b16 %v2168
          %v2879 = vunpack.c.l.b16 %v2169
          %v2880 = vunpack.c.h.b16 %v2169
          %v2881 = vunpack.c.l.b16 %v2170
          %v2882 = vunpack.c.h.b16 %v2170
          %v2883 = vunpack.c.l.b16 %v2171
          %v2884 = vunpack.c.h.b16 %v2171
          %v2885 = vunpack.c.l.b16 %v2172
          %v2886 = vunpack.c.h.b16 %v2172
          %v2887 = vunpack.c.l.b16 %v2173
          %v2888 = vunpack.c.h.b16 %v2173
          %v2889 = vunpack.c.l.b16 %v2174
          %v2890 = vunpack.c.h.b16 %v2174
          %v2891 = vunpack.c.l.b16 %v2175
          %v2892 = vunpack.c.h.b16 %v2175
          %v2893 = vunpack.c.l.b16 %v2176
          %v2894 = vunpack.c.h.b16 %v2176
          %v2895 = vunpack.c.l.b16 %v2177
          %v2896 = vunpack.c.h.b16 %v2177
          %v2897 = vunpack.c.l.b16 %v2178
          %v2898 = vunpack.c.h.b16 %v2178
          %v2899 = vunpack.c.l.b16 %v2179
          %v2900 = vunpack.c.h.b16 %v2179
          %v2901 = vunpack.c.l.b16 %v2180
          %v2902 = vunpack.c.h.b16 %v2180
          %v2903 = vunpack.c.l.b16 %v2181
          %v2904 = vunpack.c.h.b16 %v2181
          %v2905 = vunpack.c.l.b16 %v2182
          %v2906 = vunpack.c.h.b16 %v2182
          %v2907 = vunpack.c.l.b16 %v2183
          %v2908 = vunpack.c.h.b16 %v2183
          %v2909 = vunpack.c.l.b16 %v2184
          %v2910 = vunpack.c.h.b16 %v2184
          %v2911 = vunpack.c.l.b16 %v2185
          %v2912 = vunpack.c.h.b16 %v2185
          %v2913 = vunpack.c.l.b16 %v2186
          %v2914 = vunpack.c.h.b16 %v2186
          %v2915 = vunpack.c.l.b16 %v2187
          %v2916 = vunpack.c.h.b16 %v2187
          %v2917 = vunpack.c.l.b16 %v2188
          %v2918 = vunpack.c.h.b16 %v2188
          %v2919 = vunpack.c.l.b16 %v2189
          %v2920 = vunpack.c.h.b16 %v2189
          %v2921 = vunpack.c.l.b16 %v2190
          %v2922 = vunpack.c.h.b16 %v2190
          %v2923 = vunpack.c.l.b16 %v2191
          %v2924 = vunpack.c.h.b16 %v2191
          %v2925 = vunpack.c.l.b16 %v2192
          %v2926 = vunpack.c.h.b16 %v2192
          %v2927 = vunpack.c.l.b16 %v2193
          %v2928 = vunpack.c.h.b16 %v2193
          %v2929 = vunpack.c.l.b16 %v2194
          %v2930 = vunpack.c.h.b16 %v2194
          %v2931 = vunpack.c.l.b16 %v2195
          %v2932 = vunpack.c.h.b16 %v2195
          %v2933 = vunpack.c.l.b16 %v2196
          %v2934 = vunpack.c.h.b16 %v2196
          %v2935 = vunpack.c.l.b16 %v2197
          %v2936 = vunpack.c.h.b16 %v2197
          %v2937 = vunpack.c.l.b16 %v2198
          %v2938 = vunpack.c.h.b16 %v2198
          %v2939 = vunpack.c.l.b16 %v2199
          %v2940 = vunpack.c.h.b16 %v2199
          %v2941 = vunpack.c.l.b16 %v2200
          %v2942 = vunpack.c.h.b16 %v2200
          %v2943 = vunpack.c.l.b16 %v2201
          %v2944 = vunpack.c.h.b16 %v2201
          %v2945 = vunpack.c.l.b16 %v2202
          %v2946 = vunpack.c.h.b16 %v2202
          %v2947 = vunpack.c.l.b16 %v2203
          %v2948 = vunpack.c.h.b16 %v2203
          %v2949 = vunpack.c.l.b16 %v2204
          %v2950 = vunpack.c.h.b16 %v2204
          %v2951 = vunpack.c.l.b16 %v2205
          %v2952 = vunpack.c.h.b16 %v2205
          %v2953 = vunpack.c.l.b16 %v2206
          %v2954 = vunpack.c.h.b16 %v2206
          %v2955 = vunpack.c.l.b16 %v2207
          %v2956 = vunpack.c.h.b16 %v2207
          %v2957 = vunpack.c.l.b16 %v2208
          %v2958 = vunpack.c.h.b16 %v2208
          %v2959 = vunpack.c.l.b16 %v2209
          %v2960 = vunpack.c.h.b16 %v2209
          %v2961 = vunpack.c.l.b16 %v2210
          %v2962 = vunpack.c.h.b16 %v2210
          %v2963 = vunpack.c.l.b16 %v2211
          %v2964 = vunpack.c.h.b16 %v2211
          %v2965 = vunpack.c.l.b16 %v2212
          %v2966 = vunpack.c.h.b16 %v2212
          %v2967 = vunpack.c.l.b16 %v2213
          %v2968 = vunpack.c.h.b16 %v2213
          %v2969 = vunpack.c.l.b16 %v2214
          %v2970 = vunpack.c.h.b16 %v2214
          %v2971 = vunpack.c.l.b16 %v2215
          %v2972 = vunpack.c.h.b16 %v2215
          %v2973 = vunpack.c.l.b16 %v2216
          %v2974 = vunpack.c.h.b16 %v2216
          %v2975 = vunpack.c.l.b16 %v2217
          %v2976 = vunpack.c.h.b16 %v2217
          %v2977 = vunpack.c.l.b16 %v2218
          %v2978 = vunpack.c.h.b16 %v2218
          %v2979 = vunpack.c.l.b16 %v2219
          %v2980 = vunpack.c.h.b16 %v2219
          %v2981 = vunpack.c.l.b16 %v2220
          %v2982 = vunpack.c.h.b16 %v2220
          %v2983 = vunpack.c.l.b16 %v2221
          %v2984 = vunpack.c.h.b16 %v2221
          %v2985 = vunpack.c.l.b16 %v2222
          %v2986 = vunpack.c.h.b16 %v2222
          %v2987 = vunpack.c.l.b16 %v2223
          %v2988 = vunpack.c.h.b16 %v2223
          %v2989 = vunpack.c.l.b16 %v2224
          %v2990 = vunpack.c.h.b16 %v2224
          %v2991 = vunpack.c.l.b16 %v2225
          %v2992 = vunpack.c.h.b16 %v2225
          %v2993 = vunpack.c.l.b16 %v2226
          %v2994 = vunpack.c.h.b16 %v2226
          %v2995 = vpack.c.b16 %v2487, %v2483
          %v2996 = vpack.c.b16 %v2488, %v2484
          %v2997 = vpack.c.b16 %v2489, %v2485
          %v2998 = vpack.c.b16 %v2490, %v2486
          %v2999 = vpack.c.b16 %v2495, %v2491
          %v3000 = vpack.c.b16 %v2496, %v2492
          %v3001 = vpack.c.b16 %v2497, %v2493
          %v3002 = vpack.c.b16 %v2498, %v2494
          %v3003 = vpack.c.b16 %v2503, %v2499
          %v3004 = vpack.c.b16 %v2504, %v2500
          %v3005 = vpack.c.b16 %v2505, %v2501
          %v3006 = vpack.c.b16 %v2506, %v2502
          %v3007 = vpack.c.b16 %v2511, %v2507
          %v3008 = vpack.c.b16 %v2512, %v2508
          %v3009 = vpack.c.b16 %v2513, %v2509
          %v3010 = vpack.c.b16 %v2514, %v2510
          %v3011 = vpack.c.b16 %v2519, %v2515
          %v3012 = vpack.c.b16 %v2520, %v2516
          %v3013 = vpack.c.b16 %v2521, %v2517
          %v3014 = vpack.c.b16 %v2522, %v2518
          %v3015 = vpack.c.b16 %v2527, %v2523
          %v3016 = vpack.c.b16 %v2528, %v2524
          %v3017 = vpack.c.b16 %v2529, %v2525
          %v3018 = vpack.c.b16 %v2530, %v2526
          %v3019 = vpack.c.b16 %v2535, %v2531
          %v3020 = vpack.c.b16 %v2536, %v2532
          %v3021 = vpack.c.b16 %v2537, %v2533
          %v3022 = vpack.c.b16 %v2538, %v2534
          %v3023 = vpack.c.b16 %v2543, %v2539
          %v3024 = vpack.c.b16 %v2544, %v2540
          %v3025 = vpack.c.b16 %v2545, %v2541
          %v3026 = vpack.c.b16 %v2546, %v2542
          %v3027 = vpack.c.b16 %v2551, %v2547
          %v3028 = vpack.c.b16 %v2552, %v2548
          %v3029 = vpack.c.b16 %v2553, %v2549
          %v3030 = vpack.c.b16 %v2554, %v2550
          %v3031 = vpack.c.b16 %v2559, %v2555
          %v3032 = vpack.c.b16 %v2560, %v2556
          %v3033 = vpack.c.b16 %v2561, %v2557
          %v3034 = vpack.c.b16 %v2562, %v2558
          %v3035 = vpack.c.b16 %v2567, %v2563
          %v3036 = vpack.c.b16 %v2568, %v2564
          %v3037 = vpack.c.b16 %v2569, %v2565
          %v3038 = vpack.c.b16 %v2570, %v2566
          %v3039 = vpack.c.b16 %v2575, %v2571
          %v3040 = vpack.c.b16 %v2576, %v2572
          %v3041 = vpack.c.b16 %v2577, %v2573
          %v3042 = vpack.c.b16 %v2578, %v2574
          %v3043 = vpack.c.b16 %v2583, %v2579
          %v3044 = vpack.c.b16 %v2584, %v2580
          %v3045 = vpack.c.b16 %v2585, %v2581
          %v3046 = vpack.c.b16 %v2586, %v2582
          %v3047 = vpack.c.b16 %v2591, %v2587
          %v3048 = vpack.c.b16 %v2592, %v2588
          %v3049 = vpack.c.b16 %v2593, %v2589
          %v3050 = vpack.c.b16 %v2594, %v2590
          %v3051 = vpack.c.b16 %v2599, %v2595
          %v3052 = vpack.c.b16 %v2600, %v2596
          %v3053 = vpack.c.b16 %v2601, %v2597
          %v3054 = vpack.c.b16 %v2602, %v2598
          %v3055 = vpack.c.b16 %v2607, %v2603
          %v3056 = vpack.c.b16 %v2608, %v2604
          %v3057 = vpack.c.b16 %v2609, %v2605
          %v3058 = vpack.c.b16 %v2610, %v2606
          %v3059 = vpack.c.b16 %v2615, %v2611
          %v3060 = vpack.c.b16 %v2616, %v2612
          %v3061 = vpack.c.b16 %v2617, %v2613
          %v3062 = vpack.c.b16 %v2618, %v2614
          %v3063 = vpack.c.b16 %v2623, %v2619
          %v3064 = vpack.c.b16 %v2624, %v2620
          %v3065 = vpack.c.b16 %v2625, %v2621
          %v3066 = vpack.c.b16 %v2626, %v2622
          %v3067 = vpack.c.b16 %v2631, %v2627
          %v3068 = vpack.c.b16 %v2632, %v2628
          %v3069 = vpack.c.b16 %v2633, %v2629
          %v3070 = vpack.c.b16 %v2634, %v2630
          %v3071 = vpack.c.b16 %v2639, %v2635
          %v3072 = vpack.c.b16 %v2640, %v2636
          %v3073 = vpack.c.b16 %v2641, %v2637
          %v3074 = vpack.c.b16 %v2642, %v2638
          %v3075 = vpack.c.b16 %v2647, %v2643
          %v3076 = vpack.c.b16 %v2648, %v2644
          %v3077 = vpack.c.b16 %v2649, %v2645
          %v3078 = vpack.c.b16 %v2650, %v2646
          %v3079 = vpack.c.b16 %v2655, %v2651
          %v3080 = vpack.c.b16 %v2656, %v2652
          %v3081 = vpack.c.b16 %v2657, %v2653
          %v3082 = vpack.c.b16 %v2658, %v2654
          %v3083 = vpack.c.b16 %v2663, %v2659
          %v3084 = vpack.c.b16 %v2664, %v2660
          %v3085 = vpack.c.b16 %v2665, %v2661
          %v3086 = vpack.c.b16 %v2666, %v2662
          %v3087 = vpack.c.b16 %v2671, %v2667
          %v3088 = vpack.c.b16 %v2672, %v2668
          %v3089 = vpack.c.b16 %v2673, %v2669
          %v3090 = vpack.c.b16 %v2674, %v2670
          %v3091 = vpack.c.b16 %v2679, %v2675
          %v3092 = vpack.c.b16 %v2680, %v2676
          %v3093 = vpack.c.b16 %v2681, %v2677
          %v3094 = vpack.c.b16 %v2682, %v2678
          %v3095 = vpack.c.b16 %v2687, %v2683
          %v3096 = vpack.c.b16 %v2688, %v2684
          %v3097 = vpack.c.b16 %v2689, %v2685
          %v3098 = vpack.c.b16 %v2690, %v2686
          %v3099 = vpack.c.b16 %v2695, %v2691
          %v3100 = vpack.c.b16 %v2696, %v2692
          %v3101 = vpack.c.b16 %v2697, %v2693
          %v3102 = vpack.c.b16 %v2698, %v2694
          %v3103 = vpack.c.b16 %v2703, %v2699
          %v3104 = vpack.c.b16 %v2704, %v2700
          %v3105 = vpack.c.b16 %v2705, %v2701
          %v3106 = vpack.c.b16 %v2706, %v2702
          %v3107 = vpack.c.b16 %v2711, %v2707
          %v3108 = vpack.c.b16 %v2712, %v2708
          %v3109 = vpack.c.b16 %v2713, %v2709
          %v3110 = vpack.c.b16 %v2714, %v2710
          %v3111 = vpack.c.b16 %v2719, %v2715
          %v3112 = vpack.c.b16 %v2720, %v2716
          %v3113 = vpack.c.b16 %v2721, %v2717
          %v3114 = vpack.c.b16 %v2722, %v2718
          %v3115 = vpack.c.b16 %v2727, %v2723
          %v3116 = vpack.c.b16 %v2728, %v2724
          %v3117 = vpack.c.b16 %v2729, %v2725
          %v3118 = vpack.c.b16 %v2730, %v2726
          %v3119 = vpack.c.b16 %v2735, %v2731
          %v3120 = vpack.c.b16 %v2736, %v2732
          %v3121 = vpack.c.b16 %v2737, %v2733
          %v3122 = vpack.c.b16 %v2738, %v2734
          %v3123 = vpack.c.b16 %v2743, %v2739
          %v3124 = vpack.c.b16 %v2744, %v2740
          %v3125 = vpack.c.b16 %v2745, %v2741
          %v3126 = vpack.c.b16 %v2746, %v2742
          %v3127 = vpack.c.b16 %v2751, %v2747
          %v3128 = vpack.c.b16 %v2752, %v2748
          %v3129 = vpack.c.b16 %v2753, %v2749
          %v3130 = vpack.c.b16 %v2754, %v2750
          %v3131 = vpack.c.b16 %v2759, %v2755
          %v3132 = vpack.c.b16 %v2760, %v2756
          %v3133 = vpack.c.b16 %v2761, %v2757
          %v3134 = vpack.c.b16 %v2762, %v2758
          %v3135 = vpack.c.b16 %v2767, %v2763
          %v3136 = vpack.c.b16 %v2768, %v2764
          %v3137 = vpack.c.b16 %v2769, %v2765
          %v3138 = vpack.c.b16 %v2770, %v2766
          %v3139 = vpack.c.b16 %v2775, %v2771
          %v3140 = vpack.c.b16 %v2776, %v2772
          %v3141 = vpack.c.b16 %v2777, %v2773
          %v3142 = vpack.c.b16 %v2778, %v2774
          %v3143 = vpack.c.b16 %v2783, %v2779
          %v3144 = vpack.c.b16 %v2784, %v2780
          %v3145 = vpack.c.b16 %v2785, %v2781
          %v3146 = vpack.c.b16 %v2786, %v2782
          %v3147 = vpack.c.b16 %v2791, %v2787
          %v3148 = vpack.c.b16 %v2792, %v2788
          %v3149 = vpack.c.b16 %v2793, %v2789
          %v3150 = vpack.c.b16 %v2794, %v2790
          %v3151 = vpack.c.b16 %v2799, %v2795
          %v3152 = vpack.c.b16 %v2800, %v2796
          %v3153 = vpack.c.b16 %v2801, %v2797
          %v3154 = vpack.c.b16 %v2802, %v2798
          %v3155 = vpack.c.b16 %v2807, %v2803
          %v3156 = vpack.c.b16 %v2808, %v2804
          %v3157 = vpack.c.b16 %v2809, %v2805
          %v3158 = vpack.c.b16 %v2810, %v2806
          %v3159 = vpack.c.b16 %v2815, %v2811
          %v3160 = vpack.c.b16 %v2816, %v2812
          %v3161 = vpack.c.b16 %v2817, %v2813
          %v3162 = vpack.c.b16 %v2818, %v2814
          %v3163 = vpack.c.b16 %v2823, %v2819
          %v3164 = vpack.c.b16 %v2824, %v2820
          %v3165 = vpack.c.b16 %v2825, %v2821
          %v3166 = vpack.c.b16 %v2826, %v2822
          %v3167 = vpack.c.b16 %v2831, %v2827
          %v3168 = vpack.c.b16 %v2832, %v2828
          %v3169 = vpack.c.b16 %v2833, %v2829
          %v3170 = vpack.c.b16 %v2834, %v2830
          %v3171 = vpack.c.b16 %v2839, %v2835
          %v3172 = vpack.c.b16 %v2840, %v2836
          %v3173 = vpack.c.b16 %v2841, %v2837
          %v3174 = vpack.c.b16 %v2842, %v2838
          %v3175 = vpack.c.b16 %v2847, %v2843
          %v3176 = vpack.c.b16 %v2848, %v2844
          %v3177 = vpack.c.b16 %v2849, %v2845
          %v3178 = vpack.c.b16 %v2850, %v2846
          %v3179 = vpack.c.b16 %v2855, %v2851
          %v3180 = vpack.c.b16 %v2856, %v2852
          %v3181 = vpack.c.b16 %v2857, %v2853
          %v3182 = vpack.c.b16 %v2858, %v2854
          %v3183 = vpack.c.b16 %v2863, %v2859
          %v3184 = vpack.c.b16 %v2864, %v2860
          %v3185 = vpack.c.b16 %v2865, %v2861
          %v3186 = vpack.c.b16 %v2866, %v2862
          %v3187 = vpack.c.b16 %v2871, %v2867
          %v3188 = vpack.c.b16 %v2872, %v2868
          %v3189 = vpack.c.b16 %v2873, %v2869
          %v3190 = vpack.c.b16 %v2874, %v2870
          %v3191 = vpack.c.b16 %v2879, %v2875
          %v3192 = vpack.c.b16 %v2880, %v2876
          %v3193 = vpack.c.b16 %v2881, %v2877
          %v3194 = vpack.c.b16 %v2882, %v2878
          %v3195 = vpack.c.b16 %v2887, %v2883
          %v3196 = vpack.c.b16 %v2888, %v2884
          %v3197 = vpack.c.b16 %v2889, %v2885
          %v3198 = vpack.c.b16 %v2890, %v2886
          %v3199 = vpack.c.b16 %v2895, %v2891
          %v3200 = vpack.c.b16 %v2896, %v2892
          %v3201 = vpack.c.b16 %v2897, %v2893
          %v3202 = vpack.c.b16 %v2898, %v2894
          %v3203 = vpack.c.b16 %v2903, %v2899
          %v3204 = vpack.c.b16 %v2904, %v2900
          %v3205 = vpack.c.b16 %v2905, %v2901
          %v3206 = vpack.c.b16 %v2906, %v2902
          %v3207 = vpack.c.b16 %v2911, %v2907
          %v3208 = vpack.c.b16 %v2912, %v2908
          %v3209 = vpack.c.b16 %v2913, %v2909
          %v3210 = vpack.c.b16 %v2914, %v2910
          %v3211 = vpack.c.b16 %v2919, %v2915
          %v3212 = vpack.c.b16 %v2920, %v2916
          %v3213 = vpack.c.b16 %v2921, %v2917
          %v3214 = vpack.c.b16 %v2922, %v2918
          %v3215 = vpack.c.b16 %v2927, %v2923
          %v3216 = vpack.c.b16 %v2928, %v2924
          %v3217 = vpack.c.b16 %v2929, %v2925
          %v3218 = vpack.c.b16 %v2930, %v2926
          %v3219 = vpack.c.b16 %v2935, %v2931
          %v3220 = vpack.c.b16 %v2936, %v2932
          %v3221 = vpack.c.b16 %v2937, %v2933
          %v3222 = vpack.c.b16 %v2938, %v2934
          %v3223 = vpack.c.b16 %v2943, %v2939
          %v3224 = vpack.c.b16 %v2944, %v2940
          %v3225 = vpack.c.b16 %v2945, %v2941
          %v3226 = vpack.c.b16 %v2946, %v2942
          %v3227 = vpack.c.b16 %v2951, %v2947
          %v3228 = vpack.c.b16 %v2952, %v2948
          %v3229 = vpack.c.b16 %v2953, %v2949
          %v3230 = vpack.c.b16 %v2954, %v2950
          %v3231 = vpack.c.b16 %v2959, %v2955
          %v3232 = vpack.c.b16 %v2960, %v2956
          %v3233 = vpack.c.b16 %v2961, %v2957
          %v3234 = vpack.c.b16 %v2962, %v2958
          %v3235 = vpack.c.b16 %v2967, %v2963
          %v3236 = vpack.c.b16 %v2968, %v2964
          %v3237 = vpack.c.b16 %v2969, %v2965
          %v3238 = vpack.c.b16 %v2970, %v2966
          %v3239 = vpack.c.b16 %v2975, %v2971
          %v3240 = vpack.c.b16 %v2976, %v2972
          %v3241 = vpack.c.b16 %v2977, %v2973
          %v3242 = vpack.c.b16 %v2978, %v2974
          %v3243 = vpack.c.b16 %v2983, %v2979
          %v3244 = vpack.c.b16 %v2984, %v2980
          %v3245 = vpack.c.b16 %v2985, %v2981
          %v3246 = vpack.c.b16 %v2986, %v2982
          %v3247 = vpack.c.b16 %v2991, %v2987
          %v3248 = vpack.c.b16 %v2992, %v2988
          %v3249 = vpack.c.b16 %v2993, %v2989
          %v3250 = vpack.c.b16 %v2994, %v2990
          %3507 = vmatprep.subr.bf16.mxu0 %v3024
          %3508 = vmatpush1.bf16.msra.mxu0 %v3023
          %3509 = vmatprep.subr.bf16.mxu0 %v3020
          %3510 = vmatpush1.bf16.msra.mxu0 %v3019
          %3511 = vmatprep.subr.bf16.mxu0 %v3016
          %3512 = vmatpush1.bf16.msra.mxu0 %v3015
          %3513 = vmatprep.subr.bf16.mxu0 %v3012
          %3514 = vmatpush1.bf16.msra.mxu0 %v3011
          %3515 = vmatprep.subr.bf16.mxu0 %v3008
          %3516 = vmatpush1.bf16.msra.mxu0 %v3007
          %3517 = vmatprep.subr.bf16.mxu0 %v3004
          %3518 = vmatpush1.bf16.msra.mxu0 %v3003
          %3519 = vmatprep.subr.bf16.mxu0 %v3000
          %3520 = vmatpush1.bf16.msra.mxu0 %v2999
          %3521 = vmatprep.subr.bf16.mxu0 %v2996
          %3522 = vmatpush1.bf16.msra.mxu0 %v2995
          %3523 = vmatprep.subr.bf16.mxu0 %v3056
          %3524 = vmatpush2.bf16.msra.mxu0 %v3055
          %3525 = vmatprep.subr.bf16.mxu0 %v3052
          %3526 = vmatpush2.bf16.msra.mxu0 %v3051
          %3527 = vmatprep.subr.bf16.mxu0 %v3048
          %3528 = vmatpush2.bf16.msra.mxu0 %v3047
          %3529 = vmatprep.subr.bf16.mxu0 %v3044
          %3530 = vmatpush2.bf16.msra.mxu0 %v3043
          %3531 = vmatprep.subr.bf16.mxu0 %v3040
          %3532 = vmatpush2.bf16.msra.mxu0 %v3039
          %3533 = vmatprep.subr.bf16.mxu0 %v3036
          %3534 = vmatpush2.bf16.msra.mxu0 %v3035
          %3535 = vmatprep.subr.bf16.mxu0 %v3032
          %3536 = vmatpush2.bf16.msra.mxu0 %v3031
          %3537 = vmatprep.subr.bf16.mxu0 %v3028
          %3538 = vmatpush2.bf16.msra.mxu0 %v3027
          %3539 = vmatprep.mubr.bf16.mxu0 %v1964
          %3540 = vmatmul.mubr.bf16.gmra.mxu0 %v1963
          %v3541 = vpop.f32.mrf.mxu0
          %v3542 = vadd.f32 0.0, %v3541
          %v3543 = vpop.f32.mrf.mxu0
          %v3544 = vadd.f32 0.0, %v3543
          %v3545 = vpop.f32.mrf.mxu0
          %v3546 = vpop.f32.mrf.mxu0
          %3547 = vdwg.mxu0
          %3548 = vmatprep.subr.bf16.mxu0 %v3088
          %3549 = vmatpush1.bf16.msra.mxu0 %v3087
          %3550 = vmatprep.subr.bf16.mxu0 %v3084
          %3551 = vmatpush1.bf16.msra.mxu0 %v3083
          %3552 = vmatprep.subr.bf16.mxu0 %v3080
          %3553 = vmatpush1.bf16.msra.mxu0 %v3079
          %3554 = vmatprep.subr.bf16.mxu0 %v3076
          %3555 = vmatpush1.bf16.msra.mxu0 %v3075
          %3556 = vmatprep.subr.bf16.mxu0 %v3072
          %3557 = vmatpush1.bf16.msra.mxu0 %v3071
          %3558 = vmatprep.subr.bf16.mxu0 %v3068
          %3559 = vmatpush1.bf16.msra.mxu0 %v3067
          %3560 = vmatprep.subr.bf16.mxu0 %v3064
          %3561 = vmatpush1.bf16.msra.mxu0 %v3063
          %3562 = vmatprep.subr.bf16.mxu0 %v3060
          %3563 = vmatpush1.bf16.msra.mxu0 %v3059
          %3564 = vmatprep.subr.bf16.mxu0 %v3120
          %3565 = vmatpush2.bf16.msra.mxu0 %v3119
          %3566 = vmatprep.subr.bf16.mxu0 %v3116
          %3567 = vmatpush2.bf16.msra.mxu0 %v3115
          %3568 = vmatprep.subr.bf16.mxu0 %v3112
          %3569 = vmatpush2.bf16.msra.mxu0 %v3111
          %3570 = vmatprep.subr.bf16.mxu0 %v3108
          %3571 = vmatpush2.bf16.msra.mxu0 %v3107
          %3572 = vmatprep.subr.bf16.mxu0 %v3104
          %3573 = vmatpush2.bf16.msra.mxu0 %v3103
          %3574 = vmatprep.subr.bf16.mxu0 %v3100
          %3575 = vmatpush2.bf16.msra.mxu0 %v3099
          %3576 = vmatprep.subr.bf16.mxu0 %v3096
          %3577 = vmatpush2.bf16.msra.mxu0 %v3095
          %3578 = vmatprep.subr.bf16.mxu0 %v3092
          %3579 = vmatpush2.bf16.msra.mxu0 %v3091
          %3580 = vmatprep.mubr.bf16.mxu0 %v1966
          %3581 = vmatmul.mubr.bf16.gmra.mxu0 %v1965
          %v3582 = vpop.f32.mrf.mxu0
          %v3583 = vadd.f32 %v3542, %v3582
          %v3584 = vpop.f32.mrf.mxu0
          %v3585 = vadd.f32 %v3544, %v3584
          %v3586 = vpop.f32.mrf.mxu0
          %v3587 = vpop.f32.mrf.mxu0
          %3588 = vdwg.mxu0
          %3589 = vmatprep.subr.bf16.mxu0 %v3152
          %3590 = vmatpush1.bf16.msra.mxu0 %v3151
          %3591 = vmatprep.subr.bf16.mxu0 %v3148
          %3592 = vmatpush1.bf16.msra.mxu0 %v3147
          %3593 = vmatprep.subr.bf16.mxu0 %v3144
          %3594 = vmatpush1.bf16.msra.mxu0 %v3143
          %3595 = vmatprep.subr.bf16.mxu0 %v3140
          %3596 = vmatpush1.bf16.msra.mxu0 %v3139
          %3597 = vmatprep.subr.bf16.mxu0 %v3136
          %3598 = vmatpush1.bf16.msra.mxu0 %v3135
          %3599 = vmatprep.subr.bf16.mxu0 %v3132
          %3600 = vmatpush1.bf16.msra.mxu0 %v3131
          %3601 = vmatprep.subr.bf16.mxu0 %v3128
          %3602 = vmatpush1.bf16.msra.mxu0 %v3127
          %3603 = vmatprep.subr.bf16.mxu0 %v3124
          %3604 = vmatpush1.bf16.msra.mxu0 %v3123
          %3605 = vmatprep.subr.bf16.mxu0 %v3184
          %3606 = vmatpush2.bf16.msra.mxu0 %v3183
          %3607 = vmatprep.subr.bf16.mxu0 %v3180
          %3608 = vmatpush2.bf16.msra.mxu0 %v3179
          %3609 = vmatprep.subr.bf16.mxu0 %v3176
          %3610 = vmatpush2.bf16.msra.mxu0 %v3175
          %3611 = vmatprep.subr.bf16.mxu0 %v3172
          %3612 = vmatpush2.bf16.msra.mxu0 %v3171
          %3613 = vmatprep.subr.bf16.mxu0 %v3168
          %3614 = vmatpush2.bf16.msra.mxu0 %v3167
          %3615 = vmatprep.subr.bf16.mxu0 %v3164
          %3616 = vmatpush2.bf16.msra.mxu0 %v3163
          %3617 = vmatprep.subr.bf16.mxu0 %v3160
          %3618 = vmatpush2.bf16.msra.mxu0 %v3159
          %3619 = vmatprep.subr.bf16.mxu0 %v3156
          %3620 = vmatpush2.bf16.msra.mxu0 %v3155
          %3621 = vmatprep.mubr.bf16.mxu0 %v1968
          %3622 = vmatmul.mubr.bf16.gmra.mxu0 %v1967
          %v3623 = vpop.f32.mrf.mxu0
          %v3624 = vadd.f32 %v3583, %v3623
          %v3625 = vpop.f32.mrf.mxu0
          %v3626 = vadd.f32 %v3585, %v3625
          %v3627 = vpop.f32.mrf.mxu0
          %v3628 = vpop.f32.mrf.mxu0
          %3629 = vdwg.mxu0
          %3630 = vmatprep.subr.bf16.mxu0 %v3216
          %3631 = vmatpush1.bf16.msra.mxu0 %v3215
          %3632 = vmatprep.subr.bf16.mxu0 %v3212
          %3633 = vmatpush1.bf16.msra.mxu0 %v3211
          %3634 = vmatprep.subr.bf16.mxu0 %v3208
          %3635 = vmatpush1.bf16.msra.mxu0 %v3207
          %3636 = vmatprep.subr.bf16.mxu0 %v3204
          %3637 = vmatpush1.bf16.msra.mxu0 %v3203
          %3638 = vmatprep.subr.bf16.mxu0 %v3200
          %3639 = vmatpush1.bf16.msra.mxu0 %v3199
          %3640 = vmatprep.subr.bf16.mxu0 %v3196
          %3641 = vmatpush1.bf16.msra.mxu0 %v3195
          %3642 = vmatprep.subr.bf16.mxu0 %v3192
          %3643 = vmatpush1.bf16.msra.mxu0 %v3191
          %3644 = vmatprep.subr.bf16.mxu0 %v3188
          %3645 = vmatpush1.bf16.msra.mxu0 %v3187
          %3646 = vmatprep.subr.bf16.mxu0 %v3248
          %3647 = vmatpush2.bf16.msra.mxu0 %v3247
          %3648 = vmatprep.subr.bf16.mxu0 %v3244
          %3649 = vmatpush2.bf16.msra.mxu0 %v3243
          %3650 = vmatprep.subr.bf16.mxu0 %v3240
          %3651 = vmatpush2.bf16.msra.mxu0 %v3239
          %3652 = vmatprep.subr.bf16.mxu0 %v3236
          %3653 = vmatpush2.bf16.msra.mxu0 %v3235
          %3654 = vmatprep.subr.bf16.mxu0 %v3232
          %3655 = vmatpush2.bf16.msra.mxu0 %v3231
          %3656 = vmatprep.subr.bf16.mxu0 %v3228
          %3657 = vmatpush2.bf16.msra.mxu0 %v3227
          %3658 = vmatprep.subr.bf16.mxu0 %v3224
          %3659 = vmatpush2.bf16.msra.mxu0 %v3223
          %3660 = vmatprep.subr.bf16.mxu0 %v3220
          %3661 = vmatpush2.bf16.msra.mxu0 %v3219
          %3662 = vmatprep.mubr.bf16.mxu0 %v1970
          %3663 = vmatmul.mubr.bf16.gmra.mxu0 %v1969
          %v3664 = vpop.f32.mrf.mxu0
          %v3665 = vadd.f32 %v3624, %v3664
          %v3666 = vpop.f32.mrf.mxu0
          %v3667 = vadd.f32 %v3626, %v3666
          %v3668 = vpop.f32.mrf.mxu0
          %v3669 = vpop.f32.mrf.mxu0
          %3670 = vdwg.mxu0
          %3671 = vmatprep.subr.bf16.mxu0 %v3026
          %3672 = vmatpush1.bf16.msra.mxu0 %v3025
          %3673 = vmatprep.subr.bf16.mxu0 %v3022
          %3674 = vmatpush1.bf16.msra.mxu0 %v3021
          %3675 = vmatprep.subr.bf16.mxu0 %v3018
          %3676 = vmatpush1.bf16.msra.mxu0 %v3017
          %3677 = vmatprep.subr.bf16.mxu0 %v3014
          %3678 = vmatpush1.bf16.msra.mxu0 %v3013
          %3679 = vmatprep.subr.bf16.mxu0 %v3010
          %3680 = vmatpush1.bf16.msra.mxu0 %v3009
          %3681 = vmatprep.subr.bf16.mxu0 %v3006
          %3682 = vmatpush1.bf16.msra.mxu0 %v3005
          %3683 = vmatprep.subr.bf16.mxu0 %v3002
          %3684 = vmatpush1.bf16.msra.mxu0 %v3001
          %3685 = vmatprep.subr.bf16.mxu0 %v2998
          %3686 = vmatpush1.bf16.msra.mxu0 %v2997
          %3687 = vmatprep.subr.bf16.mxu0 %v3058
          %3688 = vmatpush2.bf16.msra.mxu0 %v3057
          %3689 = vmatprep.subr.bf16.mxu0 %v3054
          %3690 = vmatpush2.bf16.msra.mxu0 %v3053
          %3691 = vmatprep.subr.bf16.mxu0 %v3050
          %3692 = vmatpush2.bf16.msra.mxu0 %v3049
          %3693 = vmatprep.subr.bf16.mxu0 %v3046
          %3694 = vmatpush2.bf16.msra.mxu0 %v3045
          %3695 = vmatprep.subr.bf16.mxu0 %v3042
          %3696 = vmatpush2.bf16.msra.mxu0 %v3041
          %3697 = vmatprep.subr.bf16.mxu0 %v3038
          %3698 = vmatpush2.bf16.msra.mxu0 %v3037
          %3699 = vmatprep.subr.bf16.mxu0 %v3034
          %3700 = vmatpush2.bf16.msra.mxu0 %v3033
          %3701 = vmatprep.subr.bf16.mxu0 %v3030
          %3702 = vmatpush2.bf16.msra.mxu0 %v3029
          %3703 = vmatprep.mubr.bf16.mxu0 %v1964
          %3704 = vmatmul.mubr.bf16.gmra.mxu0 %v1963
          %v3705 = vpop.f32.mrf.mxu0
          %v3706 = vadd.f32 0.0, %v3705
          %v3707 = vpop.f32.mrf.mxu0
          %v3708 = vadd.f32 0.0, %v3707
          %v3709 = vpop.f32.mrf.mxu0
          %v3710 = vpop.f32.mrf.mxu0
          %3711 = vdwg.mxu0
          %3712 = vmatprep.subr.bf16.mxu0 %v3090
          %3713 = vmatpush1.bf16.msra.mxu0 %v3089
          %3714 = vmatprep.subr.bf16.mxu0 %v3086
          %3715 = vmatpush1.bf16.msra.mxu0 %v3085
          %3716 = vmatprep.subr.bf16.mxu0 %v3082
          %3717 = vmatpush1.bf16.msra.mxu0 %v3081
          %3718 = vmatprep.subr.bf16.mxu0 %v3078
          %3719 = vmatpush1.bf16.msra.mxu0 %v3077
          %3720 = vmatprep.subr.bf16.mxu0 %v3074
          %3721 = vmatpush1.bf16.msra.mxu0 %v3073
          %3722 = vmatprep.subr.bf16.mxu0 %v3070
          %3723 = vmatpush1.bf16.msra.mxu0 %v3069
          %3724 = vmatprep.subr.bf16.mxu0 %v3066
          %3725 = vmatpush1.bf16.msra.mxu0 %v3065
          %3726 = vmatprep.subr.bf16.mxu0 %v3062
          %3727 = vmatpush1.bf16.msra.mxu0 %v3061
          %3728 = vmatprep.subr.bf16.mxu0 %v3122
          %3729 = vmatpush2.bf16.msra.mxu0 %v3121
          %3730 = vmatprep.subr.bf16.mxu0 %v3118
          %3731 = vmatpush2.bf16.msra.mxu0 %v3117
          %3732 = vmatprep.subr.bf16.mxu0 %v3114
          %3733 = vmatpush2.bf16.msra.mxu0 %v3113
          %3734 = vmatprep.subr.bf16.mxu0 %v3110
          %3735 = vmatpush2.bf16.msra.mxu0 %v3109
          %3736 = vmatprep.subr.bf16.mxu0 %v3106
          %3737 = vmatpush2.bf16.msra.mxu0 %v3105
          %3738 = vmatprep.subr.bf16.mxu0 %v3102
          %3739 = vmatpush2.bf16.msra.mxu0 %v3101
          %3740 = vmatprep.subr.bf16.mxu0 %v3098
          %3741 = vmatpush2.bf16.msra.mxu0 %v3097
          %3742 = vmatprep.subr.bf16.mxu0 %v3094
          %3743 = vmatpush2.bf16.msra.mxu0 %v3093
          %3744 = vmatprep.mubr.bf16.mxu0 %v1966
          %3745 = vmatmul.mubr.bf16.gmra.mxu0 %v1965
          %v3746 = vpop.f32.mrf.mxu0
          %v3747 = vadd.f32 %v3706, %v3746
          %v3748 = vpop.f32.mrf.mxu0
          %v3749 = vadd.f32 %v3708, %v3748
          %v3750 = vpop.f32.mrf.mxu0
          %v3751 = vpop.f32.mrf.mxu0
          %3752 = vdwg.mxu0
          %3753 = vmatprep.subr.bf16.mxu0 %v3154
          %3754 = vmatpush1.bf16.msra.mxu0 %v3153
          %3755 = vmatprep.subr.bf16.mxu0 %v3150
          %3756 = vmatpush1.bf16.msra.mxu0 %v3149
          %3757 = vmatprep.subr.bf16.mxu0 %v3146
          %3758 = vmatpush1.bf16.msra.mxu0 %v3145
          %3759 = vmatprep.subr.bf16.mxu0 %v3142
          %3760 = vmatpush1.bf16.msra.mxu0 %v3141
          %3761 = vmatprep.subr.bf16.mxu0 %v3138
          %3762 = vmatpush1.bf16.msra.mxu0 %v3137
          %3763 = vmatprep.subr.bf16.mxu0 %v3134
          %3764 = vmatpush1.bf16.msra.mxu0 %v3133
          %3765 = vmatprep.subr.bf16.mxu0 %v3130
          %3766 = vmatpush1.bf16.msra.mxu0 %v3129
          %3767 = vmatprep.subr.bf16.mxu0 %v3126
          %3768 = vmatpush1.bf16.msra.mxu0 %v3125
          %3769 = vmatprep.subr.bf16.mxu0 %v3186
          %3770 = vmatpush2.bf16.msra.mxu0 %v3185
          %3771 = vmatprep.subr.bf16.mxu0 %v3182
          %3772 = vmatpush2.bf16.msra.mxu0 %v3181
          %3773 = vmatprep.subr.bf16.mxu0 %v3178
          %3774 = vmatpush2.bf16.msra.mxu0 %v3177
          %3775 = vmatprep.subr.bf16.mxu0 %v3174
          %3776 = vmatpush2.bf16.msra.mxu0 %v3173
          %3777 = vmatprep.subr.bf16.mxu0 %v3170
          %3778 = vmatpush2.bf16.msra.mxu0 %v3169
          %3779 = vmatprep.subr.bf16.mxu0 %v3166
          %3780 = vmatpush2.bf16.msra.mxu0 %v3165
          %3781 = vmatprep.subr.bf16.mxu0 %v3162
          %3782 = vmatpush2.bf16.msra.mxu0 %v3161
          %3783 = vmatprep.subr.bf16.mxu0 %v3158
          %3784 = vmatpush2.bf16.msra.mxu0 %v3157
          %3785 = vmatprep.mubr.bf16.mxu0 %v1968
          %3786 = vmatmul.mubr.bf16.gmra.mxu0 %v1967
          %v3787 = vpop.f32.mrf.mxu0
          %v3788 = vadd.f32 %v3747, %v3787
          %v3789 = vpop.f32.mrf.mxu0
          %v3790 = vadd.f32 %v3749, %v3789
          %v3791 = vpop.f32.mrf.mxu0
          %v3792 = vpop.f32.mrf.mxu0
          %3793 = vdwg.mxu0
          %3794 = vmatprep.subr.bf16.mxu0 %v3218
          %3795 = vmatpush1.bf16.msra.mxu0 %v3217
          %3796 = vmatprep.subr.bf16.mxu0 %v3214
          %3797 = vmatpush1.bf16.msra.mxu0 %v3213
          %3798 = vmatprep.subr.bf16.mxu0 %v3210
          %3799 = vmatpush1.bf16.msra.mxu0 %v3209
          %3800 = vmatprep.subr.bf16.mxu0 %v3206
          %3801 = vmatpush1.bf16.msra.mxu0 %v3205
          %3802 = vmatprep.subr.bf16.mxu0 %v3202
          %3803 = vmatpush1.bf16.msra.mxu0 %v3201
          %3804 = vmatprep.subr.bf16.mxu0 %v3198
          %3805 = vmatpush1.bf16.msra.mxu0 %v3197
          %3806 = vmatprep.subr.bf16.mxu0 %v3194
          %3807 = vmatpush1.bf16.msra.mxu0 %v3193
          %3808 = vmatprep.subr.bf16.mxu0 %v3190
          %3809 = vmatpush1.bf16.msra.mxu0 %v3189
          %3810 = vmatprep.subr.bf16.mxu0 %v3250
          %3811 = vmatpush2.bf16.msra.mxu0 %v3249
          %3812 = vmatprep.subr.bf16.mxu0 %v3246
          %3813 = vmatpush2.bf16.msra.mxu0 %v3245
          %3814 = vmatprep.subr.bf16.mxu0 %v3242
          %3815 = vmatpush2.bf16.msra.mxu0 %v3241
          %3816 = vmatprep.subr.bf16.mxu0 %v3238
          %3817 = vmatpush2.bf16.msra.mxu0 %v3237
          %3818 = vmatprep.subr.bf16.mxu0 %v3234
          %3819 = vmatpush2.bf16.msra.mxu0 %v3233
          %3820 = vmatprep.subr.bf16.mxu0 %v3230
          %3821 = vmatpush2.bf16.msra.mxu0 %v3229
          %3822 = vmatprep.subr.bf16.mxu0 %v3226
          %3823 = vmatpush2.bf16.msra.mxu0 %v3225
          %3824 = vmatprep.subr.bf16.mxu0 %v3222
          %3825 = vmatpush2.bf16.msra.mxu0 %v3221
          %3826 = vmatprep.mubr.bf16.mxu0 %v1970
          %3827 = vmatmul.mubr.bf16.gmra.mxu0 %v1969
          %v3828 = vpop.f32.mrf.mxu0
          %v3829 = vadd.f32 %v3788, %v3828
          %v3830 = vpop.f32.mrf.mxu0
          %v3831 = vadd.f32 %v3790, %v3830
          %v3832 = vpop.f32.mrf.mxu0
          %v3833 = vpop.f32.mrf.mxu0
          %3834 = vdwg.mxu0
          %v3835 = vld [vmem:[%s11] sm:$0xf]
          %v3837 = vlaneseq
          %v3838 = vshrl.u32 %v3837, 7
          %v3839 = vsub.s32 0, %v3838
          %v3840 = vrot.slane %v3835, %v3839
          %v3841 = vlaneseq
          %v3842 = vshrl.u32 %v3841, 7
          %v3843 = vsub.s32 1, %v3842
          %v3844 = vrot.slane %v3835, %v3843
          %v3845 = vlaneseq
          %v3846 = vshrl.u32 %v3845, 7
          %v3847 = vsub.s32 2, %v3846
          %v3848 = vrot.slane %v3835, %v3847
          %v3849 = vlaneseq
          %v3850 = vshrl.u32 %v3849, 7
          %v3851 = vsub.s32 3, %v3850
          %v3852 = vrot.slane %v3835, %v3851
          %v3857 = vmul.f32 %v3665, %v3840
          %v3858 = vmul.f32 %v3667, %v3844
          %v3859 = vmul.f32 %v3829, %v3848
          %v3860 = vmul.f32 %v3831, %v3852
          %v3861 = vld [vmem:[#allocation18] sm:$0xf]
          %v3863 = vlaneseq
          %v3864 = vshrl.u32 %v3863, 7
          %v3865 = vsub.s32 0, %v3864
          %v3866 = vrot.slane %v3861, %v3865
          %v3867 = vlaneseq
          %v3868 = vshrl.u32 %v3867, 7
          %v3869 = vsub.s32 1, %v3868
          %v3870 = vrot.slane %v3861, %v3869
          %v3871 = vlaneseq
          %v3872 = vshrl.u32 %v3871, 7
          %v3873 = vsub.s32 2, %v3872
          %v3874 = vrot.slane %v3861, %v3873
          %v3875 = vlaneseq
          %v3876 = vshrl.u32 %v3875, 7
          %v3877 = vsub.s32 3, %v3876
          %v3878 = vrot.slane %v3861, %v3877
          %v3883 = vadd.f32 %v3857, %v3866
          %v3884 = vadd.f32 %v3858, %v3870
          %v3885 = vadd.f32 %v3859, %v3874
          %v3886 = vadd.f32 %v3860, %v3878
          %v3887 = vmax.f32 %v3883, 0.0
          %v3888 = vmax.f32 %v3884, 0.0
          %v3889 = vmax.f32 %v3885, 0.0
          %v3890 = vmax.f32 %v3886, 0.0
          %v3891 = vpack.c.bf16 %v3887, %v3887
          %v3892 = vpack.c.bf16 %v3888, %v3888
          %v3893 = vpack.c.bf16 %v3889, %v3889
          %v3894 = vpack.c.bf16 %v3890, %v3890
          %v3895 = vld [vmem:[#allocation20] sm:$0xff]
          %v3896 = vld [vmem:[#allocation20 + $0x8] sm:$0xff]
          %v3897 = vld [vmem:[#allocation20 + $0x10] sm:$0xff]
          %v3898 = vld [vmem:[#allocation20 + $0x18] sm:$0xff]
          %v3899 = vld [vmem:[#allocation20 + $0x20] sm:$0xff]
          %v3900 = vld [vmem:[#allocation20 + $0x28] sm:$0xff]
          %v3901 = vld [vmem:[#allocation20 + $0x30] sm:$0xff]
          %v3902 = vld [vmem:[#allocation20 + $0x38] sm:$0xff]
          %v3903 = vld [vmem:[#allocation20 + $0x40] sm:$0xff]
          %v3904 = vld [vmem:[#allocation20 + $0x48] sm:$0xff]
          %v3905 = vld [vmem:[#allocation20 + $0x50] sm:$0xff]
          %v3906 = vld [vmem:[#allocation20 + $0x58] sm:$0xff]
          %v3907 = vld [vmem:[#allocation20 + $0x60] sm:$0xff]
          %v3908 = vld [vmem:[#allocation20 + $0x68] sm:$0xff]
          %v3909 = vld [vmem:[#allocation20 + $0x70] sm:$0xff]
          %v3910 = vld [vmem:[#allocation20 + $0x78] sm:$0xff]
          %v3911 = vld [vmem:[#allocation20 + $0x80] sm:$0xff]
          %v3912 = vld [vmem:[#allocation20 + $0x88] sm:$0xff]
          %v3913 = vld [vmem:[#allocation20 + $0x90] sm:$0xff]
          %v3914 = vld [vmem:[#allocation20 + $0x98] sm:$0xff]
          %v3915 = vld [vmem:[#allocation20 + $0xa0] sm:$0xff]
          %v3916 = vld [vmem:[#allocation20 + $0xa8] sm:$0xff]
          %v3917 = vld [vmem:[#allocation20 + $0xb0] sm:$0xff]
          %v3918 = vld [vmem:[#allocation20 + $0xb8] sm:$0xff]
          %v3919 = vld [vmem:[#allocation20 + $0xc0] sm:$0xff]
          %v3920 = vld [vmem:[#allocation20 + $0xc8] sm:$0xff]
          %v3921 = vld [vmem:[#allocation20 + $0xd0] sm:$0xff]
          %v3922 = vld [vmem:[#allocation20 + $0xd8] sm:$0xff]
          %v3923 = vld [vmem:[#allocation20 + $0xe0] sm:$0xff]
          %v3924 = vld [vmem:[#allocation20 + $0xe8] sm:$0xff]
          %v3925 = vld [vmem:[#allocation20 + $0xf0] sm:$0xff]
          %v3926 = vld [vmem:[#allocation20 + $0xf8] sm:$0xff]
          %v3927 = vld [vmem:[#allocation20 + $0x100] sm:$0xff]
          %v3928 = vld [vmem:[#allocation20 + $0x108] sm:$0xff]
          %v3929 = vld [vmem:[#allocation20 + $0x110] sm:$0xff]
          %v3930 = vld [vmem:[#allocation20 + $0x118] sm:$0xff]
          %v3931 = vld [vmem:[#allocation20 + $0x120] sm:$0xff]
          %v3932 = vld [vmem:[#allocation20 + $0x128] sm:$0xff]
          %v3933 = vld [vmem:[#allocation20 + $0x130] sm:$0xff]
          %v3934 = vld [vmem:[#allocation20 + $0x138] sm:$0xff]
          %v3935 = vld [vmem:[#allocation20 + $0x140] sm:$0xff]
          %v3936 = vld [vmem:[#allocation20 + $0x148] sm:$0xff]
          %v3937 = vld [vmem:[#allocation20 + $0x150] sm:$0xff]
          %v3938 = vld [vmem:[#allocation20 + $0x158] sm:$0xff]
          %v3939 = vld [vmem:[#allocation20 + $0x160] sm:$0xff]
          %v3940 = vld [vmem:[#allocation20 + $0x168] sm:$0xff]
          %v3941 = vld [vmem:[#allocation20 + $0x170] sm:$0xff]
          %v3942 = vld [vmem:[#allocation20 + $0x178] sm:$0xff]
          %v3943 = vld [vmem:[#allocation20 + $0x180] sm:$0xff]
          %v3944 = vld [vmem:[#allocation20 + $0x188] sm:$0xff]
          %v3945 = vld [vmem:[#allocation20 + $0x190] sm:$0xff]
          %v3946 = vld [vmem:[#allocation20 + $0x198] sm:$0xff]
          %v3947 = vld [vmem:[#allocation20 + $0x1a0] sm:$0xff]
          %v3948 = vld [vmem:[#allocation20 + $0x1a8] sm:$0xff]
          %v3949 = vld [vmem:[#allocation20 + $0x1b0] sm:$0xff]
          %v3950 = vld [vmem:[#allocation20 + $0x1b8] sm:$0xff]
          %v3951 = vld [vmem:[#allocation20 + $0x1c0] sm:$0xff]
          %v3952 = vld [vmem:[#allocation20 + $0x1c8] sm:$0xff]
          %v3953 = vld [vmem:[#allocation20 + $0x1d0] sm:$0xff]
          %v3954 = vld [vmem:[#allocation20 + $0x1d8] sm:$0xff]
          %v3955 = vld [vmem:[#allocation20 + $0x1e0] sm:$0xff]
          %v3956 = vld [vmem:[#allocation20 + $0x1e8] sm:$0xff]
          %v3957 = vld [vmem:[#allocation20 + $0x1f0] sm:$0xff]
          %v3958 = vld [vmem:[#allocation20 + $0x1f8] sm:$0xff]
          %v4023 = vunpack.c.l.b16 %v3895
          %v4024 = vunpack.c.h.b16 %v3895
          %v4025 = vunpack.c.l.b16 %v3896
          %v4026 = vunpack.c.h.b16 %v3896
          %v4027 = vunpack.c.l.b16 %v3897
          %v4028 = vunpack.c.h.b16 %v3897
          %v4029 = vunpack.c.l.b16 %v3898
          %v4030 = vunpack.c.h.b16 %v3898
          %v4031 = vunpack.c.l.b16 %v3899
          %v4032 = vunpack.c.h.b16 %v3899
          %v4033 = vunpack.c.l.b16 %v3900
          %v4034 = vunpack.c.h.b16 %v3900
          %v4035 = vunpack.c.l.b16 %v3901
          %v4036 = vunpack.c.h.b16 %v3901
          %v4037 = vunpack.c.l.b16 %v3902
          %v4038 = vunpack.c.h.b16 %v3902
          %v4039 = vunpack.c.l.b16 %v3903
          %v4040 = vunpack.c.h.b16 %v3903
          %v4041 = vunpack.c.l.b16 %v3904
          %v4042 = vunpack.c.h.b16 %v3904
          %v4043 = vunpack.c.l.b16 %v3905
          %v4044 = vunpack.c.h.b16 %v3905
          %v4045 = vunpack.c.l.b16 %v3906
          %v4046 = vunpack.c.h.b16 %v3906
          %v4047 = vunpack.c.l.b16 %v3907
          %v4048 = vunpack.c.h.b16 %v3907
          %v4049 = vunpack.c.l.b16 %v3908
          %v4050 = vunpack.c.h.b16 %v3908
          %v4051 = vunpack.c.l.b16 %v3909
          %v4052 = vunpack.c.h.b16 %v3909
          %v4053 = vunpack.c.l.b16 %v3910
          %v4054 = vunpack.c.h.b16 %v3910
          %v4055 = vunpack.c.l.b16 %v3911
          %v4056 = vunpack.c.h.b16 %v3911
          %v4057 = vunpack.c.l.b16 %v3912
          %v4058 = vunpack.c.h.b16 %v3912
          %v4059 = vunpack.c.l.b16 %v3913
          %v4060 = vunpack.c.h.b16 %v3913
          %v4061 = vunpack.c.l.b16 %v3914
          %v4062 = vunpack.c.h.b16 %v3914
          %v4063 = vunpack.c.l.b16 %v3915
          %v4064 = vunpack.c.h.b16 %v3915
          %v4065 = vunpack.c.l.b16 %v3916
          %v4066 = vunpack.c.h.b16 %v3916
          %v4067 = vunpack.c.l.b16 %v3917
          %v4068 = vunpack.c.h.b16 %v3917
          %v4069 = vunpack.c.l.b16 %v3918
          %v4070 = vunpack.c.h.b16 %v3918
          %v4071 = vunpack.c.l.b16 %v3919
          %v4072 = vunpack.c.h.b16 %v3919
          %v4073 = vunpack.c.l.b16 %v3920
          %v4074 = vunpack.c.h.b16 %v3920
          %v4075 = vunpack.c.l.b16 %v3921
          %v4076 = vunpack.c.h.b16 %v3921
          %v4077 = vunpack.c.l.b16 %v3922
          %v4078 = vunpack.c.h.b16 %v3922
          %v4079 = vunpack.c.l.b16 %v3923
          %v4080 = vunpack.c.h.b16 %v3923
          %v4081 = vunpack.c.l.b16 %v3924
          %v4082 = vunpack.c.h.b16 %v3924
          %v4083 = vunpack.c.l.b16 %v3925
          %v4084 = vunpack.c.h.b16 %v3925
          %v4085 = vunpack.c.l.b16 %v3926
          %v4086 = vunpack.c.h.b16 %v3926
          %v4087 = vunpack.c.l.b16 %v3927
          %v4088 = vunpack.c.h.b16 %v3927
          %v4089 = vunpack.c.l.b16 %v3928
          %v4090 = vunpack.c.h.b16 %v3928
          %v4091 = vunpack.c.l.b16 %v3929
          %v4092 = vunpack.c.h.b16 %v3929
          %v4093 = vunpack.c.l.b16 %v3930
          %v4094 = vunpack.c.h.b16 %v3930
          %v4095 = vunpack.c.l.b16 %v3931
          %v4096 = vunpack.c.h.b16 %v3931
          %v4097 = vunpack.c.l.b16 %v3932
          %v4098 = vunpack.c.h.b16 %v3932
          %v4099 = vunpack.c.l.b16 %v3933
          %v4100 = vunpack.c.h.b16 %v3933
          %v4101 = vunpack.c.l.b16 %v3934
          %v4102 = vunpack.c.h.b16 %v3934
          %v4103 = vunpack.c.l.b16 %v3935
          %v4104 = vunpack.c.h.b16 %v3935
          %v4105 = vunpack.c.l.b16 %v3936
          %v4106 = vunpack.c.h.b16 %v3936
          %v4107 = vunpack.c.l.b16 %v3937
          %v4108 = vunpack.c.h.b16 %v3937
          %v4109 = vunpack.c.l.b16 %v3938
          %v4110 = vunpack.c.h.b16 %v3938
          %v4111 = vunpack.c.l.b16 %v3939
          %v4112 = vunpack.c.h.b16 %v3939
          %v4113 = vunpack.c.l.b16 %v3940
          %v4114 = vunpack.c.h.b16 %v3940
          %v4115 = vunpack.c.l.b16 %v3941
          %v4116 = vunpack.c.h.b16 %v3941
          %v4117 = vunpack.c.l.b16 %v3942
          %v4118 = vunpack.c.h.b16 %v3942
          %v4119 = vunpack.c.l.b16 %v3943
          %v4120 = vunpack.c.h.b16 %v3943
          %v4121 = vunpack.c.l.b16 %v3944
          %v4122 = vunpack.c.h.b16 %v3944
          %v4123 = vunpack.c.l.b16 %v3945
          %v4124 = vunpack.c.h.b16 %v3945
          %v4125 = vunpack.c.l.b16 %v3946
          %v4126 = vunpack.c.h.b16 %v3946
          %v4127 = vunpack.c.l.b16 %v3947
          %v4128 = vunpack.c.h.b16 %v3947
          %v4129 = vunpack.c.l.b16 %v3948
          %v4130 = vunpack.c.h.b16 %v3948
          %v4131 = vunpack.c.l.b16 %v3949
          %v4132 = vunpack.c.h.b16 %v3949
          %v4133 = vunpack.c.l.b16 %v3950
          %v4134 = vunpack.c.h.b16 %v3950
          %v4135 = vunpack.c.l.b16 %v3951
          %v4136 = vunpack.c.h.b16 %v3951
          %v4137 = vunpack.c.l.b16 %v3952
          %v4138 = vunpack.c.h.b16 %v3952
          %v4139 = vunpack.c.l.b16 %v3953
          %v4140 = vunpack.c.h.b16 %v3953
          %v4141 = vunpack.c.l.b16 %v3954
          %v4142 = vunpack.c.h.b16 %v3954
          %v4143 = vunpack.c.l.b16 %v3955
          %v4144 = vunpack.c.h.b16 %v3955
          %v4145 = vunpack.c.l.b16 %v3956
          %v4146 = vunpack.c.h.b16 %v3956
          %v4147 = vunpack.c.l.b16 %v3957
          %v4148 = vunpack.c.h.b16 %v3957
          %v4149 = vunpack.c.l.b16 %v3958
          %v4150 = vunpack.c.h.b16 %v3958
          %v4151 = vpack.c.b16 %v4025, %v4023
          %v4152 = vpack.c.b16 %v4026, %v4024
          %v4153 = vpack.c.b16 %v4029, %v4027
          %v4154 = vpack.c.b16 %v4030, %v4028
          %v4155 = vpack.c.b16 %v4033, %v4031
          %v4156 = vpack.c.b16 %v4034, %v4032
          %v4157 = vpack.c.b16 %v4037, %v4035
          %v4158 = vpack.c.b16 %v4038, %v4036
          %v4159 = vpack.c.b16 %v4041, %v4039
          %v4160 = vpack.c.b16 %v4042, %v4040
          %v4161 = vpack.c.b16 %v4045, %v4043
          %v4162 = vpack.c.b16 %v4046, %v4044
          %v4163 = vpack.c.b16 %v4049, %v4047
          %v4164 = vpack.c.b16 %v4050, %v4048
          %v4165 = vpack.c.b16 %v4053, %v4051
          %v4166 = vpack.c.b16 %v4054, %v4052
          %v4167 = vpack.c.b16 %v4057, %v4055
          %v4168 = vpack.c.b16 %v4058, %v4056
          %v4169 = vpack.c.b16 %v4061, %v4059
          %v4170 = vpack.c.b16 %v4062, %v4060
          %v4171 = vpack.c.b16 %v4065, %v4063
          %v4172 = vpack.c.b16 %v4066, %v4064
          %v4173 = vpack.c.b16 %v4069, %v4067
          %v4174 = vpack.c.b16 %v4070, %v4068
          %v4175 = vpack.c.b16 %v4073, %v4071
          %v4176 = vpack.c.b16 %v4074, %v4072
          %v4177 = vpack.c.b16 %v4077, %v4075
          %v4178 = vpack.c.b16 %v4078, %v4076
          %v4179 = vpack.c.b16 %v4081, %v4079
          %v4180 = vpack.c.b16 %v4082, %v4080
          %v4181 = vpack.c.b16 %v4085, %v4083
          %v4182 = vpack.c.b16 %v4086, %v4084
          %v4183 = vpack.c.b16 %v4089, %v4087
          %v4184 = vpack.c.b16 %v4090, %v4088
          %v4185 = vpack.c.b16 %v4093, %v4091
          %v4186 = vpack.c.b16 %v4094, %v4092
          %v4187 = vpack.c.b16 %v4097, %v4095
          %v4188 = vpack.c.b16 %v4098, %v4096
          %v4189 = vpack.c.b16 %v4101, %v4099
          %v4190 = vpack.c.b16 %v4102, %v4100
          %v4191 = vpack.c.b16 %v4105, %v4103
          %v4192 = vpack.c.b16 %v4106, %v4104
          %v4193 = vpack.c.b16 %v4109, %v4107
          %v4194 = vpack.c.b16 %v4110, %v4108
          %v4195 = vpack.c.b16 %v4113, %v4111
          %v4196 = vpack.c.b16 %v4114, %v4112
          %v4197 = vpack.c.b16 %v4117, %v4115
          %v4198 = vpack.c.b16 %v4118, %v4116
          %v4199 = vpack.c.b16 %v4121, %v4119
          %v4200 = vpack.c.b16 %v4122, %v4120
          %v4201 = vpack.c.b16 %v4125, %v4123
          %v4202 = vpack.c.b16 %v4126, %v4124
          %v4203 = vpack.c.b16 %v4129, %v4127
          %v4204 = vpack.c.b16 %v4130, %v4128
          %v4205 = vpack.c.b16 %v4133, %v4131
          %v4206 = vpack.c.b16 %v4134, %v4132
          %v4207 = vpack.c.b16 %v4137, %v4135
          %v4208 = vpack.c.b16 %v4138, %v4136
          %v4209 = vpack.c.b16 %v4141, %v4139
          %v4210 = vpack.c.b16 %v4142, %v4140
          %v4211 = vpack.c.b16 %v4145, %v4143
          %v4212 = vpack.c.b16 %v4146, %v4144
          %v4213 = vpack.c.b16 %v4149, %v4147
          %v4214 = vpack.c.b16 %v4150, %v4148
          %4279 = vmatprep.subr.bf16.mxu0 %v4166
          %4280 = vmatpush1.bf16.msra.mxu0 %v4165
          %4281 = vmatprep.subr.bf16.mxu0 %v4164
          %4282 = vmatpush1.bf16.msra.mxu0 %v4163
          %4283 = vmatprep.subr.bf16.mxu0 %v4162
          %4284 = vmatpush1.bf16.msra.mxu0 %v4161
          %4285 = vmatprep.subr.bf16.mxu0 %v4160
          %4286 = vmatpush1.bf16.msra.mxu0 %v4159
          %4287 = vmatprep.subr.bf16.mxu0 %v4158
          %4288 = vmatpush1.bf16.msra.mxu0 %v4157
          %4289 = vmatprep.subr.bf16.mxu0 %v4156
          %4290 = vmatpush1.bf16.msra.mxu0 %v4155
          %4291 = vmatprep.subr.bf16.mxu0 %v4154
          %4292 = vmatpush1.bf16.msra.mxu0 %v4153
          %4293 = vmatprep.subr.bf16.mxu0 %v4152
          %4294 = vmatpush1.bf16.msra.mxu0 %v4151
          %4295 = vmatprep.subr.bf16.mxu0 %v4182
          %4296 = vmatpush2.bf16.msra.mxu0 %v4181
          %4297 = vmatprep.subr.bf16.mxu0 %v4180
          %4298 = vmatpush2.bf16.msra.mxu0 %v4179
          %4299 = vmatprep.subr.bf16.mxu0 %v4178
          %4300 = vmatpush2.bf16.msra.mxu0 %v4177
          %4301 = vmatprep.subr.bf16.mxu0 %v4176
          %4302 = vmatpush2.bf16.msra.mxu0 %v4175
          %4303 = vmatprep.subr.bf16.mxu0 %v4174
          %4304 = vmatpush2.bf16.msra.mxu0 %v4173
          %4305 = vmatprep.subr.bf16.mxu0 %v4172
          %4306 = vmatpush2.bf16.msra.mxu0 %v4171
          %4307 = vmatprep.subr.bf16.mxu0 %v4170
          %4308 = vmatpush2.bf16.msra.mxu0 %v4169
          %4309 = vmatprep.subr.bf16.mxu0 %v4168
          %4310 = vmatpush2.bf16.msra.mxu0 %v4167
          %4311 = vmatprep.mubr.bf16.mxu0 %v3892
          %4312 = vmatmul.mubr.bf16.gmra.mxu0 %v3891
          %v4313 = vpop.f32.mrf.mxu0
          %v4314 = vadd.f32 0.0, %v4313
          %v4315 = vpop.f32.mrf.mxu0
          %v4316 = vadd.f32 0.0, %v4315
          %v4317 = vpop.f32.mrf.mxu0
          %v4318 = vpop.f32.mrf.mxu0
          %4319 = vdwg.mxu0
          %4320 = vmatprep.subr.bf16.mxu0 %v4198
          %4321 = vmatpush1.bf16.msra.mxu0 %v4197
          %4322 = vmatprep.subr.bf16.mxu0 %v4196
          %4323 = vmatpush1.bf16.msra.mxu0 %v4195
          %4324 = vmatprep.subr.bf16.mxu0 %v4194
          %4325 = vmatpush1.bf16.msra.mxu0 %v4193
          %4326 = vmatprep.subr.bf16.mxu0 %v4192
          %4327 = vmatpush1.bf16.msra.mxu0 %v4191
          %4328 = vmatprep.subr.bf16.mxu0 %v4190
          %4329 = vmatpush1.bf16.msra.mxu0 %v4189
          %4330 = vmatprep.subr.bf16.mxu0 %v4188
          %4331 = vmatpush1.bf16.msra.mxu0 %v4187
          %4332 = vmatprep.subr.bf16.mxu0 %v4186
          %4333 = vmatpush1.bf16.msra.mxu0 %v4185
          %4334 = vmatprep.subr.bf16.mxu0 %v4184
          %4335 = vmatpush1.bf16.msra.mxu0 %v4183
          %4336 = vmatprep.subr.bf16.mxu0 %v4214
          %4337 = vmatpush2.bf16.msra.mxu0 %v4213
          %4338 = vmatprep.subr.bf16.mxu0 %v4212
          %4339 = vmatpush2.bf16.msra.mxu0 %v4211
          %4340 = vmatprep.subr.bf16.mxu0 %v4210
          %4341 = vmatpush2.bf16.msra.mxu0 %v4209
          %4342 = vmatprep.subr.bf16.mxu0 %v4208
          %4343 = vmatpush2.bf16.msra.mxu0 %v4207
          %4344 = vmatprep.subr.bf16.mxu0 %v4206
          %4345 = vmatpush2.bf16.msra.mxu0 %v4205
          %4346 = vmatprep.subr.bf16.mxu0 %v4204
          %4347 = vmatpush2.bf16.msra.mxu0 %v4203
          %4348 = vmatprep.subr.bf16.mxu0 %v4202
          %4349 = vmatpush2.bf16.msra.mxu0 %v4201
          %4350 = vmatprep.subr.bf16.mxu0 %v4200
          %4351 = vmatpush2.bf16.msra.mxu0 %v4199
          %4352 = vmatprep.mubr.bf16.mxu0 %v3894
          %4353 = vmatmul.mubr.bf16.gmra.mxu0 %v3893
          %v4354 = vpop.f32.mrf.mxu0
          %v4355 = vadd.f32 %v4314, %v4354
          %v4356 = vpop.f32.mrf.mxu0
          %v4357 = vadd.f32 %v4316, %v4356
          %v4358 = vpop.f32.mrf.mxu0
          %v4359 = vpop.f32.mrf.mxu0
          %4360 = vdwg.mxu0
          %v4361 = vld [vmem:[%s14] sm:$0x3]
          %v4363 = vlaneseq
          %v4364 = vshrl.u32 %v4363, 7
          %v4365 = vsub.s32 0, %v4364
          %v4366 = vrot.slane %v4361, %v4365
          %v4367 = vlaneseq
          %v4368 = vshrl.u32 %v4367, 7
          %v4369 = vsub.s32 1, %v4368
          %v4370 = vrot.slane %v4361, %v4369
          %v4373 = vmul.f32 %v4355, %v4366
          %v4374 = vmul.f32 %v4357, %v4370
          %v4375 = vld [vmem:[%s15] sm:$0x3]
          %v4377 = vlaneseq
          %v4378 = vshrl.u32 %v4377, 7
          %v4379 = vsub.s32 0, %v4378
          %v4380 = vrot.slane %v4375, %v4379
          %v4381 = vlaneseq
          %v4382 = vshrl.u32 %v4381, 7
          %v4383 = vsub.s32 1, %v4382
          %v4384 = vrot.slane %v4375, %v4383
          %v4387 = vadd.f32 %v4373, %v4380
          %v4388 = vadd.f32 %v4374, %v4384
          %v4389 = vmax.f32 %v4387, 0.0
          %v4390 = vmax.f32 %v4388, 0.0
          %v4391 = vpack.c.bf16 %v4389, %v4389
          %v4392 = vpack.c.bf16 %v4390, %v4390
          %v4393 = vld [vmem:[#allocation21] sm:$0xff]
          %v4394 = vld [vmem:[#allocation21 + $0x8] sm:$0xff]
          %v4395 = vld [vmem:[#allocation21 + $0x10] sm:$0xff]
          %v4396 = vld [vmem:[#allocation21 + $0x18] sm:$0xff]
          %v4397 = vld [vmem:[#allocation21 + $0x20] sm:$0xff]
          %v4398 = vld [vmem:[#allocation21 + $0x28] sm:$0xff]
          %v4399 = vld [vmem:[#allocation21 + $0x30] sm:$0xff]
          %v4400 = vld [vmem:[#allocation21 + $0x38] sm:$0xff]
          %v4401 = vld [vmem:[#allocation21 + $0x40] sm:$0xff]
          %v4402 = vld [vmem:[#allocation21 + $0x48] sm:$0xff]
          %v4403 = vld [vmem:[#allocation21 + $0x50] sm:$0xff]
          %v4404 = vld [vmem:[#allocation21 + $0x58] sm:$0xff]
          %v4405 = vld [vmem:[#allocation21 + $0x60] sm:$0xff]
          %v4406 = vld [vmem:[#allocation21 + $0x68] sm:$0xff]
          %v4407 = vld [vmem:[#allocation21 + $0x70] sm:$0xff]
          %v4408 = vld [vmem:[#allocation21 + $0x78] sm:$0xff]
          %v4409 = vld [vmem:[#allocation21 + $0x80] sm:$0xff]
          %v4410 = vld [vmem:[#allocation21 + $0x88] sm:$0xff]
          %v4411 = vld [vmem:[#allocation21 + $0x90] sm:$0xff]
          %v4412 = vld [vmem:[#allocation21 + $0x98] sm:$0xff]
          %v4413 = vld [vmem:[#allocation21 + $0xa0] sm:$0xff]
          %v4414 = vld [vmem:[#allocation21 + $0xa8] sm:$0xff]
          %v4415 = vld [vmem:[#allocation21 + $0xb0] sm:$0xff]
          %v4416 = vld [vmem:[#allocation21 + $0xb8] sm:$0xff]
          %v4417 = vld [vmem:[#allocation21 + $0xc0] sm:$0xff]
          %v4418 = vld [vmem:[#allocation21 + $0xc8] sm:$0xff]
          %v4419 = vld [vmem:[#allocation21 + $0xd0] sm:$0xff]
          %v4420 = vld [vmem:[#allocation21 + $0xd8] sm:$0xff]
          %v4421 = vld [vmem:[#allocation21 + $0xe0] sm:$0xff]
          %v4422 = vld [vmem:[#allocation21 + $0xe8] sm:$0xff]
          %v4423 = vld [vmem:[#allocation21 + $0xf0] sm:$0xff]
          %v4424 = vld [vmem:[#allocation21 + $0xf8] sm:$0xff]
          %v4425 = vld [vmem:[%s17] sm:$0x3]
          %v4458 = vunpack.c.l.b16 %v4393
          %v4459 = vunpack.c.h.b16 %v4393
          %v4460 = vunpack.c.l.b16 %v4394
          %v4461 = vunpack.c.h.b16 %v4394
          %v4462 = vunpack.c.l.b16 %v4395
          %v4463 = vunpack.c.h.b16 %v4395
          %v4464 = vunpack.c.l.b16 %v4396
          %v4465 = vunpack.c.h.b16 %v4396
          %v4466 = vunpack.c.l.b16 %v4397
          %v4467 = vunpack.c.h.b16 %v4397
          %v4468 = vunpack.c.l.b16 %v4398
          %v4469 = vunpack.c.h.b16 %v4398
          %v4470 = vunpack.c.l.b16 %v4399
          %v4471 = vunpack.c.h.b16 %v4399
          %v4472 = vunpack.c.l.b16 %v4400
          %v4473 = vunpack.c.h.b16 %v4400
          %v4474 = vunpack.c.l.b16 %v4401
          %v4475 = vunpack.c.h.b16 %v4401
          %v4476 = vunpack.c.l.b16 %v4402
          %v4477 = vunpack.c.h.b16 %v4402
          %v4478 = vunpack.c.l.b16 %v4403
          %v4479 = vunpack.c.h.b16 %v4403
          %v4480 = vunpack.c.l.b16 %v4404
          %v4481 = vunpack.c.h.b16 %v4404
          %v4482 = vunpack.c.l.b16 %v4405
          %v4483 = vunpack.c.h.b16 %v4405
          %v4484 = vunpack.c.l.b16 %v4406
          %v4485 = vunpack.c.h.b16 %v4406
          %v4486 = vunpack.c.l.b16 %v4407
          %v4487 = vunpack.c.h.b16 %v4407
          %v4488 = vunpack.c.l.b16 %v4408
          %v4489 = vunpack.c.h.b16 %v4408
          %v4490 = vunpack.c.l.b16 %v4409
          %v4491 = vunpack.c.h.b16 %v4409
          %v4492 = vunpack.c.l.b16 %v4410
          %v4493 = vunpack.c.h.b16 %v4410
          %v4494 = vunpack.c.l.b16 %v4411
          %v4495 = vunpack.c.h.b16 %v4411
          %v4496 = vunpack.c.l.b16 %v4412
          %v4497 = vunpack.c.h.b16 %v4412
          %v4498 = vunpack.c.l.b16 %v4413
          %v4499 = vunpack.c.h.b16 %v4413
          %v4500 = vunpack.c.l.b16 %v4414
          %v4501 = vunpack.c.h.b16 %v4414
          %v4502 = vunpack.c.l.b16 %v4415
          %v4503 = vunpack.c.h.b16 %v4415
          %v4504 = vunpack.c.l.b16 %v4416
          %v4505 = vunpack.c.h.b16 %v4416
          %v4506 = vunpack.c.l.b16 %v4417
          %v4507 = vunpack.c.h.b16 %v4417
          %v4508 = vunpack.c.l.b16 %v4418
          %v4509 = vunpack.c.h.b16 %v4418
          %v4510 = vunpack.c.l.b16 %v4419
          %v4511 = vunpack.c.h.b16 %v4419
          %v4512 = vunpack.c.l.b16 %v4420
          %v4513 = vunpack.c.h.b16 %v4420
          %v4514 = vunpack.c.l.b16 %v4421
          %v4515 = vunpack.c.h.b16 %v4421
          %v4516 = vunpack.c.l.b16 %v4422
          %v4517 = vunpack.c.h.b16 %v4422
          %v4518 = vunpack.c.l.b16 %v4423
          %v4519 = vunpack.c.h.b16 %v4423
          %v4520 = vunpack.c.l.b16 %v4424
          %v4521 = vunpack.c.h.b16 %v4424
          %v4522 = vpack.c.b16 %v4460, %v4458
          %v4523 = vpack.c.b16 %v4461, %v4459
          %v4524 = vpack.c.b16 %v4464, %v4462
          %v4525 = vpack.c.b16 %v4465, %v4463
          %v4526 = vpack.c.b16 %v4468, %v4466
          %v4527 = vpack.c.b16 %v4469, %v4467
          %v4528 = vpack.c.b16 %v4472, %v4470
          %v4529 = vpack.c.b16 %v4473, %v4471
          %v4530 = vpack.c.b16 %v4476, %v4474
          %v4531 = vpack.c.b16 %v4477, %v4475
          %v4532 = vpack.c.b16 %v4480, %v4478
          %v4533 = vpack.c.b16 %v4481, %v4479
          %v4534 = vpack.c.b16 %v4484, %v4482
          %v4535 = vpack.c.b16 %v4485, %v4483
          %v4536 = vpack.c.b16 %v4488, %v4486
          %v4537 = vpack.c.b16 %v4489, %v4487
          %v4538 = vpack.c.b16 %v4492, %v4490
          %v4539 = vpack.c.b16 %v4493, %v4491
          %v4540 = vpack.c.b16 %v4496, %v4494
          %v4541 = vpack.c.b16 %v4497, %v4495
          %v4542 = vpack.c.b16 %v4500, %v4498
          %v4543 = vpack.c.b16 %v4501, %v4499
          %v4544 = vpack.c.b16 %v4504, %v4502
          %v4545 = vpack.c.b16 %v4505, %v4503
          %v4546 = vpack.c.b16 %v4508, %v4506
          %v4547 = vpack.c.b16 %v4509, %v4507
          %v4548 = vpack.c.b16 %v4512, %v4510
          %v4549 = vpack.c.b16 %v4513, %v4511
          %v4550 = vpack.c.b16 %v4516, %v4514
          %v4551 = vpack.c.b16 %v4517, %v4515
          %v4552 = vpack.c.b16 %v4520, %v4518
          %v4553 = vpack.c.b16 %v4521, %v4519
          %v4587 = vlaneseq
          %v4588 = vshrl.u32 %v4587, 7
          %v4589 = vsub.s32 0, %v4588
          %v4590 = vrot.slane %v4425, %v4589
          %v4591 = vlaneseq
          %v4592 = vshrl.u32 %v4591, 7
          %v4593 = vsub.s32 1, %v4592
          %v4594 = vrot.slane %v4425, %v4593
          %4597 = vmatprep.subr.bf16.mxu0 %v4537
          %4598 = vmatpush1.bf16.msra.mxu0 %v4536
          %4599 = vmatprep.subr.bf16.mxu0 %v4535
          %4600 = vmatpush1.bf16.msra.mxu0 %v4534
          %4601 = vmatprep.subr.bf16.mxu0 %v4533
          %4602 = vmatpush1.bf16.msra.mxu0 %v4532
          %4603 = vmatprep.subr.bf16.mxu0 %v4531
          %4604 = vmatpush1.bf16.msra.mxu0 %v4530
          %4605 = vmatprep.subr.bf16.mxu0 %v4529
          %4606 = vmatpush1.bf16.msra.mxu0 %v4528
          %4607 = vmatprep.subr.bf16.mxu0 %v4527
          %4608 = vmatpush1.bf16.msra.mxu0 %v4526
          %4609 = vmatprep.subr.bf16.mxu0 %v4525
          %4610 = vmatpush1.bf16.msra.mxu0 %v4524
          %4611 = vmatprep.subr.bf16.mxu0 %v4523
          %4612 = vmatpush1.bf16.msra.mxu0 %v4522
          %4613 = vmatprep.subr.bf16.mxu0 %v4553
          %4614 = vmatpush2.bf16.msra.mxu0 %v4552
          %4615 = vmatprep.subr.bf16.mxu0 %v4551
          %4616 = vmatpush2.bf16.msra.mxu0 %v4550
          %4617 = vmatprep.subr.bf16.mxu0 %v4549
          %4618 = vmatpush2.bf16.msra.mxu0 %v4548
          %4619 = vmatprep.subr.bf16.mxu0 %v4547
          %4620 = vmatpush2.bf16.msra.mxu0 %v4546
          %4621 = vmatprep.subr.bf16.mxu0 %v4545
          %4622 = vmatpush2.bf16.msra.mxu0 %v4544
          %4623 = vmatprep.subr.bf16.mxu0 %v4543
          %4624 = vmatpush2.bf16.msra.mxu0 %v4542
          %4625 = vmatprep.subr.bf16.mxu0 %v4541
          %4626 = vmatpush2.bf16.msra.mxu0 %v4540
          %4627 = vmatprep.subr.bf16.mxu0 %v4539
          %4628 = vmatpush2.bf16.msra.mxu0 %v4538
          %4629 = vmatprep.mubr.bf16.mxu0 %v4392
          %4630 = vmatmul.mubr.bf16.gmra.mxu0 %v4391
          %v4631 = vpop.f32.mrf.mxu0
          %v4632 = vadd.f32 %v4590, %v4631
          %v4633 = vpop.f32.mrf.mxu0
          %v4634 = vadd.f32 %v4594, %v4633
          %v4635 = vpop.f32.mrf.mxu0
          %v4636 = vpop.f32.mrf.mxu0
          %4637 = vdwg.mxu0
          %v4640 = vcombine.low %v4632, %v4634
          %v4642 = vunpack.c.l.s4 1966171168
          %v4643 = vunpack.c.0.s8 %v4642
          %v4644 = vlaneseq
          %v4645 = vshrl.u32 %v4644, 7
          %v4646 = vsub.s32 %v4643, %v4645
          %v4647 = vrot.slane %v4640, %v4646
          %v4649 = vunpack.c.l.s4 1966171168
          %v4650 = vunpack.c.0.s8 %v4649
          %v4651 = vlaneseq
          %v4652 = vshrl.u32 %v4651, 7
          %v4653 = vsub.s32 %v4650, %v4652
          %v4654 = vrot.slane %v4647, %v4653
          %v4656 = vlaneseq
          %vm4657 = vcmp.ge.s32.totalorder %v4656, 0
          %vm4658 = vcmp.lt.s32.totalorder %v4656, 256
          %vm4659 = vmand %vm4657, %vm4658
          %4660 = vst.msk [vmem:[%s758] sm:$0x3] %vm4659, %v4654
        $region148: #{tpu_custom_call.1} parent=91 // pred_fallthru
          _
        %s4661 = sand.u32 %s446, 1
        %s4662 = scalar_lea.sflag [#allocation5], %s4661
        %s4663 = sand.u32 %s446, 1
        %s4664 = smul.addr %s4663, 2
        %s4665 = scalar_lea.vmem [#allocation23], %s4664
        // Predicated region
        $region149: #{tpu_custom_call.1} parent=91 // pred_check
          %p4666 = pneg %p456
        $region150: #{tpu_custom_call.1} parent=91 // pred_check_branch
          %4668 = sbr.rel (%p4666) target = $region152
        $region151: #{tpu_custom_call.1} parent=91 // pred_region
          %s4670 = ssub.s32 32, 32
          %4671 = vsyncadd %s4662, %s4670
          %s4672 = smul.addr %s45, 2
          %s4673 = smul.addr %s4672, 16
          %s4674 = scalar_lea.hbm %s18, %s4673
          %s4676 = sshll.u32 %s4665, 4
          %s4677 = int_to_ptr.vmem [resolvable:$true] %s4676
          %4679 = dma.vmem_to_hbm [thread:$0]  %s4677, 32, %s4674, %s4662
        $region152: #{tpu_custom_call.1} parent=91 // pred_fallthru
          _
      $region92: #{tpu_custom_call.1} parent=5 // pred_fallthru
        _
      %p4680 = scmp.le.s32.totalorder 2, %s36
      // Predicated region
      $region153: #{tpu_custom_call.1} parent=5 // pred_check
        %p4681 = pneg %p4680
      $region154: #{tpu_custom_call.1} parent=5 // pred_check_branch
        %4683 = sbr.rel (%p4681) target = $region156
      $region155: #{tpu_custom_call.1} parent=5 // pred_region
        %s4684 = ssub.s32 %s36, 2
        // Predicated region
        $region157: #{tpu_custom_call.1} parent=155 // pred_check
          %p4685 = pneg %p462
        $region158: #{tpu_custom_call.1} parent=155 // pred_check_branch
          %4687 = sbr.rel (%p4685) target = $region160
        $region159: #{tpu_custom_call.1} parent=155 // pred_region
          %s4688 = sand.u32 %s447, 1
          %s4689 = scalar_lea.sflag [#allocation5], %s4688
          %s4690 = sand.u32 %s447, 1
          %s4691 = smul.addr %s4690, 2
          %s4692 = scalar_lea.vmem [#allocation23], %s4691
          %4693 = dma.done %s4689, 32
        $region160: #{tpu_custom_call.1} parent=155 // pred_fallthru
          _
      $region156: #{tpu_custom_call.1} parent=5 // pred_fallthru
        _
    $region6: #{tpu_custom_call.1} parent=1 // loop_footer
      %s40 = sadd.s32 1, %s36
    $region7: #{tpu_custom_call.1} parent=1 // loop_footer_branch
      %35 = sbr.rel target = $region3
    $region8: #{tpu_custom_call.1} parent=1 // loop_exit
      _
    %4694 = vsyncpa [#allocation4], 1
    %s4695 = scalar_lea.sflag [#allocation4], 1
    %4696 = vsyncpa %s4695, 1
    %4697 = vsyncpa [#allocation7], 1
    %4698 = vsyncpa [#allocation10], 1
    %4699 = vsyncpa [#allocation13], 1
    %4700 = vsyncpa [#allocation16], 1
    %4701 = vsyncpa [#allocation19], 1
    %4702 = vsyncpa [#allocation22], 1
    %4703 = vsyncpa [#allocation5], 1
    %s4704 = scalar_lea.sflag [#allocation5], 1
    %4705 = vsyncpa %s4704, 1

</llo_original>
